<compile_context>
chip_gen: v6e
topology: v6e:2x2x1
jax: 0.10.0
libtpu: 0.0.40
codegen_flags: <defaults>
</compile_context>

<pallas_src>
import jax
import jax.numpy as jnp
from jax import lax
from jax.experimental import pallas as pl
from jax.experimental.pallas import tpu as pltpu

EPS = 1e-5
LANES = 128  # channel padding multiple (TPU lane width)


# --------------------------------------------------------------------------- #
# In-kernel helpers
# --------------------------------------------------------------------------- #
def _conv3x3_acc(slab, w_ref, th, w_out):
    """9 shifted-slice MXU matmuls over a halo'd (th+2, W+2, Cin_p) bf16 slab.

    `slab` may be a Ref view (loads happen per tap) or an in-kernel value.
    Returns an fp32 accumulator of shape (th*W, Cout_p).
    """
    cin_p = slab.shape[-1]
    cout_p = w_ref.shape[-1]
    acc = jnp.zeros((th * w_out, cout_p), jnp.float32)
    for k in range(9):                       # fully unrolled: LLO sees all 9 matmuls
        kh, kw = divmod(k, 3)
        xs = slab[kh:kh + th, kw:kw + w_out, :].reshape(th * w_out, cin_p)
        acc = acc + jnp.dot(xs, w_ref[k], preferred_element_type=jnp.float32)
    return acc


def _write_conv_outputs(acc, y_ref, stats_ref, th, w_out, cout_p):
    """Store the (bf16) conv output tile plus fp32 BN partial sums."""
    y_ref[0] = acc.reshape(th, w_out, cout_p).astype(y_ref.dtype)
    stats_ref[0, 0, 0:1, :] = jnp.sum(acc, axis=0, keepdims=True)
    stats_ref[0, 0, 1:2, :] = jnp.sum(acc * acc, axis=0, keepdims=True)


# --------------------------------------------------------------------------- #
# Kernels
# --------------------------------------------------------------------------- #
def _conv_stats_kernel(x_ref, w_ref, y_ref, stats_ref):
    """Stage-1 conv: halo'd input slab -> bf16 conv output + BN partial sums.

    x_ref:     (1, 1, TH+2, W+2, Cin_p)  bf16
    w_ref:     (9, Cin_p, Cout_p)        bf16 (VMEM-resident across the grid)
    y_ref:     (1, TH, W, Cout_p)        bf16 (raw, pre-BN)
    stats_ref: (1, 1, 2, Cout_p)         f32  (row0 = sum, row1 = sum of squares)
    """
    th, w_out, cout_p = y_ref.shape[1], y_ref.shape[2], y_ref.shape[3]
    acc = _conv3x3_acc(x_ref.at[0, 0], w_ref, th, w_out)
    _write_conv_outputs(acc, y_ref, stats_ref, th, w_out, cout_p)


def _bn_relu_conv_stats_kernel(x_ref, w_ref, scale_ref, shift_ref, y_ref, stats_ref):
    """Stage-2 conv with the previous stage's BN+ReLU fused as a prologue.

    x_ref:     (1, 1, TH+2, W+2, Cin_p)  bf16  halo'd *pre-BN* conv1 output
    w_ref:     (9, Cin_p, Cout_p)        bf16
    scale_ref: (1, Cin_p)  f32   gamma1 * rsqrt(var1 + eps)
    shift_ref: (1, Cin_p)  f32   beta1 - mean1 * scale1
    y_ref:     (1, TH, W, Cout_p)  bf16  raw conv2 output
    stats_ref: (1, 1, 2, Cout_p)   f32
    """
    th, w_out, cout_p = y_ref.shape[1], y_ref.shape[2], y_ref.shape[3]
    cin_p = x_ref.shape[-1]

    # Fused epilogue of stage 1: folded BN (one FMA) + ReLU on the halo'd slab.
    y_prev = x_ref[0, 0].astype(jnp.float32)              # (TH+2, W+2, Cin_p)
    scale = scale_ref[...].reshape(1, 1, cin_p)
    shift = shift_ref[...].reshape(1, 1, cin_p)
    a = jnp.maximum(y_prev * scale + shift, 0.0)

    # Restore zero spatial padding: the wrapper zero-pads the *pre-BN* tensor,
    # and a zero would otherwise map to max(shift, 0) after BN+ReLU.
    t = pl.program_id(1)
    last = pl.num_programs(1) - 1
    row = lax.broadcasted_iota(jnp.int32, a.shape, 0)      # slab-local row index
    col = lax.broadcasted_iota(jnp.int32, a.shape, 1)      # slab-local col index
    is_pad = ((col == 0) | (col == w_out + 1)
              | ((t == 0) & (row == 0))
              | ((t == last) & (row == th + 1)))
    a = jnp.where(is_pad, 0.0, a).astype(jnp.bfloat16)

    acc = _conv3x3_acc(a, w_ref, th, w_out)
    _write_conv_outputs(acc, y_ref, stats_ref, th, w_out, cout_p)


def _bn_relu_kernel(y_ref, scale_ref, shift_ref, o_ref):
    """Final epilogue: folded BN (single FMA) + ReLU. Lane-dense output.

    y_ref: (1, TH, W, Cout_p) bf16 ; scale/shift: (1, Cout_p) f32 ; o_ref f32.
    """
    y = y_ref[...].astype(jnp.float32)
    scale = scale_ref[...].reshape(1, 1, 1, -1)
    shift = shift_ref[...].reshape(1, 1, 1, -1)
    o_ref[...] = jnp.maximum(y * scale + shift, 0.0).astype(o_ref.dtype)


# --------------------------------------------------------------------------- #
# Host-side helpers
# --------------------------------------------------------------------------- #
def _round_up(x, m):
    return (x + m - 1) // m * m


def _pick_row_tile(h, target):
    t = min(h, target)
    while h % t:
        t -= 1
    return t


def _make_slabs(x_nhwc, row_tile):
    """Zero-pad spatially and stack overlapping row slabs with a 1-row halo."""
    n, h, w, c = x_nhwc.shape
    xp = jnp.pad(x_nhwc, ((0, 0), (1, 1), (1, 1), (0, 0)))
    nth = h // row_tile
    return jnp.stack(
        [xp[:, t * row_tile: t * row_tile + row_tile + 2] for t in range(nth)],
        axis=1)                                    # (n, nth, row_tile+2, W+2, c)


def _prep_weights(w_oihw, cin_p, cout_p):
    """(O, I, 3, 3) -> (9, Cin_p, Cout_p) bf16 with kh*3+kw major."""
    cout, cin = w_oihw.shape[0], w_oihw.shape[1]
    wt = jnp.transpose(w_oihw, (2, 3, 1, 0))
    wt = jnp.pad(wt, ((0, 0), (0, 0), (0, cin_p - cin), (0, cout_p - cout)))
    return wt.reshape(9, cin_p, cout_p).astype(jnp.bfloat16)


def _finalize_stats(stats, gamma, beta, cnt, cout_p):
    """Tiny O(Cout) fp32 reduce: per-tile (sum, sumsq) -> folded (scale, shift)."""
    s = jnp.sum(stats[:, :, 0, :], axis=(0, 1))
    ss = jnp.sum(stats[:, :, 1, :], axis=(0, 1))
    mean = s / cnt
    var = jnp.maximum(ss / cnt - mean * mean, 0.0)
    g = jnp.pad(gamma, (0, cout_p - gamma.shape[0]))
    b = jnp.pad(beta, (0, cout_p - beta.shape[0]))
    scale = g * jax.lax.rsqrt(var + EPS)           # gamma / sqrt(var + eps)
    shift = b - mean * scale                       # beta - mean * scale
    return scale.reshape(1, cout_p), shift.reshape(1, cout_p)


def _call_conv(kernel, inputs, in_specs, n, h, w_sp, row_tile, cout_p):
    nth = h // row_tile
    return pl.pallas_call(
        kernel,
        grid=(n, nth),
        in_specs=in_specs,
        out_specs=(
            pl.BlockSpec((1, row_tile, w_sp, cout_p), lambda i, t: (i, t, 0, 0)),
            pl.BlockSpec((1, 1, 2, cout_p), lambda i, t: (i, t, 0, 0)),
        ),
        out_shape=(
            jax.ShapeDtypeStruct((n, h, w_sp, cout_p), jnp.bfloat16),
            jax.ShapeDtypeStruct((n, nth, 2, cout_p), jnp.float32),
        ),
        compiler_params=pltpu.CompilerParams(
            dimension_semantics=("parallel", "parallel")),
    )(*inputs)


def conv_block_forward(x_nchw, params, *, row_tile_target=8):
    """conv_block forward: NCHW in, NCHW out (train-mode BatchNorm semantics)."""
    x = jnp.transpose(x_nchw, (0, 2, 3, 1))                 # NCHW -> NHWC (lane = C)
    n, h, w_sp, cin = x.shape
    cout1, cout2 = params["w1"].shape[0], params["w2"].shape[0]
    cin_p = _round_up(cin, LANES)
    c1_p = _round_up(cout1, LANES)
    c2_p = _round_up(cout2, LANES)
    rt = _pick_row_tile(h, row_tile_target)
    nth = h // rt
    cnt = jnp.float32(n * h * w_sp)
    sem = pltpu.CompilerParams(dimension_semantics=("parallel", "parallel"))

    # ---- Stage 1: conv1 + BN1 partial sums -----------------------------------
    # NOTE: conv biases b1/b2 cancel exactly under train-mode BN, so they are
    # never passed to the kernels.
    x_pad = jnp.pad(x, ((0, 0), (0, 0), (0, 0), (0, cin_p - cin))).astype(jnp.bfloat16)
    slabs1 = _make_slabs(x_pad, rt)
    w1 = _prep_weights(params["w1"], cin_p, c1_p)
    slab1_spec = pl.BlockSpec((1, 1, rt + 2, w_sp + 2, cin_p),
                              lambda i, t: (i, t, 0, 0, 0))
    w1_spec = pl.BlockSpec((9, cin_p, c1_p), lambda i, t: (0, 0, 0))
    y1, st1 = _call_conv(_conv_stats_kernel, (slabs1, w1),
                         [slab1_spec, w1_spec], n, h, w_sp, rt, c1_p)
    scale1, shift1 = _finalize_stats(st1, params["g1"], params["beta1"], cnt, c1_p)

    # ---- Stage 2: fused (BN1 + ReLU1) -> conv2 + BN2 partial sums -------------
    # Slabs are built straight from the raw bf16 conv1 output; the BN1+ReLU1
    # epilogue happens inside the conv2 kernel (saves a full HBM round-trip).
    slabs2 = _make_slabs(y1, rt)
    w2 = _prep_weights(params["w2"], c1_p, c2_p)
    slab2_spec = pl.BlockSpec((1, 1, rt + 2, w_sp + 2, c1_p),
                              lambda i, t: (i, t, 0, 0, 0))
    w2_spec = pl.BlockSpec((9, c1_p, c2_p), lambda i, t: (0, 0, 0))
    vec1_spec = pl.BlockSpec((1, c1_p), lambda i, t: (0, 0))
    y2, st2 = _call_conv(_bn_relu_conv_stats_kernel,
                         (slabs2, w2, scale1, shift1),
                         [slab2_spec, w2_spec, vec1_spec, vec1_spec],
                         n, h, w_sp, rt, c2_p)
    scale2, shift2 = _finalize_stats(st2, params["g2"], params["beta2"], cnt, c2_p)

    # ---- Final epilogue: BN2 + ReLU2 ------------------------------------------
    vec2_spec = pl.BlockSpec((1, c2_p), lambda i, t: (0, 0))
    out = pl.pallas_call(
        _bn_relu_kernel,
        grid=(n, nth),
        in_specs=[
            pl.BlockSpec((1, rt, w_sp, c2_p), lambda i, t: (i, t, 0, 0)),
            vec2_spec, vec2_spec,
        ],
        out_specs=pl.BlockSpec((1, rt, w_sp, c2_p), lambda i, t: (i, t, 0, 0)),
        out_shape=jax.ShapeDtypeStruct((n, h, w_sp, c2_p), jnp.float32),
        compiler_params=sem,
    )(y2, scale2, shift2)

    out = out[..., :cout2]                                   # drop channel padding
    return jnp.transpose(out, (0, 3, 1, 2))                  # NHWC -> NCHW


def init_params(key, in_c, out_c):
    k1, k2, k3, k4 = jax.random.split(key, 4)
    return {
        "w1": 0.1 * jax.random.normal(k1, (out_c, in_c, 3, 3), jnp.float32),
        "b1": 0.1 * jax.random.normal(k2, (out_c,), jnp.float32),
        "g1": jnp.ones((out_c,), jnp.float32),
        "beta1": jnp.zeros((out_c,), jnp.float32),
        "w2": 0.1 * jax.random.normal(k3, (out_c, out_c, 3, 3), jnp.float32),
        "b2": 0.1 * jax.random.normal(k4, (out_c,), jnp.float32),
        "g2": jnp.ones((out_c,), jnp.float32),
        "beta2": jnp.zeros((out_c,), jnp.float32),
    }


# --------------------------------------------------------------------------- #
# Pure-JAX references for the sanity check
# --------------------------------------------------------------------------- #
def _policy_reference(x, params):
    """Mirrors the kernel's precision policy exactly: bf16 conv operands, f32
    accumulation, f32 BN statistics from the f32 conv result, normalization
    applied to the bf16-stored conv output, bf16 inter-stage activation.
    Conv biases are dropped (they cancel under train-mode BN)."""
    def conv(x_, w_):
        return jax.lax.conv_general_dilated(
            x_.astype(jnp.bfloat16), w_.astype(jnp.bfloat16),
            window_strides=(1, 1), padding=((1, 1), (1, 1)),
            dimension_numbers=("NCHW", "OIHW", "NCHW"),
            preferred_element_type=jnp.float32)

    def bn_relu(y_f32, g, b):
        cnt = y_f32.shape[0] * y_f32.shape[2] * y_f32.shape[3]
        s = jnp.sum(y_f32, axis=(0, 2, 3))
        ss = jnp.sum(y_f32 * y_f32, axis=(0, 2, 3))
        mean = s / cnt
        var = jnp.maximum(ss / cnt - mean * mean, 0.0)
        scale = g * jax.lax.rsqrt(var + EPS)
        shift = b - mean * scale
        yb = y_f32.astype(jnp.bfloat16).astype(jnp.float32)   # kernel stores y in bf16
        return jnp.maximum(yb * scale[None, :, None, None]
                           + shift[None, :, None, None], 0.0)

    y1 = conv(x, params["w1"])
    a1 = bn_relu(y1, params["g1"], params["beta1"]).astype(jnp.bfloat16)
    y2 = conv(a1, params["w2"])
    return bn_relu(y2, params["g2"], params["beta2"])


def _exact_reference(x, params):
    """Exact fp32 PyTorch-semantics reference (train-mode BN, with conv biases)."""
    def stage(x_, w, b, g, be):
        y = jax.lax.conv_general_dilated(
            x_, w, window_strides=(1, 1), padding=((1, 1), (1, 1)),
            dimension_numbers=("NCHW", "OIHW", "NCHW"),
            preferred_element_type=jnp.float32) + b[None, :, None, None]
        mean = jnp.mean(y, axis=(0, 2, 3), keepdims=True)
        var = jnp.mean((y - mean) ** 2, axis=(0, 2, 3), keepdims=True)
        y = (y - mean) * jax.lax.rsqrt(var + EPS)
        y = y * g[None, :, None, None] + be[None, :, None, None]
        return jnp.maximum(y, 0.0)

    h = stage(x, params["w1"], params["b1"], params["g1"], params["beta1"])
    return stage(h, params["w2"], params["b2"], params["g2"], params["beta2"])


if __name__ == "__main__":
    key = jax.random.PRNGKey(0)
    kx, kp = jax.random.split(key)

    N, in_c, out_c, S = 2, 4, 8, 16
    x = jax.random.normal(kx, (N, in_c, S, S), jnp.float32)
    params = init_params(kp, in_c, out_c)

    fwd = jax.jit(conv_block_forward)
    out = jax.block_until_ready(fwd(x, params))

    assert out.shape == (N, out_c, S, S)
    assert bool(jnp.all(jnp.isfinite(out)))

    # Tight check against a reference that uses the exact same precision policy.
    ref_p = _policy_reference(x, params)
    err_p = float(jnp.max(jnp.abs(out - ref_p)))
    assert err_p < 5e-3, f"mismatch vs precision-policy reference: {err_p}"

    # Loose semantic check against the exact fp32 PyTorch-style reference
    # (slack = expected bf16 operand / stored-activation rounding, amplified by BN).
    ref_f = _exact_reference(x, params)
    err_f = float(jnp.max(jnp.abs(out - ref_f)))
    assert err_f < 3e-1, f"mismatch vs fp32 reference: {err_f}"

    print("KERNEL_OK")
</pallas_src>

<mosaic_0001>
module attributes {stable_mosaic.version = 11 : i64} {
  func.func @_conv_stats_kernel(%arg0: i32, %arg1: i32, %arg2: memref<1x1x10x18x128xbf16, #tpu.memory_space<vmem>>, %arg3: memref<9x128x128xbf16, #tpu.memory_space<vmem>>, %arg4: memref<1x8x16x128xbf16, #tpu.memory_space<vmem>>, %arg5: memref<1x1x2x128xf32, #tpu.memory_space<vmem>>) attributes {dimension_semantics = [#tpu.dimension_semantics<parallel>, #tpu.dimension_semantics<parallel>], iteration_bounds = array<i64: 2, 2>, scalar_prefetch = 0 : i64, scratch_operands = 0 : i64, tpu.core_type = #tpu.core_type<tc>, window_params = [{transform_indices = @transform_0, window_bounds = array<i64: 1, 1, 10, 18, 128>}, {pipeline_mode = #tpu.pipeline_mode<synchronous>, transform_indices = @transform_1, window_bounds = array<i64: 9, 128, 128>}, {transform_indices = @transform_2, window_bounds = array<i64: 1, 8, 16, 128>}, {transform_indices = @transform_3, window_bounds = array<i64: 1, 1, 2, 128>}]} {
    %cst = arith.constant 0.000000e+00 : f32
    %0 = vector.broadcast %cst : f32 to vector<128x128xf32>
    %c0_i32 = arith.constant 0 : i32
    %c0_i32_0 = arith.constant 0 : i32
    %c0_i32_1 = arith.constant 0 : i32
    %c0_i32_2 = arith.constant 0 : i32
    %c0_i32_3 = arith.constant 0 : i32
    %1 = tpu.memref_slice %arg2[%c0_i32, %c0_i32_0, %c0_i32_1, %c0_i32_2, %c0_i32_3] : memref<1x1x10x18x128xbf16, #tpu.memory_space<vmem>> -> memref<1x1x10x18x128xbf16, #tpu.memory_space<vmem>>
    %2 = tpu.memref_squeeze %1 : memref<1x1x10x18x128xbf16, #tpu.memory_space<vmem>> -> memref<10x18x128xbf16, #tpu.memory_space<vmem>>
    %c0 = arith.constant 0 : index
    %c0_4 = arith.constant 0 : index
    %c0_5 = arith.constant 0 : index
    %3 = vector.load %2[%c0, %c0_4, %c0_5] : memref<10x18x128xbf16, #tpu.memory_space<vmem>>, vector<8x16x128xbf16>
    %4 = vector.shape_cast %3 : vector<8x16x128xbf16> to vector<128x128xbf16>
    %c0_6 = arith.constant 0 : index
    %c0_7 = arith.constant 0 : index
    %c0_8 = arith.constant 0 : index
    %5 = vector.load %arg3[%c0_6, %c0_7, %c0_8] : memref<9x128x128xbf16, #tpu.memory_space<vmem>>, vector<1x128x128xbf16>
    %6 = vector.shape_cast %5 : vector<1x128x128xbf16> to vector<128x128xbf16>
    %cst_9 = arith.constant dense<0.000000e+00> : vector<128x128xf32>
    %7 = tpu.matmul %4, %6, %cst_9 {dimension_numbers = #tpu.dot_dimension_numbers<[1], [0], [0], [1], [0, 0, 1, 1], [], []>} : vector<128x128xbf16>, vector<128x128xbf16>, vector<128x128xf32> -> vector<128x128xf32>
    %8 = arith.addf %0, %7 : vector<128x128xf32>
    %c0_i32_10 = arith.constant 0 : i32
    %c0_i32_11 = arith.constant 0 : i32
    %c0_i32_12 = arith.constant 0 : i32
    %c0_i32_13 = arith.constant 0 : i32
    %c0_i32_14 = arith.constant 0 : i32
    %9 = tpu.memref_slice %arg2[%c0_i32_10, %c0_i32_11, %c0_i32_12, %c0_i32_13, %c0_i32_14] : memref<1x1x10x18x128xbf16, #tpu.memory_space<vmem>> -> memref<1x1x10x18x128xbf16, #tpu.memory_space<vmem>>
    %10 = tpu.memref_squeeze %9 : memref<1x1x10x18x128xbf16, #tpu.memory_space<vmem>> -> memref<10x18x128xbf16, #tpu.memory_space<vmem>>
    %c0_15 = arith.constant 0 : index
    %c1 = arith.constant 1 : index
    %c0_16 = arith.constant 0 : index
    %11 = vector.load %10[%c0_15, %c1, %c0_16] : memref<10x18x128xbf16, #tpu.memory_space<vmem>>, vector<8x16x128xbf16>
    %12 = vector.shape_cast %11 : vector<8x16x128xbf16> to vector<128x128xbf16>
    %c1_17 = arith.constant 1 : index
    %c0_18 = arith.constant 0 : index
    %c0_19 = arith.constant 0 : index
    %13 = vector.load %arg3[%c1_17, %c0_18, %c0_19] : memref<9x128x128xbf16, #tpu.memory_space<vmem>>, vector<1x128x128xbf16>
    %14 = vector.shape_cast %13 : vector<1x128x128xbf16> to vector<128x128xbf16>
    %cst_20 = arith.constant dense<0.000000e+00> : vector<128x128xf32>
    %15 = tpu.matmul %12, %14, %cst_20 {dimension_numbers = #tpu.dot_dimension_numbers<[1], [0], [0], [1], [0, 0, 1, 1], [], []>} : vector<128x128xbf16>, vector<128x128xbf16>, vector<128x128xf32> -> vector<128x128xf32>
    %16 = arith.addf %8, %15 : vector<128x128xf32>
    %c0_i32_21 = arith.constant 0 : i32
    %c0_i32_22 = arith.constant 0 : i32
    %c0_i32_23 = arith.constant 0 : i32
    %c0_i32_24 = arith.constant 0 : i32
    %c0_i32_25 = arith.constant 0 : i32
    %17 = tpu.memref_slice %arg2[%c0_i32_21, %c0_i32_22, %c0_i32_23, %c0_i32_24, %c0_i32_25] : memref<1x1x10x18x128xbf16, #tpu.memory_space<vmem>> -> memref<1x1x10x18x128xbf16, #tpu.memory_space<vmem>>
    %18 = tpu.memref_squeeze %17 : memref<1x1x10x18x128xbf16, #tpu.memory_space<vmem>> -> memref<10x18x128xbf16, #tpu.memory_space<vmem>>
    %c0_26 = arith.constant 0 : index
    %c2 = arith.constant 2 : index
    %c0_27 = arith.constant 0 : index
    %19 = vector.load %18[%c0_26, %c2, %c0_27] : memref<10x18x128xbf16, #tpu.memory_space<vmem>>, vector<8x16x128xbf16>
    %20 = vector.shape_cast %19 : vector<8x16x128xbf16> to vector<128x128xbf16>
    %c2_28 = arith.constant 2 : index
    %c0_29 = arith.constant 0 : index
    %c0_30 = arith.constant 0 : index
    %21 = vector.load %arg3[%c2_28, %c0_29, %c0_30] : memref<9x128x128xbf16, #tpu.memory_space<vmem>>, vector<1x128x128xbf16>
    %22 = vector.shape_cast %21 : vector<1x128x128xbf16> to vector<128x128xbf16>
    %cst_31 = arith.constant dense<0.000000e+00> : vector<128x128xf32>
    %23 = tpu.matmul %20, %22, %cst_31 {dimension_numbers = #tpu.dot_dimension_numbers<[1], [0], [0], [1], [0, 0, 1, 1], [], []>} : vector<128x128xbf16>, vector<128x128xbf16>, vector<128x128xf32> -> vector<128x128xf32>
    %24 = arith.addf %16, %23 : vector<128x128xf32>
    %c0_i32_32 = arith.constant 0 : i32
    %c0_i32_33 = arith.constant 0 : i32
    %c0_i32_34 = arith.constant 0 : i32
    %c0_i32_35 = arith.constant 0 : i32
    %c0_i32_36 = arith.constant 0 : i32
    %25 = tpu.memref_slice %arg2[%c0_i32_32, %c0_i32_33, %c0_i32_34, %c0_i32_35, %c0_i32_36] : memref<1x1x10x18x128xbf16, #tpu.memory_space<vmem>> -> memref<1x1x10x18x128xbf16, #tpu.memory_space<vmem>>
    %26 = tpu.memref_squeeze %25 : memref<1x1x10x18x128xbf16, #tpu.memory_space<vmem>> -> memref<10x18x128xbf16, #tpu.memory_space<vmem>>
    %c1_37 = arith.constant 1 : index
    %c0_38 = arith.constant 0 : index
    %c0_39 = arith.constant 0 : index
    %27 = vector.load %26[%c1_37, %c0_38, %c0_39] : memref<10x18x128xbf16, #tpu.memory_space<vmem>>, vector<8x16x128xbf16>
    %28 = vector.shape_cast %27 : vector<8x16x128xbf16> to vector<128x128xbf16>
    %c3 = arith.constant 3 : index
    %c0_40 = arith.constant 0 : index
    %c0_41 = arith.constant 0 : index
    %29 = vector.load %arg3[%c3, %c0_40, %c0_41] : memref<9x128x128xbf16, #tpu.memory_space<vmem>>, vector<1x128x128xbf16>
    %30 = vector.shape_cast %29 : vector<1x128x128xbf16> to vector<128x128xbf16>
    %cst_42 = arith.constant dense<0.000000e+00> : vector<128x128xf32>
    %31 = tpu.matmul %28, %30, %cst_42 {dimension_numbers = #tpu.dot_dimension_numbers<[1], [0], [0], [1], [0, 0, 1, 1], [], []>} : vector<128x128xbf16>, vector<128x128xbf16>, vector<128x128xf32> -> vector<128x128xf32>
    %32 = arith.addf %24, %31 : vector<128x128xf32>
    %c0_i32_43 = arith.constant 0 : i32
    %c0_i32_44 = arith.constant 0 : i32
    %c0_i32_45 = arith.constant 0 : i32
    %c0_i32_46 = arith.constant 0 : i32
    %c0_i32_47 = arith.constant 0 : i32
    %33 = tpu.memref_slice %arg2[%c0_i32_43, %c0_i32_44, %c0_i32_45, %c0_i32_46, %c0_i32_47] : memref<1x1x10x18x128xbf16, #tpu.memory_space<vmem>> -> memref<1x1x10x18x128xbf16, #tpu.memory_space<vmem>>
    %34 = tpu.memref_squeeze %33 : memref<1x1x10x18x128xbf16, #tpu.memory_space<vmem>> -> memref<10x18x128xbf16, #tpu.memory_space<vmem>>
    %c1_48 = arith.constant 1 : index
    %c1_49 = arith.constant 1 : index
    %c0_50 = arith.constant 0 : index
    %35 = vector.load %34[%c1_48, %c1_49, %c0_50] : memref<10x18x128xbf16, #tpu.memory_space<vmem>>, vector<8x16x128xbf16>
    %36 = vector.shape_cast %35 : vector<8x16x128xbf16> to vector<128x128xbf16>
    %c4 = arith.constant 4 : index
    %c0_51 = arith.constant 0 : index
    %c0_52 = arith.constant 0 : index
    %37 = vector.load %arg3[%c4, %c0_51, %c0_52] : memref<9x128x128xbf16, #tpu.memory_space<vmem>>, vector<1x128x128xbf16>
    %38 = vector.shape_cast %37 : vector<1x128x128xbf16> to vector<128x128xbf16>
    %cst_53 = arith.constant dense<0.000000e+00> : vector<128x128xf32>
    %39 = tpu.matmul %36, %38, %cst_53 {dimension_numbers = #tpu.dot_dimension_numbers<[1], [0], [0], [1], [0, 0, 1, 1], [], []>} : vector<128x128xbf16>, vector<128x128xbf16>, vector<128x128xf32> -> vector<128x128xf32>
    %40 = arith.addf %32, %39 : vector<128x128xf32>
    %c0_i32_54 = arith.constant 0 : i32
    %c0_i32_55 = arith.constant 0 : i32
    %c0_i32_56 = arith.constant 0 : i32
    %c0_i32_57 = arith.constant 0 : i32
    %c0_i32_58 = arith.constant 0 : i32
    %41 = tpu.memref_slice %arg2[%c0_i32_54, %c0_i32_55, %c0_i32_56, %c0_i32_57, %c0_i32_58] : memref<1x1x10x18x128xbf16, #tpu.memory_space<vmem>> -> memref<1x1x10x18x128xbf16, #tpu.memory_space<vmem>>
    %42 = tpu.memref_squeeze %41 : memref<1x1x10x18x128xbf16, #tpu.memory_space<vmem>> -> memref<10x18x128xbf16, #tpu.memory_space<vmem>>
    %c1_59 = arith.constant 1 : index
    %c2_60 = arith.constant 2 : index
    %c0_61 = arith.constant 0 : index
    %43 = vector.load %42[%c1_59, %c2_60, %c0_61] : memref<10x18x128xbf16, #tpu.memory_space<vmem>>, vector<8x16x128xbf16>
    %44 = vector.shape_cast %43 : vector<8x16x128xbf16> to vector<128x128xbf16>
    %c5 = arith.constant 5 : index
    %c0_62 = arith.constant 0 : index
    %c0_63 = arith.constant 0 : index
    %45 = vector.load %arg3[%c5, %c0_62, %c0_63] : memref<9x128x128xbf16, #tpu.memory_space<vmem>>, vector<1x128x128xbf16>
    %46 = vector.shape_cast %45 : vector<1x128x128xbf16> to vector<128x128xbf16>
    %cst_64 = arith.constant dense<0.000000e+00> : vector<128x128xf32>
    %47 = tpu.matmul %44, %46, %cst_64 {dimension_numbers = #tpu.dot_dimension_numbers<[1], [0], [0], [1], [0, 0, 1, 1], [], []>} : vector<128x128xbf16>, vector<128x128xbf16>, vector<128x128xf32> -> vector<128x128xf32>
    %48 = arith.addf %40, %47 : vector<128x128xf32>
    %c0_i32_65 = arith.constant 0 : i32
    %c0_i32_66 = arith.constant 0 : i32
    %c0_i32_67 = arith.constant 0 : i32
    %c0_i32_68 = arith.constant 0 : i32
    %c0_i32_69 = arith.constant 0 : i32
    %49 = tpu.memref_slice %arg2[%c0_i32_65, %c0_i32_66, %c0_i32_67, %c0_i32_68, %c0_i32_69] : memref<1x1x10x18x128xbf16, #tpu.memory_space<vmem>> -> memref<1x1x10x18x128xbf16, #tpu.memory_space<vmem>>
    %50 = tpu.memref_squeeze %49 : memref<1x1x10x18x128xbf16, #tpu.memory_space<vmem>> -> memref<10x18x128xbf16, #tpu.memory_space<vmem>>
    %c2_70 = arith.constant 2 : index
    %c0_71 = arith.constant 0 : index
    %c0_72 = arith.constant 0 : index
    %51 = vector.load %50[%c2_70, %c0_71, %c0_72] : memref<10x18x128xbf16, #tpu.memory_space<vmem>>, vector<8x16x128xbf16>
    %52 = vector.shape_cast %51 : vector<8x16x128xbf16> to vector<128x128xbf16>
    %c6 = arith.constant 6 : index
    %c0_73 = arith.constant 0 : index
    %c0_74 = arith.constant 0 : index
    %53 = vector.load %arg3[%c6, %c0_73, %c0_74] : memref<9x128x128xbf16, #tpu.memory_space<vmem>>, vector<1x128x128xbf16>
    %54 = vector.shape_cast %53 : vector<1x128x128xbf16> to vector<128x128xbf16>
    %cst_75 = arith.constant dense<0.000000e+00> : vector<128x128xf32>
    %55 = tpu.matmul %52, %54, %cst_75 {dimension_numbers = #tpu.dot_dimension_numbers<[1], [0], [0], [1], [0, 0, 1, 1], [], []>} : vector<128x128xbf16>, vector<128x128xbf16>, vector<128x128xf32> -> vector<128x128xf32>
    %56 = arith.addf %48, %55 : vector<128x128xf32>
    %c0_i32_76 = arith.constant 0 : i32
    %c0_i32_77 = arith.constant 0 : i32
    %c0_i32_78 = arith.constant 0 : i32
    %c0_i32_79 = arith.constant 0 : i32
    %c0_i32_80 = arith.constant 0 : i32
    %57 = tpu.memref_slice %arg2[%c0_i32_76, %c0_i32_77, %c0_i32_78, %c0_i32_79, %c0_i32_80] : memref<1x1x10x18x128xbf16, #tpu.memory_space<vmem>> -> memref<1x1x10x18x128xbf16, #tpu.memory_space<vmem>>
    %58 = tpu.memref_squeeze %57 : memref<1x1x10x18x128xbf16, #tpu.memory_space<vmem>> -> memref<10x18x128xbf16, #tpu.memory_space<vmem>>
    %c2_81 = arith.constant 2 : index
    %c1_82 = arith.constant 1 : index
    %c0_83 = arith.constant 0 : index
    %59 = vector.load %58[%c2_81, %c1_82, %c0_83] : memref<10x18x128xbf16, #tpu.memory_space<vmem>>, vector<8x16x128xbf16>
    %60 = vector.shape_cast %59 : vector<8x16x128xbf16> to vector<128x128xbf16>
    %c7 = arith.constant 7 : index
    %c0_84 = arith.constant 0 : index
    %c0_85 = arith.constant 0 : index
    %61 = vector.load %arg3[%c7, %c0_84, %c0_85] : memref<9x128x128xbf16, #tpu.memory_space<vmem>>, vector<1x128x128xbf16>
    %62 = vector.shape_cast %61 : vector<1x128x128xbf16> to vector<128x128xbf16>
    %cst_86 = arith.constant dense<0.000000e+00> : vector<128x128xf32>
    %63 = tpu.matmul %60, %62, %cst_86 {dimension_numbers = #tpu.dot_dimension_numbers<[1], [0], [0], [1], [0, 0, 1, 1], [], []>} : vector<128x128xbf16>, vector<128x128xbf16>, vector<128x128xf32> -> vector<128x128xf32>
    %64 = arith.addf %56, %63 : vector<128x128xf32>
    %c0_i32_87 = arith.constant 0 : i32
    %c0_i32_88 = arith.constant 0 : i32
    %c0_i32_89 = arith.constant 0 : i32
    %c0_i32_90 = arith.constant 0 : i32
    %c0_i32_91 = arith.constant 0 : i32
    %65 = tpu.memref_slice %arg2[%c0_i32_87, %c0_i32_88, %c0_i32_89, %c0_i32_90, %c0_i32_91] : memref<1x1x10x18x128xbf16, #tpu.memory_space<vmem>> -> memref<1x1x10x18x128xbf16, #tpu.memory_space<vmem>>
    %66 = tpu.memref_squeeze %65 : memref<1x1x10x18x128xbf16, #tpu.memory_space<vmem>> -> memref<10x18x128xbf16, #tpu.memory_space<vmem>>
    %c2_92 = arith.constant 2 : index
    %c2_93 = arith.constant 2 : index
    %c0_94 = arith.constant 0 : index
    %67 = vector.load %66[%c2_92, %c2_93, %c0_94] : memref<10x18x128xbf16, #tpu.memory_space<vmem>>, vector<8x16x128xbf16>
    %68 = vector.shape_cast %67 : vector<8x16x128xbf16> to vector<128x128xbf16>
    %c8 = arith.constant 8 : index
    %c0_95 = arith.constant 0 : index
    %c0_96 = arith.constant 0 : index
    %69 = vector.load %arg3[%c8, %c0_95, %c0_96] : memref<9x128x128xbf16, #tpu.memory_space<vmem>>, vector<1x128x128xbf16>
    %70 = vector.shape_cast %69 : vector<1x128x128xbf16> to vector<128x128xbf16>
    %cst_97 = arith.constant dense<0.000000e+00> : vector<128x128xf32>
    %71 = tpu.matmul %68, %70, %cst_97 {dimension_numbers = #tpu.dot_dimension_numbers<[1], [0], [0], [1], [0, 0, 1, 1], [], []>} : vector<128x128xbf16>, vector<128x128xbf16>, vector<128x128xf32> -> vector<128x128xf32>
    %72 = arith.addf %64, %71 : vector<128x128xf32>
    %73 = vector.shape_cast %72 : vector<128x128xf32> to vector<8x16x128xf32>
    %74 = arith.truncf %73 : vector<8x16x128xf32> to vector<8x16x128xbf16>
    %c0_98 = arith.constant 0 : index
    %c0_99 = arith.constant 0 : index
    %c0_100 = arith.constant 0 : index
    %c0_101 = arith.constant 0 : index
    %75 = vector.load %arg4[%c0_98, %c0_99, %c0_100, %c0_101] : memref<1x8x16x128xbf16, #tpu.memory_space<vmem>>, vector<1x8x16x128xbf16>
    %76 = vector.shape_cast %75 : vector<1x8x16x128xbf16> to vector<8x16x128xbf16>
    %77 = vector.shape_cast %74 : vector<8x16x128xbf16> to vector<1x8x16x128xbf16>
    tpu.vector_store %arg4[%c0_98, %c0_99, %c0_100, %c0_101], %77 {strides = array<i32>} : memref<1x8x16x128xbf16, #tpu.memory_space<vmem>>, vector<1x8x16x128xbf16>,
    %cst_102 = arith.constant dense<0.000000e+00> : vector<128xf32>
    %78 = vector.multi_reduction <add>, %72, %cst_102 [0] : vector<128x128xf32> to vector<128xf32>
    %79 = vector.shape_cast %78 : vector<128xf32> to vector<1x128xf32>
    %c0_103 = arith.constant 0 : index
    %c0_104 = arith.constant 0 : index
    %c0_105 = arith.constant 0 : index
    %c0_106 = arith.constant 0 : index
    %80 = vector.load %arg5[%c0_103, %c0_104, %c0_105, %c0_106] : memref<1x1x2x128xf32, #tpu.memory_space<vmem>>, vector<1x1x1x128xf32>
    %81 = vector.shape_cast %80 : vector<1x1x1x128xf32> to vector<1x128xf32>
    %82 = vector.shape_cast %79 : vector<1x128xf32> to vector<1x1x1x128xf32>
    tpu.vector_store %arg5[%c0_103, %c0_104, %c0_105, %c0_106], %82 {strides = array<i32>} : memref<1x1x2x128xf32, #tpu.memory_space<vmem>>, vector<1x1x1x128xf32>,
    %83 = arith.mulf %72, %72 : vector<128x128xf32>
    %cst_107 = arith.constant dense<0.000000e+00> : vector<128xf32>
    %84 = vector.multi_reduction <add>, %83, %cst_107 [0] : vector<128x128xf32> to vector<128xf32>
    %85 = vector.shape_cast %84 : vector<128xf32> to vector<1x128xf32>
    %c0_108 = arith.constant 0 : index
    %c0_109 = arith.constant 0 : index
    %c1_110 = arith.constant 1 : index
    %c0_111 = arith.constant 0 : index
    %86 = vector.load %arg5[%c0_108, %c0_109, %c1_110, %c0_111] : memref<1x1x2x128xf32, #tpu.memory_space<vmem>>, vector<1x1x1x128xf32>
    %87 = vector.shape_cast %86 : vector<1x1x1x128xf32> to vector<1x128xf32>
    %88 = vector.shape_cast %85 : vector<1x128xf32> to vector<1x1x1x128xf32>
    tpu.vector_store %arg5[%c0_108, %c0_109, %c1_110, %c0_111], %88 {strides = array<i32>} : memref<1x1x2x128xf32, #tpu.memory_space<vmem>>, vector<1x1x1x128xf32>,
    return
  }
  func.func @transform_0(%arg0: i32, %arg1: i32) -> (i32, i32, i32, i32, i32) {
    %c0_i32 = arith.constant 0 : i32
    %c0_i32_0 = arith.constant 0 : i32
    %c0_i32_1 = arith.constant 0 : i32
    %c0_i32_2 = arith.constant 0 : i32
    return %arg0, %arg1, %c0_i32, %c0_i32_0, %c0_i32_1 : i32, i32, i32, i32, i32
  }
  func.func @transform_1(%arg0: i32, %arg1: i32) -> (i32, i32, i32) {
    %c0_i32 = arith.constant 0 : i32
    %c0_i32_0 = arith.constant 0 : i32
    %c0_i32_1 = arith.constant 0 : i32
    %c0_i32_2 = arith.constant 0 : i32
    return %c0_i32, %c0_i32_0, %c0_i32_1 : i32, i32, i32
  }
  func.func @transform_2(%arg0: i32, %arg1: i32) -> (i32, i32, i32, i32) {
    %c0_i32 = arith.constant 0 : i32
    %c0_i32_0 = arith.constant 0 : i32
    %c0_i32_1 = arith.constant 0 : i32
    return %arg0, %arg1, %c0_i32, %c0_i32_0 : i32, i32, i32, i32
  }
  func.func @transform_3(%arg0: i32, %arg1: i32) -> (i32, i32, i32, i32) {
    %c0_i32 = arith.constant 0 : i32
    %c0_i32_0 = arith.constant 0 : i32
    %c0_i32_1 = arith.constant 0 : i32
    return %arg0, %arg1, %c0_i32, %c0_i32_0 : i32, i32, i32, i32
  }
}

module attributes {stable_mosaic.version = 11 : i64} {
  func.func @_bn_relu_conv_stats_kernel(%arg0: i32, %arg1: i32, %arg2: memref<1x1x10x18x128xbf16, #tpu.memory_space<vmem>>, %arg3: memref<9x128x128xbf16, #tpu.memory_space<vmem>>, %arg4: memref<1x128xf32, #tpu.memory_space<vmem>>, %arg5: memref<1x128xf32, #tpu.memory_space<vmem>>, %arg6: memref<1x8x16x128xbf16, #tpu.memory_space<vmem>>, %arg7: memref<1x1x2x128xf32, #tpu.memory_space<vmem>>) attributes {dimension_semantics = [#tpu.dimension_semantics<parallel>, #tpu.dimension_semantics<parallel>], iteration_bounds = array<i64: 2, 2>, scalar_prefetch = 0 : i64, scratch_operands = 0 : i64, tpu.core_type = #tpu.core_type<tc>, window_params = [{transform_indices = @transform_0, window_bounds = array<i64: 1, 1, 10, 18, 128>}, {pipeline_mode = #tpu.pipeline_mode<synchronous>, transform_indices = @transform_1, window_bounds = array<i64: 9, 128, 128>}, {pipeline_mode = #tpu.pipeline_mode<synchronous>, transform_indices = @transform_2, window_bounds = array<i64: 1, 128>}, {pipeline_mode = #tpu.pipeline_mode<synchronous>, transform_indices = @transform_3, window_bounds = array<i64: 1, 128>}, {transform_indices = @transform_4, window_bounds = array<i64: 1, 8, 16, 128>}, {transform_indices = @transform_5, window_bounds = array<i64: 1, 1, 2, 128>}]} {
    %c0 = arith.constant 0 : index
    %c0_0 = arith.constant 0 : index
    %c0_1 = arith.constant 0 : index
    %c0_2 = arith.constant 0 : index
    %c0_3 = arith.constant 0 : index
    %0 = vector.load %arg2[%c0, %c0_0, %c0_1, %c0_2, %c0_3] : memref<1x1x10x18x128xbf16, #tpu.memory_space<vmem>>, vector<1x1x10x18x128xbf16>
    %1 = vector.shape_cast %0 : vector<1x1x10x18x128xbf16> to vector<10x18x128xbf16>
    %2 = arith.extf %1 : vector<10x18x128xbf16> to vector<10x18x128xf32>
    %c0_4 = arith.constant 0 : index
    %c0_5 = arith.constant 0 : index
    %3 = vector.load %arg4[%c0_4, %c0_5] : memref<1x128xf32, #tpu.memory_space<vmem>>, vector<1x128xf32>
    %4 = vector.shape_cast %3 : vector<1x128xf32> to vector<1x1x128xf32>
    %c0_6 = arith.constant 0 : index
    %c0_7 = arith.constant 0 : index
    %5 = vector.load %arg5[%c0_6, %c0_7] : memref<1x128xf32, #tpu.memory_space<vmem>>, vector<1x128xf32>
    %6 = vector.shape_cast %5 : vector<1x128xf32> to vector<1x1x128xf32>
    %7 = vector.broadcast %4 : vector<1x1x128xf32> to vector<10x18x128xf32>
    %8 = arith.mulf %2, %7 : vector<10x18x128xf32>
    %9 = vector.broadcast %6 : vector<1x1x128xf32> to vector<10x18x128xf32>
    %10 = arith.addf %8, %9 : vector<10x18x128xf32>
    %cst = arith.constant 0.000000e+00 : f32
    %11 = vector.broadcast %cst : f32 to vector<10x18x128xf32>
    %12 = arith.maximumf %10, %11 : vector<10x18x128xf32>
    %13 = tpu.iota {dimensions = array<i32: 0>} : vector<10x18x128xi32>
    %14 = tpu.iota {dimensions = array<i32: 1>} : vector<10x18x128xi32>
    %c0_i32 = arith.constant 0 : i32
    %15 = vector.broadcast %c0_i32 : i32 to vector<10x18x128xi32>
    %16 = arith.cmpi eq, %14, %15 : vector<10x18x128xi32>
    %c17_i32 = arith.constant 17 : i32
    %17 = vector.broadcast %c17_i32 : i32 to vector<10x18x128xi32>
    %18 = arith.cmpi eq, %14, %17 : vector<10x18x128xi32>
    %19 = arith.ori %16, %18 : vector<10x18x128xi1>
    %c0_i32_8 = arith.constant 0 : i32
    %20 = arith.cmpi eq, %arg1, %c0_i32_8 : i32
    %c0_i32_9 = arith.constant 0 : i32
    %21 = vector.broadcast %c0_i32_9 : i32 to vector<10x18x128xi32>
    %22 = arith.cmpi eq, %13, %21 : vector<10x18x128xi32>
    %23 = vector.broadcast %20 : i1 to vector<10x18x128xi1>
    %24 = arith.andi %23, %22 : vector<10x18x128xi1>
    %25 = arith.ori %19, %24 : vector<10x18x128xi1>
    %c1_i32 = arith.constant 1 : i32
    %26 = arith.cmpi eq, %arg1, %c1_i32 : i32
    %c9_i32 = arith.constant 9 : i32
    %27 = vector.broadcast %c9_i32 : i32 to vector<10x18x128xi32>
    %28 = arith.cmpi eq, %13, %27 : vector<10x18x128xi32>
    %29 = vector.broadcast %26 : i1 to vector<10x18x128xi1>
    %30 = arith.andi %29, %28 : vector<10x18x128xi1>
    %31 = arith.ori %25, %30 : vector<10x18x128xi1>
    %cst_10 = arith.constant 0.000000e+00 : f32
    %32 = vector.broadcast %cst_10 : f32 to vector<10x18x128xf32>
    %33 = arith.select %31, %32, %12 : vector<10x18x128xi1>, vector<10x18x128xf32>
    %34 = arith.truncf %33 : vector<10x18x128xf32> to vector<10x18x128xbf16>
    %cst_11 = arith.constant 0.000000e+00 : f32
    %35 = vector.broadcast %cst_11 : f32 to vector<128x128xf32>
    %36 = vector.extract_strided_slice %34 {offsets = [0, 0, 0], sizes = [8, 16, 128], strides = [1, 1, 1]} : vector<10x18x128xbf16> to vector<8x16x128xbf16>
    %37 = vector.shape_cast %36 : vector<8x16x128xbf16> to vector<128x128xbf16>
    %c0_12 = arith.constant 0 : index
    %c0_13 = arith.constant 0 : index
    %c0_14 = arith.constant 0 : index
    %38 = vector.load %arg3[%c0_12, %c0_13, %c0_14] : memref<9x128x128xbf16, #tpu.memory_space<vmem>>, vector<1x128x128xbf16>
    %39 = vector.shape_cast %38 : vector<1x128x128xbf16> to vector<128x128xbf16>
    %cst_15 = arith.constant dense<0.000000e+00> : vector<128x128xf32>
    %40 = tpu.matmul %37, %39, %cst_15 {dimension_numbers = #tpu.dot_dimension_numbers<[1], [0], [0], [1], [0, 0, 1, 1], [], []>} : vector<128x128xbf16>, vector<128x128xbf16>, vector<128x128xf32> -> vector<128x128xf32>
    %41 = arith.addf %35, %40 : vector<128x128xf32>
    %42 = vector.extract_strided_slice %34 {offsets = [0, 1, 0], sizes = [8, 16, 128], strides = [1, 1, 1]} : vector<10x18x128xbf16> to vector<8x16x128xbf16>
    %43 = vector.shape_cast %42 : vector<8x16x128xbf16> to vector<128x128xbf16>
    %c1 = arith.constant 1 : index
    %c0_16 = arith.constant 0 : index
    %c0_17 = arith.constant 0 : index
    %44 = vector.load %arg3[%c1, %c0_16, %c0_17] : memref<9x128x128xbf16, #tpu.memory_space<vmem>>, vector<1x128x128xbf16>
    %45 = vector.shape_cast %44 : vector<1x128x128xbf16> to vector<128x128xbf16>
    %cst_18 = arith.constant dense<0.000000e+00> : vector<128x128xf32>
    %46 = tpu.matmul %43, %45, %cst_18 {dimension_numbers = #tpu.dot_dimension_numbers<[1], [0], [0], [1], [0, 0, 1, 1], [], []>} : vector<128x128xbf16>, vector<128x128xbf16>, vector<128x128xf32> -> vector<128x128xf32>
    %47 = arith.addf %41, %46 : vector<128x128xf32>
    %48 = vector.extract_strided_slice %34 {offsets = [0, 2, 0], sizes = [8, 16, 128], strides = [1, 1, 1]} : vector<10x18x128xbf16> to vector<8x16x128xbf16>
    %49 = vector.shape_cast %48 : vector<8x16x128xbf16> to vector<128x128xbf16>
    %c2 = arith.constant 2 : index
    %c0_19 = arith.constant 0 : index
    %c0_20 = arith.constant 0 : index
    %50 = vector.load %arg3[%c2, %c0_19, %c0_20] : memref<9x128x128xbf16, #tpu.memory_space<vmem>>, vector<1x128x128xbf16>
    %51 = vector.shape_cast %50 : vector<1x128x128xbf16> to vector<128x128xbf16>
    %cst_21 = arith.constant dense<0.000000e+00> : vector<128x128xf32>
    %52 = tpu.matmul %49, %51, %cst_21 {dimension_numbers = #tpu.dot_dimension_numbers<[1], [0], [0], [1], [0, 0, 1, 1], [], []>} : vector<128x128xbf16>, vector<128x128xbf16>, vector<128x128xf32> -> vector<128x128xf32>
    %53 = arith.addf %47, %52 : vector<128x128xf32>
    %54 = vector.extract_strided_slice %34 {offsets = [1, 0, 0], sizes = [8, 16, 128], strides = [1, 1, 1]} : vector<10x18x128xbf16> to vector<8x16x128xbf16>
    %55 = vector.shape_cast %54 : vector<8x16x128xbf16> to vector<128x128xbf16>
    %c3 = arith.constant 3 : index
    %c0_22 = arith.constant 0 : index
    %c0_23 = arith.constant 0 : index
    %56 = vector.load %arg3[%c3, %c0_22, %c0_23] : memref<9x128x128xbf16, #tpu.memory_space<vmem>>, vector<1x128x128xbf16>
    %57 = vector.shape_cast %56 : vector<1x128x128xbf16> to vector<128x128xbf16>
    %cst_24 = arith.constant dense<0.000000e+00> : vector<128x128xf32>
    %58 = tpu.matmul %55, %57, %cst_24 {dimension_numbers = #tpu.dot_dimension_numbers<[1], [0], [0], [1], [0, 0, 1, 1], [], []>} : vector<128x128xbf16>, vector<128x128xbf16>, vector<128x128xf32> -> vector<128x128xf32>
    %59 = arith.addf %53, %58 : vector<128x128xf32>
    %60 = vector.extract_strided_slice %34 {offsets = [1, 1, 0], sizes = [8, 16, 128], strides = [1, 1, 1]} : vector<10x18x128xbf16> to vector<8x16x128xbf16>
    %61 = vector.shape_cast %60 : vector<8x16x128xbf16> to vector<128x128xbf16>
    %c4 = arith.constant 4 : index
    %c0_25 = arith.constant 0 : index
    %c0_26 = arith.constant 0 : index
    %62 = vector.load %arg3[%c4, %c0_25, %c0_26] : memref<9x128x128xbf16, #tpu.memory_space<vmem>>, vector<1x128x128xbf16>
    %63 = vector.shape_cast %62 : vector<1x128x128xbf16> to vector<128x128xbf16>
    %cst_27 = arith.constant dense<0.000000e+00> : vector<128x128xf32>
    %64 = tpu.matmul %61, %63, %cst_27 {dimension_numbers = #tpu.dot_dimension_numbers<[1], [0], [0], [1], [0, 0, 1, 1], [], []>} : vector<128x128xbf16>, vector<128x128xbf16>, vector<128x128xf32> -> vector<128x128xf32>
    %65 = arith.addf %59, %64 : vector<128x128xf32>
    %66 = vector.extract_strided_slice %34 {offsets = [1, 2, 0], sizes = [8, 16, 128], strides = [1, 1, 1]} : vector<10x18x128xbf16> to vector<8x16x128xbf16>
    %67 = vector.shape_cast %66 : vector<8x16x128xbf16> to vector<128x128xbf16>
    %c5 = arith.constant 5 : index
    %c0_28 = arith.constant 0 : index
    %c0_29 = arith.constant 0 : index
    %68 = vector.load %arg3[%c5, %c0_28, %c0_29] : memref<9x128x128xbf16, #tpu.memory_space<vmem>>, vector<1x128x128xbf16>
    %69 = vector.shape_cast %68 : vector<1x128x128xbf16> to vector<128x128xbf16>
    %cst_30 = arith.constant dense<0.000000e+00> : vector<128x128xf32>
    %70 = tpu.matmul %67, %69, %cst_30 {dimension_numbers = #tpu.dot_dimension_numbers<[1], [0], [0], [1], [0, 0, 1, 1], [], []>} : vector<128x128xbf16>, vector<128x128xbf16>, vector<128x128xf32> -> vector<128x128xf32>
    %71 = arith.addf %65, %70 : vector<128x128xf32>
    %72 = vector.extract_strided_slice %34 {offsets = [2, 0, 0], sizes = [8, 16, 128], strides = [1, 1, 1]} : vector<10x18x128xbf16> to vector<8x16x128xbf16>
    %73 = vector.shape_cast %72 : vector<8x16x128xbf16> to vector<128x128xbf16>
    %c6 = arith.constant 6 : index
    %c0_31 = arith.constant 0 : index
    %c0_32 = arith.constant 0 : index
    %74 = vector.load %arg3[%c6, %c0_31, %c0_32] : memref<9x128x128xbf16, #tpu.memory_space<vmem>>, vector<1x128x128xbf16>
    %75 = vector.shape_cast %74 : vector<1x128x128xbf16> to vector<128x128xbf16>
    %cst_33 = arith.constant dense<0.000000e+00> : vector<128x128xf32>
    %76 = tpu.matmul %73, %75, %cst_33 {dimension_numbers = #tpu.dot_dimension_numbers<[1], [0], [0], [1], [0, 0, 1, 1], [], []>} : vector<128x128xbf16>, vector<128x128xbf16>, vector<128x128xf32> -> vector<128x128xf32>
    %77 = arith.addf %71, %76 : vector<128x128xf32>
    %78 = vector.extract_strided_slice %34 {offsets = [2, 1, 0], sizes = [8, 16, 128], strides = [1, 1, 1]} : vector<10x18x128xbf16> to vector<8x16x128xbf16>
    %79 = vector.shape_cast %78 : vector<8x16x128xbf16> to vector<128x128xbf16>
    %c7 = arith.constant 7 : index
    %c0_34 = arith.constant 0 : index
    %c0_35 = arith.constant 0 : index
    %80 = vector.load %arg3[%c7, %c0_34, %c0_35] : memref<9x128x128xbf16, #tpu.memory_space<vmem>>, vector<1x128x128xbf16>
    %81 = vector.shape_cast %80 : vector<1x128x128xbf16> to vector<128x128xbf16>
    %cst_36 = arith.constant dense<0.000000e+00> : vector<128x128xf32>
    %82 = tpu.matmul %79, %81, %cst_36 {dimension_numbers = #tpu.dot_dimension_numbers<[1], [0], [0], [1], [0, 0, 1, 1], [], []>} : vector<128x128xbf16>, vector<128x128xbf16>, vector<128x128xf32> -> vector<128x128xf32>
    %83 = arith.addf %77, %82 : vector<128x128xf32>
    %84 = vector.extract_strided_slice %34 {offsets = [2, 2, 0], sizes = [8, 16, 128], strides = [1, 1, 1]} : vector<10x18x128xbf16> to vector<8x16x128xbf16>
    %85 = vector.shape_cast %84 : vector<8x16x128xbf16> to vector<128x128xbf16>
    %c8 = arith.constant 8 : index
    %c0_37 = arith.constant 0 : index
    %c0_38 = arith.constant 0 : index
    %86 = vector.load %arg3[%c8, %c0_37, %c0_38] : memref<9x128x128xbf16, #tpu.memory_space<vmem>>, vector<1x128x128xbf16>
    %87 = vector.shape_cast %86 : vector<1x128x128xbf16> to vector<128x128xbf16>
    %cst_39 = arith.constant dense<0.000000e+00> : vector<128x128xf32>
    %88 = tpu.matmul %85, %87, %cst_39 {dimension_numbers = #tpu.dot_dimension_numbers<[1], [0], [0], [1], [0, 0, 1, 1], [], []>} : vector<128x128xbf16>, vector<128x128xbf16>, vector<128x128xf32> -> vector<128x128xf32>
    %89 = arith.addf %83, %88 : vector<128x128xf32>
    %90 = vector.shape_cast %89 : vector<128x128xf32> to vector<8x16x128xf32>
    %91 = arith.truncf %90 : vector<8x16x128xf32> to vector<8x16x128xbf16>
    %c0_40 = arith.constant 0 : index
    %c0_41 = arith.constant 0 : index
    %c0_42 = arith.constant 0 : index
    %c0_43 = arith.constant 0 : index
    %92 = vector.load %arg6[%c0_40, %c0_41, %c0_42, %c0_43] : memref<1x8x16x128xbf16, #tpu.memory_space<vmem>>, vector<1x8x16x128xbf16>
    %93 = vector.shape_cast %92 : vector<1x8x16x128xbf16> to vector<8x16x128xbf16>
    %94 = vector.shape_cast %91 : vector<8x16x128xbf16> to vector<1x8x16x128xbf16>
    tpu.vector_store %arg6[%c0_40, %c0_41, %c0_42, %c0_43], %94 {strides = array<i32>} : memref<1x8x16x128xbf16, #tpu.memory_space<vmem>>, vector<1x8x16x128xbf16>,
    %cst_44 = arith.constant dense<0.000000e+00> : vector<128xf32>
    %95 = vector.multi_reduction <add>, %89, %cst_44 [0] : vector<128x128xf32> to vector<128xf32>
    %96 = vector.shape_cast %95 : vector<128xf32> to vector<1x128xf32>
    %c0_45 = arith.constant 0 : index
    %c0_46 = arith.constant 0 : index
    %c0_47 = arith.constant 0 : index
    %c0_48 = arith.constant 0 : index
    %97 = vector.load %arg7[%c0_45, %c0_46, %c0_47, %c0_48] : memref<1x1x2x128xf32, #tpu.memory_space<vmem>>, vector<1x1x1x128xf32>
    %98 = vector.shape_cast %97 : vector<1x1x1x128xf32> to vector<1x128xf32>
    %99 = vector.shape_cast %96 : vector<1x128xf32> to vector<1x1x1x128xf32>
    tpu.vector_store %arg7[%c0_45, %c0_46, %c0_47, %c0_48], %99 {strides = array<i32>} : memref<1x1x2x128xf32, #tpu.memory_space<vmem>>, vector<1x1x1x128xf32>,
    %100 = arith.mulf %89, %89 : vector<128x128xf32>
    %cst_49 = arith.constant dense<0.000000e+00> : vector<128xf32>
    %101 = vector.multi_reduction <add>, %100, %cst_49 [0] : vector<128x128xf32> to vector<128xf32>
    %102 = vector.shape_cast %101 : vector<128xf32> to vector<1x128xf32>
    %c0_50 = arith.constant 0 : index
    %c0_51 = arith.constant 0 : index
    %c1_52 = arith.constant 1 : index
    %c0_53 = arith.constant 0 : index
    %103 = vector.load %arg7[%c0_50, %c0_51, %c1_52, %c0_53] : memref<1x1x2x128xf32, #tpu.memory_space<vmem>>, vector<1x1x1x128xf32>
    %104 = vector.shape_cast %103 : vector<1x1x1x128xf32> to vector<1x128xf32>
    %105 = vector.shape_cast %102 : vector<1x128xf32> to vector<1x1x1x128xf32>
    tpu.vector_store %arg7[%c0_50, %c0_51, %c1_52, %c0_53], %105 {strides = array<i32>} : memref<1x1x2x128xf32, #tpu.memory_space<vmem>>, vector<1x1x1x128xf32>,
    return
  }
  func.func @transform_0(%arg0: i32, %arg1: i32) -> (i32, i32, i32, i32, i32) {
    %c0_i32 = arith.constant 0 : i32
    %c0_i32_0 = arith.constant 0 : i32
    %c0_i32_1 = arith.constant 0 : i32
    %c0_i32_2 = arith.constant 0 : i32
    return %arg0, %arg1, %c0_i32, %c0_i32_0, %c0_i32_1 : i32, i32, i32, i32, i32
  }
  func.func @transform_1(%arg0: i32, %arg1: i32) -> (i32, i32, i32) {
    %c0_i32 = arith.constant 0 : i32
    %c0_i32_0 = arith.constant 0 : i32
    %c0_i32_1 = arith.constant 0 : i32
    %c0_i32_2 = arith.constant 0 : i32
    return %c0_i32, %c0_i32_0, %c0_i32_1 : i32, i32, i32
  }
  func.func @transform_2(%arg0: i32, %arg1: i32) -> (i32, i32) {
    %c0_i32 = arith.constant 0 : i32
    %c0_i32_0 = arith.constant 0 : i32
    %c0_i32_1 = arith.constant 0 : i32
    return %c0_i32, %c0_i32_0 : i32, i32
  }
  func.func @transform_3(%arg0: i32, %arg1: i32) -> (i32, i32) {
    %c0_i32 = arith.constant 0 : i32
    %c0_i32_0 = arith.constant 0 : i32
    %c0_i32_1 = arith.constant 0 : i32
    return %c0_i32, %c0_i32_0 : i32, i32
  }
  func.func @transform_4(%arg0: i32, %arg1: i32) -> (i32, i32, i32, i32) {
    %c0_i32 = arith.constant 0 : i32
    %c0_i32_0 = arith.constant 0 : i32
    %c0_i32_1 = arith.constant 0 : i32
    return %arg0, %arg1, %c0_i32, %c0_i32_0 : i32, i32, i32, i32
  }
  func.func @transform_5(%arg0: i32, %arg1: i32) -> (i32, i32, i32, i32) {
    %c0_i32 = arith.constant 0 : i32
    %c0_i32_0 = arith.constant 0 : i32
    %c0_i32_1 = arith.constant 0 : i32
    return %arg0, %arg1, %c0_i32, %c0_i32_0 : i32, i32, i32, i32
  }
}

module attributes {stable_mosaic.version = 11 : i64} {
  func.func @_bn_relu_kernel(%arg0: i32, %arg1: i32, %arg2: memref<1x8x16x128xbf16, #tpu.memory_space<vmem>>, %arg3: memref<1x128xf32, #tpu.memory_space<vmem>>, %arg4: memref<1x128xf32, #tpu.memory_space<vmem>>, %arg5: memref<1x8x16x128xf32, #tpu.memory_space<vmem>>) attributes {dimension_semantics = [#tpu.dimension_semantics<parallel>, #tpu.dimension_semantics<parallel>], iteration_bounds = array<i64: 2, 2>, scalar_prefetch = 0 : i64, scratch_operands = 0 : i64, tpu.core_type = #tpu.core_type<tc>, window_params = [{transform_indices = @transform_0, window_bounds = array<i64: 1, 8, 16, 128>}, {pipeline_mode = #tpu.pipeline_mode<synchronous>, transform_indices = @transform_1, window_bounds = array<i64: 1, 128>}, {pipeline_mode = #tpu.pipeline_mode<synchronous>, transform_indices = @transform_2, window_bounds = array<i64: 1, 128>}, {transform_indices = @transform_3, window_bounds = array<i64: 1, 8, 16, 128>}]} {
    %c0 = arith.constant 0 : index
    %c0_0 = arith.constant 0 : index
    %c0_1 = arith.constant 0 : index
    %c0_2 = arith.constant 0 : index
    %0 = vector.load %arg2[%c0, %c0_0, %c0_1, %c0_2] : memref<1x8x16x128xbf16, #tpu.memory_space<vmem>>, vector<1x8x16x128xbf16>
    %1 = arith.extf %0 : vector<1x8x16x128xbf16> to vector<1x8x16x128xf32>
    %c0_3 = arith.constant 0 : index
    %c0_4 = arith.constant 0 : index
    %2 = vector.load %arg3[%c0_3, %c0_4] : memref<1x128xf32, #tpu.memory_space<vmem>>, vector<1x128xf32>
    %3 = vector.shape_cast %2 : vector<1x128xf32> to vector<1x1x1x128xf32>
    %c0_5 = arith.constant 0 : index
    %c0_6 = arith.constant 0 : index
    %4 = vector.load %arg4[%c0_5, %c0_6] : memref<1x128xf32, #tpu.memory_space<vmem>>, vector<1x128xf32>
    %5 = vector.shape_cast %4 : vector<1x128xf32> to vector<1x1x1x128xf32>
    %6 = vector.broadcast %3 : vector<1x1x1x128xf32> to vector<1x8x16x128xf32>
    %7 = arith.mulf %1, %6 : vector<1x8x16x128xf32>
    %8 = vector.broadcast %5 : vector<1x1x1x128xf32> to vector<1x8x16x128xf32>
    %9 = arith.addf %7, %8 : vector<1x8x16x128xf32>
    %cst = arith.constant 0.000000e+00 : f32
    %10 = vector.broadcast %cst : f32 to vector<1x8x16x128xf32>
    %11 = arith.maximumf %9, %10 : vector<1x8x16x128xf32>
    %c0_7 = arith.constant 0 : index
    %c0_8 = arith.constant 0 : index
    %c0_9 = arith.constant 0 : index
    %c0_10 = arith.constant 0 : index
    %12 = vector.load %arg5[%c0_7, %c0_8, %c0_9, %c0_10] : memref<1x8x16x128xf32, #tpu.memory_space<vmem>>, vector<1x8x16x128xf32>
    tpu.vector_store %arg5[%c0_7, %c0_8, %c0_9, %c0_10], %11 {strides = array<i32>} : memref<1x8x16x128xf32, #tpu.memory_space<vmem>>, vector<1x8x16x128xf32>,
    return
  }
  func.func @transform_0(%arg0: i32, %arg1: i32) -> (i32, i32, i32, i32) {
    %c0_i32 = arith.constant 0 : i32
    %c0_i32_0 = arith.constant 0 : i32
    %c0_i32_1 = arith.constant 0 : i32
    return %arg0, %arg1, %c0_i32, %c0_i32_0 : i32, i32, i32, i32
  }
  func.func @transform_1(%arg0: i32, %arg1: i32) -> (i32, i32) {
    %c0_i32 = arith.constant 0 : i32
    %c0_i32_0 = arith.constant 0 : i32
    %c0_i32_1 = arith.constant 0 : i32
    return %c0_i32, %c0_i32_0 : i32, i32
  }
  func.func @transform_2(%arg0: i32, %arg1: i32) -> (i32, i32) {
    %c0_i32 = arith.constant 0 : i32
    %c0_i32_0 = arith.constant 0 : i32
    %c0_i32_1 = arith.constant 0 : i32
    return %c0_i32, %c0_i32_0 : i32, i32
  }
  func.func @transform_3(%arg0: i32, %arg1: i32) -> (i32, i32, i32, i32) {
    %c0_i32 = arith.constant 0 : i32
    %c0_i32_0 = arith.constant 0 : i32
    %c0_i32_1 = arith.constant 0 : i32
    return %arg0, %arg1, %c0_i32, %c0_i32_0 : i32, i32, i32, i32
  }
}

</mosaic_0001>

<llo_original>
// kernel: conv_block_forward.5
$region0: #{conv_block_forward.5}
  #allocation0 [shape = 'u32[]', space=smem, size = 0x4, offset = 0x4, fixed_abs, tag = 'smem constant byte address 0x4 - core index']
  #allocation1 [shape = 'u32[144,128]{1,0:T(1,128)}', space=vmem, size = 0x12000, scoped, tag = 'internal scratch']
  %s0 = inlined_call_operand.vmem [shape: bf16[2,16,16,128], index: 0, kind: input, shape index: {}]
  %s1 = inlined_call_operand.vmem [shape: f32[1,128], index: 1, kind: input, shape index: {}]
  %s2 = inlined_call_operand.vmem [shape: f32[1,128], index: 2, kind: input, shape index: {}]
  %s3 = inlined_call_operand.vmem [shape: f32[2,16,16,128], index: 3, kind: output, shape index: {}]
  %s4 = sld [smem:[#allocation0]]
  $region45: #{conv_block_forward.5} parent=0
    _
  %s6 = ssub.s32 1, %s4
  %s7 = scalar_select 0, %s6, %s4
  loop: start=0, step=1, limit=6
  $region2: #{conv_block_forward.5} parent=0 // loop_pre_header
    _
  $region3: #{conv_block_forward.5} parent=0 // loop_header
    %s9 = sphi 0, %s13
    %p10 = scmp.ge.s32.totalorder %s9, 6
    %s16 = sphi 0, %s28
    %s17 = sphi 0, %s24
    %s18 = sphi 0, %s16
    %s19 = sphi 0, %s17
    %s20 = sphi 0, %s18
    %s21 = sphi 0, %s19
    %s33 = sphi 0, %s35
    %s36 = sphi 0, %s33
    %s37 = sphi 0, %s36
    %s53 = sphi 0, %s37
    %s57 = sphi 0, %s57
    %s59 = sphi 0, %s57
    %s60 = sphi 0, %s59
    %s74 = sphi 0, %s60
    %s78 = sphi 0, %s78
    %s80 = sphi 0, %s78
    %s81 = sphi 0, %s80
    %s95 = sphi 0, %s81
    %s103 = sphi 0, %s105
    %s106 = sphi 0, %s103
    %s107 = sphi 0, %s106
    %s123 = sphi 0, %s107
  $region4: #{conv_block_forward.5} parent=0 // loop_header_branch
    %12 = sbr.rel (%p10) target = $region8
  $region5: #{conv_block_forward.5} parent=0 // loop_body
    %s14 = ssub.s32 %s9, 1
    %s15 = ssub.s32 %s9, 2
    %s22 = sadd.s32 1, %s17
    %p23 = scmp.ge.s32.totalorder %s22, 2
    %s24 = scalar_select %p23, 0, %s22
    %s25 = sadd.s32 1, %s16
    %s26 = scalar_select %p23, %s25, %s16
    %p27 = scmp.ge.s32.totalorder %s26, 2
    %s28 = scalar_select %p27, 0, %s26
    %s29 = ssub.s32 %s16, %s28
    %s30 = ssub.s32 %s17, %s24
    %s31 = sor.u32 %s29, %s30
    %p32 = scmp.eq.s32.totalorder %s31, 0
    %s34 = sadd.s32 %s33, 1
    %s35 = scalar_select %p32, %s33, %s34
    %p38 = pneg %p32
    %p39 = scmp.eq.s32.totalorder %s9, 3
    %p40 = por %p38, %p39
    %p41 = scmp.ne.s32.totalorder %s33, %s36
    %p42 = scmp.eq.s32.totalorder %s9, 0
    %p43 = por %p41, %p42
    %p44 = scmp.ne.s32.totalorder %s33, %s36
    %p45 = scmp.eq.s32.totalorder %s14, 3
    %p46 = por %p44, %p45
    %p47 = scmp.ne.s32.totalorder %s36, %s37
    %p48 = scmp.eq.s32.totalorder %s14, 0
    %p49 = por %p47, %p48
    %p50 = scmp.ne.s32.totalorder %s36, %s37
    %p51 = scmp.eq.s32.totalorder %s15, 3
    %p52 = por %p50, %p51
    %p54 = scmp.ne.s32.totalorder %s37, %s53
    %p55 = scmp.eq.s32.totalorder %s15, 0
    %p56 = por %p54, %p55
    %s58 = sadd.s32 %s57, 1
    %p61 = scmp.eq.s32.totalorder %s9, 3
    %p62 = scmp.ne.s32.totalorder %s57, %s59
    %p63 = scmp.eq.s32.totalorder %s9, 0
    %p64 = por %p62, %p63
    %p65 = scmp.ne.s32.totalorder %s57, %s59
    %p66 = scmp.eq.s32.totalorder %s14, 3
    %p67 = por %p65, %p66
    %p68 = scmp.ne.s32.totalorder %s59, %s60
    %p69 = scmp.eq.s32.totalorder %s14, 0
    %p70 = por %p68, %p69
    %p71 = scmp.ne.s32.totalorder %s59, %s60
    %p72 = scmp.eq.s32.totalorder %s15, 3
    %p73 = por %p71, %p72
    %p75 = scmp.ne.s32.totalorder %s60, %s74
    %p76 = scmp.eq.s32.totalorder %s15, 0
    %p77 = por %p75, %p76
    %s79 = sadd.s32 %s78, 1
    %p82 = scmp.eq.s32.totalorder %s9, 3
    %p83 = scmp.ne.s32.totalorder %s78, %s80
    %p84 = scmp.eq.s32.totalorder %s9, 0
    %p85 = por %p83, %p84
    %p86 = scmp.ne.s32.totalorder %s78, %s80
    %p87 = scmp.eq.s32.totalorder %s14, 3
    %p88 = por %p86, %p87
    %p89 = scmp.ne.s32.totalorder %s80, %s81
    %p90 = scmp.eq.s32.totalorder %s14, 0
    %p91 = por %p89, %p90
    %p92 = scmp.ne.s32.totalorder %s80, %s81
    %p93 = scmp.eq.s32.totalorder %s15, 3
    %p94 = por %p92, %p93
    %p96 = scmp.ne.s32.totalorder %s81, %s95
    %p97 = scmp.eq.s32.totalorder %s15, 0
    %p98 = por %p96, %p97
    %s99 = ssub.s32 %s16, %s28
    %s100 = ssub.s32 %s17, %s24
    %s101 = sor.u32 %s99, %s100
    %p102 = scmp.eq.s32.totalorder %s101, 0
    %s104 = sadd.s32 %s103, 1
    %s105 = scalar_select %p102, %s103, %s104
    %p108 = pneg %p102
    %p109 = scmp.eq.s32.totalorder %s9, 3
    %p110 = por %p108, %p109
    %p111 = scmp.ne.s32.totalorder %s103, %s106
    %p112 = scmp.eq.s32.totalorder %s9, 0
    %p113 = por %p111, %p112
    %p114 = scmp.ne.s32.totalorder %s103, %s106
    %p115 = scmp.eq.s32.totalorder %s14, 3
    %p116 = por %p114, %p115
    %p117 = scmp.ne.s32.totalorder %s106, %s107
    %p118 = scmp.eq.s32.totalorder %s14, 0
    %p119 = por %p117, %p118
    %p120 = scmp.ne.s32.totalorder %s106, %s107
    %p121 = scmp.eq.s32.totalorder %s15, 3
    %p122 = por %p120, %p121
    %p124 = scmp.ne.s32.totalorder %s107, %s123
    %p125 = scmp.eq.s32.totalorder %s15, 0
    %p126 = por %p124, %p125
    %p127 = scmp.le.s32.totalorder 1, %s9
    %p128 = scmp.lt.s32.totalorder %s9, 5
    %p129 = pnand %p127, %p128
    %p130 = pneg %p129
    // Predicated region
    $region9: #{conv_block_forward.5} parent=5 // pred_check
      _
    $region10: #{conv_block_forward.5} parent=5 // pred_check_branch
      %132 = sbr.rel (%p129) target = $region12
    $region11: #{conv_block_forward.5} parent=5 // pred_region
      %s133 = ssub.s32 %s9, 1
      // Predicated region
      $region13: #{conv_block_forward.5} parent=11 // pred_check
        %p134 = pneg %p70
      $region14: #{conv_block_forward.5} parent=11 // pred_check_branch
        %136 = sbr.rel (%p134) target = $region16
      $region15: #{conv_block_forward.5} parent=11 // pred_region
        _
      $region16: #{conv_block_forward.5} parent=11 // pred_fallthru
        _
      // Predicated region
      $region17: #{conv_block_forward.5} parent=11 // pred_check
        %p137 = pneg %p91
      $region18: #{conv_block_forward.5} parent=11 // pred_check_branch
        %139 = sbr.rel (%p137) target = $region20
      $region19: #{conv_block_forward.5} parent=11 // pred_region
        _
      $region20: #{conv_block_forward.5} parent=11 // pred_fallthru
        _
    $region12: #{conv_block_forward.5} parent=5 // pred_fallthru
      _
    %p140 = scmp.lt.s32.totalorder %s9, 4
    // Predicated region
    $region21: #{conv_block_forward.5} parent=5 // pred_check
      %p141 = pneg %p140
    $region22: #{conv_block_forward.5} parent=5 // pred_check_branch
      %143 = sbr.rel (%p141) target = $region24
    $region23: #{conv_block_forward.5} parent=5 // pred_region
      // Predicated region
      $region25: #{conv_block_forward.5} parent=23 // pred_check
        %p144 = pneg %p43
      $region26: #{conv_block_forward.5} parent=23 // pred_check_branch
        %146 = sbr.rel (%p144) target = $region28
      $region27: #{conv_block_forward.5} parent=23 // pred_region
        %s147 = smul.u32 8, %s17
        %p148 = scmp.lt.s32.totalorder %s16, 1
        %s149 = scalar_select %p148, %s16, 1
        %p150 = scmp.lt.s32.totalorder %s147, 15
        %s151 = scalar_select %p150, %s147, 15
        %s152 = smul.addr %s151, 2
        %s153 = smul.addr %s149, 32
        %s154 = sadd.s32 %s152, %s153
        %s155 = smul.addr %s154, 4
        %s156 = scalar_lea.vmem %s0, %s155
        %s157 = smul.u32 8, %s17
      $region28: #{conv_block_forward.5} parent=23 // pred_fallthru
        _
    $region24: #{conv_block_forward.5} parent=5 // pred_fallthru
      _
    %p158 = scmp.le.s32.totalorder 1, %s9
    %p159 = scmp.lt.s32.totalorder %s9, 5
    %p160 = pnand %p158, %p159
    %p161 = pneg %p160
    // Predicated region
    $region29: #{conv_block_forward.5} parent=5 // pred_check
      _
    $region30: #{conv_block_forward.5} parent=5 // pred_check_branch
      %163 = sbr.rel (%p160) target = $region32
    $region31: #{conv_block_forward.5} parent=5 // pred_region
      %s164 = ssub.s32 %s9, 1
      %s165 = smul.u32 8, %s19
      %p166 = scmp.lt.s32.totalorder %s18, 1
      %s167 = scalar_select %p166, %s18, 1
      %p168 = scmp.lt.s32.totalorder %s165, 15
      %s169 = scalar_select %p168, %s165, 15
      %s170 = smul.addr %s169, 2
      %s171 = smul.addr %s167, 32
      %s172 = sadd.s32 %s170, %s171
      %s173 = smul.addr %s172, 4
      %s174 = scalar_lea.vmem %s0, %s173
      %p175 = pneg %p49
      %p176 = pneg %p46
      %p177 = pneg %p70
      %p178 = pneg %p67
      %p179 = pneg %p91
      %p180 = pneg %p88
      %p181 = pneg %p119
      %p182 = pneg %p116
      %s183 = smul.u32 8, %s19
      %p184 = scmp.lt.s32.totalorder %s18, 1
      %s185 = scalar_select %p184, %s18, 1
      %p186 = scmp.lt.s32.totalorder %s183, 15
      %s187 = scalar_select %p186, %s183, 15
      %s188 = smul.addr %s187, 2
      %s189 = smul.addr %s185, 32
      %s190 = sadd.s32 %s188, %s189
      %s191 = smul.addr %s190, 8
      %s192 = scalar_lea.vmem %s3, %s191
      %s193 = smul.u32 8, %s19
      %p194 = scmp.lt.s32.totalorder %s18, 1
      %s195 = scalar_select %p194, %s18, 1
      %p196 = scmp.lt.s32.totalorder %s193, 15
      %s197 = scalar_select %p196, %s193, 15
      %s198 = smul.addr %s197, 2
      %s199 = smul.addr %s195, 32
      %s200 = sadd.s32 %s198, %s199
      %s201 = smul.addr %s200, 4
      %s202 = scalar_lea.vmem %s0, %s201
      %s203 = smul.u32 8, %s19
      %s204 = smul.u32 8, %s19
      %p205 = scmp.lt.s32.totalorder %s18, 1
      %s206 = scalar_select %p205, %s18, 1
      %p207 = scmp.lt.s32.totalorder %s204, 15
      %s208 = scalar_select %p207, %s204, 15
      %s209 = smul.addr %s208, 2
      %s210 = smul.addr %s206, 32
      %s211 = sadd.s32 %s209, %s210
      %s212 = smul.addr %s211, 8
      %s213 = scalar_lea.vmem %s3, %s212
      %s214 = smul.u32 8, %s19
      %v215 = vld [vmem:[%s202] sm:$0xf]
      %v216 = vld [vmem:[%s202 + $0x4] sm:$0xf]
      %v217 = vld [vmem:[%s202 + $0x8] sm:$0xf]
      %v218 = vld [vmem:[%s202 + $0xc] sm:$0xf]
      %v219 = vld [vmem:[%s202 + $0x10] sm:$0xf]
      %v220 = vld [vmem:[%s202 + $0x14] sm:$0xf]
      %v221 = vld [vmem:[%s202 + $0x18] sm:$0xf]
      %v222 = vld [vmem:[%s202 + $0x1c] sm:$0xf]
      %v223 = vld [vmem:[%s202 + $0x20] sm:$0xf]
      %v224 = vld [vmem:[%s202 + $0x24] sm:$0xf]
      %v225 = vld [vmem:[%s202 + $0x28] sm:$0xf]
      %v226 = vld [vmem:[%s202 + $0x2c] sm:$0xf]
      %v227 = vld [vmem:[%s202 + $0x30] sm:$0xf]
      %v228 = vld [vmem:[%s202 + $0x34] sm:$0xf]
      %v229 = vld [vmem:[%s202 + $0x38] sm:$0xf]
      %v230 = vld [vmem:[%s202 + $0x3c] sm:$0xf]
      %v231 = vunpack.c.l.bf16 %v215
      %v232 = vunpack.c.l.bf16 %v216
      %v233 = vunpack.c.l.bf16 %v217
      %v234 = vunpack.c.l.bf16 %v218
      %v235 = vunpack.c.l.bf16 %v219
      %v236 = vunpack.c.l.bf16 %v220
      %v237 = vunpack.c.l.bf16 %v221
      %v238 = vunpack.c.l.bf16 %v222
      %v239 = vunpack.c.l.bf16 %v223
      %v240 = vunpack.c.l.bf16 %v224
      %v241 = vunpack.c.l.bf16 %v225
      %v242 = vunpack.c.l.bf16 %v226
      %v243 = vunpack.c.l.bf16 %v227
      %v244 = vunpack.c.l.bf16 %v228
      %v245 = vunpack.c.l.bf16 %v229
      %v246 = vunpack.c.l.bf16 %v230
      %v247 = vld [vmem:[%s1] sm:$0x1]
      %v248 = vld [vmem:[%s2] sm:$0x1]
      %v250 = vlaneseq
      %v251 = vshrl.u32 %v250, 7
      %v252 = vsub.s32 0, %v251
      %v253 = vrot.slane %v247, %v252
      %v255 = vmul.f32 %v231, %v253
      %v256 = vmul.f32 %v232, %v253
      %v257 = vmul.f32 %v233, %v253
      %v258 = vmul.f32 %v234, %v253
      %v259 = vmul.f32 %v235, %v253
      %v260 = vmul.f32 %v236, %v253
      %v261 = vmul.f32 %v237, %v253
      %v262 = vmul.f32 %v238, %v253
      %v263 = vmul.f32 %v239, %v253
      %v264 = vmul.f32 %v240, %v253
      %v265 = vmul.f32 %v241, %v253
      %v266 = vmul.f32 %v242, %v253
      %v267 = vmul.f32 %v243, %v253
      %v268 = vmul.f32 %v244, %v253
      %v269 = vmul.f32 %v245, %v253
      %v270 = vmul.f32 %v246, %v253
      %v272 = vlaneseq
      %v273 = vshrl.u32 %v272, 7
      %v274 = vsub.s32 0, %v273
      %v275 = vrot.slane %v248, %v274
      %v277 = vadd.f32 %v255, %v275
      %v278 = vadd.f32 %v256, %v275
      %v279 = vadd.f32 %v257, %v275
      %v280 = vadd.f32 %v258, %v275
      %v281 = vadd.f32 %v259, %v275
      %v282 = vadd.f32 %v260, %v275
      %v283 = vadd.f32 %v261, %v275
      %v284 = vadd.f32 %v262, %v275
      %v285 = vadd.f32 %v263, %v275
      %v286 = vadd.f32 %v264, %v275
      %v287 = vadd.f32 %v265, %v275
      %v288 = vadd.f32 %v266, %v275
      %v289 = vadd.f32 %v267, %v275
      %v290 = vadd.f32 %v268, %v275
      %v291 = vadd.f32 %v269, %v275
      %v292 = vadd.f32 %v270, %v275
      %v293 = vmax.f32 %v277, 0.0
      %v294 = vmax.f32 %v278, 0.0
      %v295 = vmax.f32 %v279, 0.0
      %v296 = vmax.f32 %v280, 0.0
      %v297 = vmax.f32 %v281, 0.0
      %v298 = vmax.f32 %v282, 0.0
      %v299 = vmax.f32 %v283, 0.0
      %v300 = vmax.f32 %v284, 0.0
      %v301 = vmax.f32 %v285, 0.0
      %v302 = vmax.f32 %v286, 0.0
      %v303 = vmax.f32 %v287, 0.0
      %v304 = vmax.f32 %v288, 0.0
      %v305 = vmax.f32 %v289, 0.0
      %v306 = vmax.f32 %v290, 0.0
      %v307 = vmax.f32 %v291, 0.0
      %v308 = vmax.f32 %v292, 0.0
      %309 = vst [vmem:[%s213] sm:$0xff] %v293
      %310 = vst [vmem:[%s213 + $0x8] sm:$0xff] %v294
      %311 = vst [vmem:[%s213 + $0x10] sm:$0xff] %v295
      %312 = vst [vmem:[%s213 + $0x18] sm:$0xff] %v296
      %313 = vst [vmem:[%s213 + $0x20] sm:$0xff] %v297
      %314 = vst [vmem:[%s213 + $0x28] sm:$0xff] %v298
      %315 = vst [vmem:[%s213 + $0x30] sm:$0xff] %v299
      %316 = vst [vmem:[%s213 + $0x38] sm:$0xff] %v300
      %317 = vst [vmem:[%s213 + $0x40] sm:$0xff] %v301
      %318 = vst [vmem:[%s213 + $0x48] sm:$0xff] %v302
      %319 = vst [vmem:[%s213 + $0x50] sm:$0xff] %v303
      %320 = vst [vmem:[%s213 + $0x58] sm:$0xff] %v304
      %321 = vst [vmem:[%s213 + $0x60] sm:$0xff] %v305
      %322 = vst [vmem:[%s213 + $0x68] sm:$0xff] %v306
      %323 = vst [vmem:[%s213 + $0x70] sm:$0xff] %v307
      %324 = vst [vmem:[%s213 + $0x78] sm:$0xff] %v308
      %s325 = smul.u32 8, %s19
      %p326 = scmp.lt.s32.totalorder %s18, 1
      %s327 = scalar_select %p326, %s18, 1
      %p328 = scmp.lt.s32.totalorder %s325, 15
      %s329 = scalar_select %p328, %s325, 15
      %s330 = smul.addr %s329, 2
      %s331 = smul.addr %s327, 32
      %s332 = sadd.s32 %s330, %s331
      %s333 = smul.addr %s332, 8
      %s334 = scalar_lea.vmem %s3, %s333
      // Predicated region
      $region33: #{conv_block_forward.5} parent=31 // pred_check
        %p335 = pneg %p116
      $region34: #{conv_block_forward.5} parent=31 // pred_check_branch
        %337 = sbr.rel (%p335) target = $region36
      $region35: #{conv_block_forward.5} parent=31 // pred_region
        %s338 = smul.u32 8, %s19
      $region36: #{conv_block_forward.5} parent=31 // pred_fallthru
        _
    $region32: #{conv_block_forward.5} parent=5 // pred_fallthru
      _
    %p339 = scmp.le.s32.totalorder 2, %s9
    // Predicated region
    $region37: #{conv_block_forward.5} parent=5 // pred_check
      %p340 = pneg %p339
    $region38: #{conv_block_forward.5} parent=5 // pred_check_branch
      %342 = sbr.rel (%p340) target = $region40
    $region39: #{conv_block_forward.5} parent=5 // pred_region
      %s343 = ssub.s32 %s9, 2
      // Predicated region
      $region41: #{conv_block_forward.5} parent=39 // pred_check
        %p344 = pneg %p122
      $region42: #{conv_block_forward.5} parent=39 // pred_check_branch
        %346 = sbr.rel (%p344) target = $region44
      $region43: #{conv_block_forward.5} parent=39 // pred_region
        %s347 = smul.u32 8, %s21
        %p348 = scmp.lt.s32.totalorder %s20, 1
        %s349 = scalar_select %p348, %s20, 1
        %p350 = scmp.lt.s32.totalorder %s347, 15
        %s351 = scalar_select %p350, %s347, 15
        %s352 = smul.addr %s351, 2
        %s353 = smul.addr %s349, 32
        %s354 = sadd.s32 %s352, %s353
        %s355 = smul.addr %s354, 8
        %s356 = scalar_lea.vmem %s3, %s355
      $region44: #{conv_block_forward.5} parent=39 // pred_fallthru
        _
    $region40: #{conv_block_forward.5} parent=5 // pred_fallthru
      _
  $region6: #{conv_block_forward.5} parent=0 // loop_footer
    %s13 = sadd.s32 1, %s9
  $region7: #{conv_block_forward.5} parent=0 // loop_footer_branch
    %8 = sbr.rel target = $region3
  $region8: #{conv_block_forward.5} parent=0 // loop_exit
    _

// kernel: conv_block_forward.4
$region0: #{conv_block_forward.4}
  #allocation0 [shape = 'u32[]', space=smem, size = 0x4, offset = 0x4, fixed_abs, tag = 'smem constant byte address 0x4 - core index']
  #allocation1 [shape = 'u32[144,128]{1,0:T(1,128)}', space=vmem, size = 0x12000, scoped, tag = 'internal scratch']
  %s0 = inlined_call_operand.vmem [shape: bf16[2,2,10,18,128], index: 0, kind: input, shape index: {}]
  %s1 = inlined_call_operand.vmem [shape: bf16[9,128,128], index: 1, kind: input, shape index: {}]
  %s2 = inlined_call_operand.vmem [shape: f32[1,128], index: 2, kind: input, shape index: {}]
  %s3 = inlined_call_operand.vmem [shape: f32[1,128], index: 3, kind: input, shape index: {}]
  %s4 = inlined_call_operand.vmem [shape: bf16[2,16,16,128], index: 4, kind: output, shape index: {0}]
  %s5 = inlined_call_operand.vmem [shape: f32[2,2,2,128], index: 5, kind: output, shape index: {1}]
  %6 = xla_tuple %s4, %s5
  %s7 = sld [smem:[#allocation0]]
  $region57: #{conv_block_forward.4} parent=0
    _
  %s9 = ssub.s32 1, %s7
  %s10 = scalar_select 0, %s9, %s7
  loop: start=0, step=1, limit=6
  $region2: #{conv_block_forward.4} parent=0 // loop_pre_header
    _
  $region3: #{conv_block_forward.4} parent=0 // loop_header
    %s12 = sphi 0, %s16
    %p13 = scmp.ge.s32.totalorder %s12, 6
    %s19 = sphi 0, %s31
    %s20 = sphi 0, %s27
    %s21 = sphi 0, %s19
    %s22 = sphi 0, %s20
    %s23 = sphi 0, %s21
    %s24 = sphi 0, %s22
    %s36 = sphi 0, %s38
    %s39 = sphi 0, %s36
    %s40 = sphi 0, %s39
    %s56 = sphi 0, %s40
    %s60 = sphi 0, %s60
    %s62 = sphi 0, %s60
    %s63 = sphi 0, %s62
    %s77 = sphi 0, %s63
    %s81 = sphi 0, %s81
    %s83 = sphi 0, %s81
    %s84 = sphi 0, %s83
    %s98 = sphi 0, %s84
    %s102 = sphi 0, %s102
    %s104 = sphi 0, %s102
    %s105 = sphi 0, %s104
    %s119 = sphi 0, %s105
    %s127 = sphi 0, %s129
    %s130 = sphi 0, %s127
    %s131 = sphi 0, %s130
    %s147 = sphi 0, %s131
    %s155 = sphi 0, %s157
    %s158 = sphi 0, %s155
    %s159 = sphi 0, %s158
    %s175 = sphi 0, %s159
  $region4: #{conv_block_forward.4} parent=0 // loop_header_branch
    %15 = sbr.rel (%p13) target = $region8
  $region5: #{conv_block_forward.4} parent=0 // loop_body
    %s17 = ssub.s32 %s12, 1
    %s18 = ssub.s32 %s12, 2
    %s25 = sadd.s32 1, %s20
    %p26 = scmp.ge.s32.totalorder %s25, 2
    %s27 = scalar_select %p26, 0, %s25
    %s28 = sadd.s32 1, %s19
    %s29 = scalar_select %p26, %s28, %s19
    %p30 = scmp.ge.s32.totalorder %s29, 2
    %s31 = scalar_select %p30, 0, %s29
    %s32 = ssub.s32 %s19, %s31
    %s33 = ssub.s32 %s20, %s27
    %s34 = sor.u32 %s32, %s33
    %p35 = scmp.eq.s32.totalorder %s34, 0
    %s37 = sadd.s32 %s36, 1
    %s38 = scalar_select %p35, %s36, %s37
    %p41 = pneg %p35
    %p42 = scmp.eq.s32.totalorder %s12, 3
    %p43 = por %p41, %p42
    %p44 = scmp.ne.s32.totalorder %s36, %s39
    %p45 = scmp.eq.s32.totalorder %s12, 0
    %p46 = por %p44, %p45
    %p47 = scmp.ne.s32.totalorder %s36, %s39
    %p48 = scmp.eq.s32.totalorder %s17, 3
    %p49 = por %p47, %p48
    %p50 = scmp.ne.s32.totalorder %s39, %s40
    %p51 = scmp.eq.s32.totalorder %s17, 0
    %p52 = por %p50, %p51
    %p53 = scmp.ne.s32.totalorder %s39, %s40
    %p54 = scmp.eq.s32.totalorder %s18, 3
    %p55 = por %p53, %p54
    %p57 = scmp.ne.s32.totalorder %s40, %s56
    %p58 = scmp.eq.s32.totalorder %s18, 0
    %p59 = por %p57, %p58
    %s61 = sadd.s32 %s60, 1
    %p64 = scmp.eq.s32.totalorder %s12, 3
    %p65 = scmp.ne.s32.totalorder %s60, %s62
    %p66 = scmp.eq.s32.totalorder %s12, 0
    %p67 = por %p65, %p66
    %p68 = scmp.ne.s32.totalorder %s60, %s62
    %p69 = scmp.eq.s32.totalorder %s17, 3
    %p70 = por %p68, %p69
    %p71 = scmp.ne.s32.totalorder %s62, %s63
    %p72 = scmp.eq.s32.totalorder %s17, 0
    %p73 = por %p71, %p72
    %p74 = scmp.ne.s32.totalorder %s62, %s63
    %p75 = scmp.eq.s32.totalorder %s18, 3
    %p76 = por %p74, %p75
    %p78 = scmp.ne.s32.totalorder %s63, %s77
    %p79 = scmp.eq.s32.totalorder %s18, 0
    %p80 = por %p78, %p79
    %s82 = sadd.s32 %s81, 1
    %p85 = scmp.eq.s32.totalorder %s12, 3
    %p86 = scmp.ne.s32.totalorder %s81, %s83
    %p87 = scmp.eq.s32.totalorder %s12, 0
    %p88 = por %p86, %p87
    %p89 = scmp.ne.s32.totalorder %s81, %s83
    %p90 = scmp.eq.s32.totalorder %s17, 3
    %p91 = por %p89, %p90
    %p92 = scmp.ne.s32.totalorder %s83, %s84
    %p93 = scmp.eq.s32.totalorder %s17, 0
    %p94 = por %p92, %p93
    %p95 = scmp.ne.s32.totalorder %s83, %s84
    %p96 = scmp.eq.s32.totalorder %s18, 3
    %p97 = por %p95, %p96
    %p99 = scmp.ne.s32.totalorder %s84, %s98
    %p100 = scmp.eq.s32.totalorder %s18, 0
    %p101 = por %p99, %p100
    %s103 = sadd.s32 %s102, 1
    %p106 = scmp.eq.s32.totalorder %s12, 3
    %p107 = scmp.ne.s32.totalorder %s102, %s104
    %p108 = scmp.eq.s32.totalorder %s12, 0
    %p109 = por %p107, %p108
    %p110 = scmp.ne.s32.totalorder %s102, %s104
    %p111 = scmp.eq.s32.totalorder %s17, 3
    %p112 = por %p110, %p111
    %p113 = scmp.ne.s32.totalorder %s104, %s105
    %p114 = scmp.eq.s32.totalorder %s17, 0
    %p115 = por %p113, %p114
    %p116 = scmp.ne.s32.totalorder %s104, %s105
    %p117 = scmp.eq.s32.totalorder %s18, 3
    %p118 = por %p116, %p117
    %p120 = scmp.ne.s32.totalorder %s105, %s119
    %p121 = scmp.eq.s32.totalorder %s18, 0
    %p122 = por %p120, %p121
    %s123 = ssub.s32 %s19, %s31
    %s124 = ssub.s32 %s20, %s27
    %s125 = sor.u32 %s123, %s124
    %p126 = scmp.eq.s32.totalorder %s125, 0
    %s128 = sadd.s32 %s127, 1
    %s129 = scalar_select %p126, %s127, %s128
    %p132 = pneg %p126
    %p133 = scmp.eq.s32.totalorder %s12, 3
    %p134 = por %p132, %p133
    %p135 = scmp.ne.s32.totalorder %s127, %s130
    %p136 = scmp.eq.s32.totalorder %s12, 0
    %p137 = por %p135, %p136
    %p138 = scmp.ne.s32.totalorder %s127, %s130
    %p139 = scmp.eq.s32.totalorder %s17, 3
    %p140 = por %p138, %p139
    %p141 = scmp.ne.s32.totalorder %s130, %s131
    %p142 = scmp.eq.s32.totalorder %s17, 0
    %p143 = por %p141, %p142
    %p144 = scmp.ne.s32.totalorder %s130, %s131
    %p145 = scmp.eq.s32.totalorder %s18, 3
    %p146 = por %p144, %p145
    %p148 = scmp.ne.s32.totalorder %s131, %s147
    %p149 = scmp.eq.s32.totalorder %s18, 0
    %p150 = por %p148, %p149
    %s151 = ssub.s32 %s19, %s31
    %s152 = ssub.s32 %s20, %s27
    %s153 = sor.u32 %s151, %s152
    %p154 = scmp.eq.s32.totalorder %s153, 0
    %s156 = sadd.s32 %s155, 1
    %s157 = scalar_select %p154, %s155, %s156
    %p160 = pneg %p154
    %p161 = scmp.eq.s32.totalorder %s12, 3
    %p162 = por %p160, %p161
    %p163 = scmp.ne.s32.totalorder %s155, %s158
    %p164 = scmp.eq.s32.totalorder %s12, 0
    %p165 = por %p163, %p164
    %p166 = scmp.ne.s32.totalorder %s155, %s158
    %p167 = scmp.eq.s32.totalorder %s17, 3
    %p168 = por %p166, %p167
    %p169 = scmp.ne.s32.totalorder %s158, %s159
    %p170 = scmp.eq.s32.totalorder %s17, 0
    %p171 = por %p169, %p170
    %p172 = scmp.ne.s32.totalorder %s158, %s159
    %p173 = scmp.eq.s32.totalorder %s18, 3
    %p174 = por %p172, %p173
    %p176 = scmp.ne.s32.totalorder %s159, %s175
    %p177 = scmp.eq.s32.totalorder %s18, 0
    %p178 = por %p176, %p177
    %p179 = scmp.le.s32.totalorder 1, %s12
    %p180 = scmp.lt.s32.totalorder %s12, 5
    %p181 = pnand %p179, %p180
    %p182 = pneg %p181
    // Predicated region
    $region9: #{conv_block_forward.4} parent=5 // pred_check
      _
    $region10: #{conv_block_forward.4} parent=5 // pred_check_branch
      %184 = sbr.rel (%p181) target = $region12
    $region11: #{conv_block_forward.4} parent=5 // pred_region
      %s185 = ssub.s32 %s12, 1
      // Predicated region
      $region13: #{conv_block_forward.4} parent=11 // pred_check
        %p186 = pneg %p73
      $region14: #{conv_block_forward.4} parent=11 // pred_check_branch
        %188 = sbr.rel (%p186) target = $region16
      $region15: #{conv_block_forward.4} parent=11 // pred_region
        _
      $region16: #{conv_block_forward.4} parent=11 // pred_fallthru
        _
      // Predicated region
      $region17: #{conv_block_forward.4} parent=11 // pred_check
        %p189 = pneg %p94
      $region18: #{conv_block_forward.4} parent=11 // pred_check_branch
        %191 = sbr.rel (%p189) target = $region20
      $region19: #{conv_block_forward.4} parent=11 // pred_region
        _
      $region20: #{conv_block_forward.4} parent=11 // pred_fallthru
        _
      // Predicated region
      $region21: #{conv_block_forward.4} parent=11 // pred_check
        %p192 = pneg %p115
      $region22: #{conv_block_forward.4} parent=11 // pred_check_branch
        %194 = sbr.rel (%p192) target = $region24
      $region23: #{conv_block_forward.4} parent=11 // pred_region
        _
      $region24: #{conv_block_forward.4} parent=11 // pred_fallthru
        _
    $region12: #{conv_block_forward.4} parent=5 // pred_fallthru
      _
    %p195 = scmp.lt.s32.totalorder %s12, 4
    // Predicated region
    $region25: #{conv_block_forward.4} parent=5 // pred_check
      %p196 = pneg %p195
    $region26: #{conv_block_forward.4} parent=5 // pred_check_branch
      %198 = sbr.rel (%p196) target = $region28
    $region27: #{conv_block_forward.4} parent=5 // pred_region
      // Predicated region
      $region29: #{conv_block_forward.4} parent=27 // pred_check
        %p199 = pneg %p46
      $region30: #{conv_block_forward.4} parent=27 // pred_check_branch
        %201 = sbr.rel (%p199) target = $region32
      $region31: #{conv_block_forward.4} parent=27 // pred_region
        %p202 = scmp.lt.s32.totalorder %s19, 1
        %s203 = scalar_select %p202, %s19, 1
        %p204 = scmp.lt.s32.totalorder %s20, 1
        %s205 = scalar_select %p204, %s20, 1
        %s206 = smul.addr %s205, 30
        %s207 = smul.addr %s203, 60
        %s208 = sadd.s32 %s206, %s207
        %s209 = smul.addr %s208, 4
        %s210 = scalar_lea.vmem %s0, %s209
      $region32: #{conv_block_forward.4} parent=27 // pred_fallthru
        _
    $region28: #{conv_block_forward.4} parent=5 // pred_fallthru
      _
    %p211 = scmp.le.s32.totalorder 1, %s12
    %p212 = scmp.lt.s32.totalorder %s12, 5
    %p213 = pnand %p211, %p212
    %p214 = pneg %p213
    // Predicated region
    $region33: #{conv_block_forward.4} parent=5 // pred_check
      _
    $region34: #{conv_block_forward.4} parent=5 // pred_check_branch
      %216 = sbr.rel (%p213) target = $region36
    $region35: #{conv_block_forward.4} parent=5 // pred_region
      %s217 = ssub.s32 %s12, 1
      %p218 = scmp.lt.s32.totalorder %s21, 1
      %s219 = scalar_select %p218, %s21, 1
      %p220 = scmp.lt.s32.totalorder %s22, 1
      %s221 = scalar_select %p220, %s22, 1
      %s222 = smul.addr %s221, 30
      %s223 = smul.addr %s219, 60
      %s224 = sadd.s32 %s222, %s223
      %s225 = smul.addr %s224, 4
      %s226 = scalar_lea.vmem %s0, %s225
      %p227 = pneg %p52
      %p228 = pneg %p49
      %p229 = pneg %p73
      %p230 = pneg %p70
      %p231 = pneg %p94
      %p232 = pneg %p91
      %p233 = pneg %p115
      %p234 = pneg %p112
      %p235 = pneg %p143
      %p236 = pneg %p140
      %s237 = smul.u32 8, %s22
      %p238 = scmp.lt.s32.totalorder %s21, 1
      %s239 = scalar_select %p238, %s21, 1
      %p240 = scmp.lt.s32.totalorder %s237, 15
      %s241 = scalar_select %p240, %s237, 15
      %s242 = smul.addr %s241, 2
      %s243 = smul.addr %s239, 32
      %s244 = sadd.s32 %s242, %s243
      %s245 = smul.addr %s244, 4
      %s246 = scalar_lea.vmem %s4, %s245
      %p247 = pneg %p171
      %p248 = pneg %p168
      %p249 = scmp.lt.s32.totalorder %s21, 1
      %s250 = scalar_select %p249, %s21, 1
      %p251 = scmp.lt.s32.totalorder %s22, 1
      %s252 = scalar_select %p251, %s22, 1
      %s253 = smul.addr %s250, 2
      %s254 = sadd.s32 %s252, %s253
      %s255 = smul.addr %s254, 2
      %s256 = scalar_lea.vmem %s5, %s255
      %p257 = scmp.lt.s32.totalorder %s21, 1
      %s258 = scalar_select %p257, %s21, 1
      %p259 = scmp.lt.s32.totalorder %s22, 1
      %s260 = scalar_select %p259, %s22, 1
      %s261 = smul.addr %s260, 30
      %s262 = smul.addr %s258, 60
      %s263 = sadd.s32 %s261, %s262
      %s264 = smul.addr %s263, 4
      %s265 = scalar_lea.vmem %s0, %s264
      %s266 = smul.u32 8, %s22
      %p267 = scmp.lt.s32.totalorder %s21, 1
      %s268 = scalar_select %p267, %s21, 1
      %p269 = scmp.lt.s32.totalorder %s266, 15
      %s270 = scalar_select %p269, %s266, 15
      %s271 = smul.addr %s270, 2
      %s272 = smul.addr %s268, 32
      %s273 = sadd.s32 %s271, %s272
      %s274 = smul.addr %s273, 4
      %s275 = scalar_lea.vmem %s4, %s274
      %s276 = smul.u32 8, %s22
      %p277 = scmp.lt.s32.totalorder %s21, 1
      %s278 = scalar_select %p277, %s21, 1
      %p279 = scmp.lt.s32.totalorder %s22, 1
      %s280 = scalar_select %p279, %s22, 1
      %s281 = smul.addr %s278, 2
      %s282 = sadd.s32 %s280, %s281
      %s283 = smul.addr %s282, 2
      %s284 = scalar_lea.vmem %s5, %s283
      %v286 = vld [vmem:[%s265] sm:$0xf]
      %v287 = vld [vmem:[%s265 + $0x4] sm:$0xf]
      %v288 = vld [vmem:[%s265 + $0x8] sm:$0x1]
      %v289 = vld [vmem:[%s265 + $0xc] sm:$0xf]
      %v290 = vld [vmem:[%s265 + $0x10] sm:$0xf]
      %v291 = vld [vmem:[%s265 + $0x14] sm:$0x1]
      %v292 = vld [vmem:[%s265 + $0x18] sm:$0xf]
      %v293 = vld [vmem:[%s265 + $0x1c] sm:$0xf]
      %v294 = vld [vmem:[%s265 + $0x20] sm:$0x1]
      %v295 = vld [vmem:[%s265 + $0x24] sm:$0xf]
      %v296 = vld [vmem:[%s265 + $0x28] sm:$0xf]
      %v297 = vld [vmem:[%s265 + $0x2c] sm:$0x1]
      %v298 = vld [vmem:[%s265 + $0x30] sm:$0xf]
      %v299 = vld [vmem:[%s265 + $0x34] sm:$0xf]
      %v300 = vld [vmem:[%s265 + $0x38] sm:$0x1]
      %v301 = vld [vmem:[%s265 + $0x3c] sm:$0xf]
      %v302 = vld [vmem:[%s265 + $0x40] sm:$0xf]
      %v303 = vld [vmem:[%s265 + $0x44] sm:$0x1]
      %v304 = vld [vmem:[%s265 + $0x48] sm:$0xf]
      %v305 = vld [vmem:[%s265 + $0x4c] sm:$0xf]
      %v306 = vld [vmem:[%s265 + $0x50] sm:$0x1]
      %v307 = vld [vmem:[%s265 + $0x54] sm:$0xf]
      %v308 = vld [vmem:[%s265 + $0x58] sm:$0xf]
      %v309 = vld [vmem:[%s265 + $0x5c] sm:$0x1]
      %v310 = vld [vmem:[%s265 + $0x60] sm:$0xf]
      %v311 = vld [vmem:[%s265 + $0x64] sm:$0xf]
      %v312 = vld [vmem:[%s265 + $0x68] sm:$0x1]
      %v313 = vld [vmem:[%s265 + $0x6c] sm:$0xf]
      %v314 = vld [vmem:[%s265 + $0x70] sm:$0xf]
      %v315 = vld [vmem:[%s265 + $0x74] sm:$0x1]
      %v316 = vunpack.c.l.bf16 %v286
      %v317 = vunpack.c.l.bf16 %v287
      %v318 = vunpack.c.l.bf16 %v288
      %v319 = vunpack.c.l.bf16 %v289
      %v320 = vunpack.c.l.bf16 %v290
      %v321 = vunpack.c.l.bf16 %v291
      %v322 = vunpack.c.l.bf16 %v292
      %v323 = vunpack.c.l.bf16 %v293
      %v324 = vunpack.c.l.bf16 %v294
      %v325 = vunpack.c.l.bf16 %v295
      %v326 = vunpack.c.l.bf16 %v296
      %v327 = vunpack.c.l.bf16 %v297
      %v328 = vunpack.c.l.bf16 %v298
      %v329 = vunpack.c.l.bf16 %v299
      %v330 = vunpack.c.l.bf16 %v300
      %v331 = vunpack.c.l.bf16 %v301
      %v332 = vunpack.c.l.bf16 %v302
      %v333 = vunpack.c.l.bf16 %v303
      %v334 = vunpack.c.l.bf16 %v304
      %v335 = vunpack.c.l.bf16 %v305
      %v336 = vunpack.c.l.bf16 %v306
      %v337 = vunpack.c.l.bf16 %v307
      %v338 = vunpack.c.l.bf16 %v308
      %v339 = vunpack.c.l.bf16 %v309
      %v340 = vunpack.c.l.bf16 %v310
      %v341 = vunpack.c.l.bf16 %v311
      %v342 = vunpack.c.l.bf16 %v312
      %v343 = vunpack.c.l.bf16 %v313
      %v344 = vunpack.c.l.bf16 %v314
      %v345 = vunpack.c.l.bf16 %v315
      %v346 = vld [vmem:[%s2] sm:$0x1]
      %v347 = vld [vmem:[%s3] sm:$0x1]
      %v349 = vlaneseq
      %v350 = vshrl.u32 %v349, 7
      %v351 = vsub.s32 0, %v350
      %v352 = vrot.slane %v346, %v351
      %v354 = vmul.f32 %v316, %v352
      %v355 = vmul.f32 %v317, %v352
      %v356 = vmul.f32 %v318, %v352
      %v357 = vmul.f32 %v319, %v352
      %v358 = vmul.f32 %v320, %v352
      %v359 = vmul.f32 %v321, %v352
      %v360 = vmul.f32 %v322, %v352
      %v361 = vmul.f32 %v323, %v352
      %v362 = vmul.f32 %v324, %v352
      %v363 = vmul.f32 %v325, %v352
      %v364 = vmul.f32 %v326, %v352
      %v365 = vmul.f32 %v327, %v352
      %v366 = vmul.f32 %v328, %v352
      %v367 = vmul.f32 %v329, %v352
      %v368 = vmul.f32 %v330, %v352
      %v369 = vmul.f32 %v331, %v352
      %v370 = vmul.f32 %v332, %v352
      %v371 = vmul.f32 %v333, %v352
      %v372 = vmul.f32 %v334, %v352
      %v373 = vmul.f32 %v335, %v352
      %v374 = vmul.f32 %v336, %v352
      %v375 = vmul.f32 %v337, %v352
      %v376 = vmul.f32 %v338, %v352
      %v377 = vmul.f32 %v339, %v352
      %v378 = vmul.f32 %v340, %v352
      %v379 = vmul.f32 %v341, %v352
      %v380 = vmul.f32 %v342, %v352
      %v381 = vmul.f32 %v343, %v352
      %v382 = vmul.f32 %v344, %v352
      %v383 = vmul.f32 %v345, %v352
      %v385 = vlaneseq
      %v386 = vshrl.u32 %v385, 7
      %v387 = vsub.s32 0, %v386
      %v388 = vrot.slane %v347, %v387
      %v390 = vadd.f32 %v354, %v388
      %v391 = vadd.f32 %v355, %v388
      %v392 = vadd.f32 %v356, %v388
      %v393 = vadd.f32 %v357, %v388
      %v394 = vadd.f32 %v358, %v388
      %v395 = vadd.f32 %v359, %v388
      %v396 = vadd.f32 %v360, %v388
      %v397 = vadd.f32 %v361, %v388
      %v398 = vadd.f32 %v362, %v388
      %v399 = vadd.f32 %v363, %v388
      %v400 = vadd.f32 %v364, %v388
      %v401 = vadd.f32 %v365, %v388
      %v402 = vadd.f32 %v366, %v388
      %v403 = vadd.f32 %v367, %v388
      %v404 = vadd.f32 %v368, %v388
      %v405 = vadd.f32 %v369, %v388
      %v406 = vadd.f32 %v370, %v388
      %v407 = vadd.f32 %v371, %v388
      %v408 = vadd.f32 %v372, %v388
      %v409 = vadd.f32 %v373, %v388
      %v410 = vadd.f32 %v374, %v388
      %v411 = vadd.f32 %v375, %v388
      %v412 = vadd.f32 %v376, %v388
      %v413 = vadd.f32 %v377, %v388
      %v414 = vadd.f32 %v378, %v388
      %v415 = vadd.f32 %v379, %v388
      %v416 = vadd.f32 %v380, %v388
      %v417 = vadd.f32 %v381, %v388
      %v418 = vadd.f32 %v382, %v388
      %v419 = vadd.f32 %v383, %v388
      %v420 = vmax.f32 %v390, 0.0
      %v421 = vmax.f32 %v391, 0.0
      %v422 = vmax.f32 %v392, 0.0
      %v423 = vmax.f32 %v393, 0.0
      %v424 = vmax.f32 %v394, 0.0
      %v425 = vmax.f32 %v395, 0.0
      %v426 = vmax.f32 %v396, 0.0
      %v427 = vmax.f32 %v397, 0.0
      %v428 = vmax.f32 %v398, 0.0
      %v429 = vmax.f32 %v399, 0.0
      %v430 = vmax.f32 %v400, 0.0
      %v431 = vmax.f32 %v401, 0.0
      %v432 = vmax.f32 %v402, 0.0
      %v433 = vmax.f32 %v403, 0.0
      %v434 = vmax.f32 %v404, 0.0
      %v435 = vmax.f32 %v405, 0.0
      %v436 = vmax.f32 %v406, 0.0
      %v437 = vmax.f32 %v407, 0.0
      %v438 = vmax.f32 %v408, 0.0
      %v439 = vmax.f32 %v409, 0.0
      %v440 = vmax.f32 %v410, 0.0
      %v441 = vmax.f32 %v411, 0.0
      %v442 = vmax.f32 %v412, 0.0
      %v443 = vmax.f32 %v413, 0.0
      %v444 = vmax.f32 %v414, 0.0
      %v445 = vmax.f32 %v415, 0.0
      %v446 = vmax.f32 %v416, 0.0
      %v447 = vmax.f32 %v417, 0.0
      %v448 = vmax.f32 %v418, 0.0
      %v449 = vmax.f32 %v419, 0.0
      %v450 = vlaneseq
      %v451 = vshrl.u32 %v450, 7
      %v452 = vadd.s32 %v451, 8
      %v453 = vadd.s32 %v451, 16
      %vm454 = vcmp.eq.s32.totalorder %v451, 0
      %vm455 = vcmp.eq.s32.totalorder %v452, 0
      %vm456 = vcmp.eq.s32.totalorder %v453, 0
      %vm457 = vcmp.eq.s32.totalorder %v451, 17
      %vm458 = vcmp.eq.s32.totalorder %v452, 17
      %vm459 = vcmp.eq.s32.totalorder %v453, 17
      %vm460 = vmor %vm454, %vm457
      %vm461 = vmor %vm455, %vm458
      %vm462 = vmor %vm456, %vm459
      %p463 = scmp.eq.s32.totalorder %s22, 0
      %s464 = scalar_select %p463, 1, 0
      %v465 = vstv %s464
      %vm466 = vcmp.eq.s32.totalorder %v465, 1
      %vm467 = vmor %vm460, %vm466
      %vm468 = vmor %vm461, %vm466
      %vm469 = vmor %vm462, %vm466
      %vm470 = vmor %vm460, 0
      %vm471 = vmor %vm461, 0
      %vm472 = vmor %vm462, 0
      %p473 = scmp.eq.s32.totalorder %s22, 1
      %s474 = scalar_select %p473, 1, 0
      %v475 = vstv %s474
      %vm476 = vcmp.eq.s32.totalorder %v475, 1
      %vm477 = vmor %vm467, 0
      %vm478 = vmor %vm468, 0
      %vm479 = vmor %vm469, 0
      %vm480 = vmor %vm470, 0
      %vm481 = vmor %vm471, 0
      %vm482 = vmor %vm472, 0
      %vm483 = vmor %vm470, %vm476
      %vm484 = vmor %vm471, %vm476
      %vm485 = vmor %vm472, %vm476
      %v486 = vsel %vm477, 0.0, %v420
      %v487 = vsel %vm478, 0.0, %v421
      %v488 = vsel %vm479, 0.0, %v422
      %v489 = vsel %vm480, 0.0, %v423
      %v490 = vsel %vm481, 0.0, %v424
      %v491 = vsel %vm482, 0.0, %v425
      %v492 = vsel %vm480, 0.0, %v426
      %v493 = vsel %vm481, 0.0, %v427
      %v494 = vsel %vm482, 0.0, %v428
      %v495 = vsel %vm480, 0.0, %v429
      %v496 = vsel %vm481, 0.0, %v430
      %v497 = vsel %vm482, 0.0, %v431
      %v498 = vsel %vm480, 0.0, %v432
      %v499 = vsel %vm481, 0.0, %v433
      %v500 = vsel %vm482, 0.0, %v434
      %v501 = vsel %vm480, 0.0, %v435
      %v502 = vsel %vm481, 0.0, %v436
      %v503 = vsel %vm482, 0.0, %v437
      %v504 = vsel %vm480, 0.0, %v438
      %v505 = vsel %vm481, 0.0, %v439
      %v506 = vsel %vm482, 0.0, %v440
      %v507 = vsel %vm480, 0.0, %v441
      %v508 = vsel %vm481, 0.0, %v442
      %v509 = vsel %vm482, 0.0, %v443
      %v510 = vsel %vm480, 0.0, %v444
      %v511 = vsel %vm481, 0.0, %v445
      %v512 = vsel %vm482, 0.0, %v446
      %v513 = vsel %vm483, 0.0, %v447
      %v514 = vsel %vm484, 0.0, %v448
      %v515 = vsel %vm485, 0.0, %v449
      %v516 = vpack.c.bf16 %v487, %v486
      %v517 = vpack.c.bf16 %v488, %v488
      %v518 = vpack.c.bf16 %v490, %v489
      %v519 = vpack.c.bf16 %v491, %v491
      %v520 = vpack.c.bf16 %v493, %v492
      %v521 = vpack.c.bf16 %v494, %v494
      %v522 = vpack.c.bf16 %v496, %v495
      %v523 = vpack.c.bf16 %v497, %v497
      %v524 = vpack.c.bf16 %v499, %v498
      %v525 = vpack.c.bf16 %v500, %v500
      %v526 = vpack.c.bf16 %v502, %v501
      %v527 = vpack.c.bf16 %v503, %v503
      %v528 = vpack.c.bf16 %v505, %v504
      %v529 = vpack.c.bf16 %v506, %v506
      %v530 = vpack.c.bf16 %v508, %v507
      %v531 = vpack.c.bf16 %v509, %v509
      %v532 = vpack.c.bf16 %v511, %v510
      %v533 = vpack.c.bf16 %v512, %v512
      %v534 = vpack.c.bf16 %v514, %v513
      %v535 = vpack.c.bf16 %v515, %v515
      %v536 = vld [vmem:[%s1] sm:$0xf]
      %v537 = vld [vmem:[%s1 + $0x4] sm:$0xf]
      %v538 = vld [vmem:[%s1 + $0x8] sm:$0xf]
      %v539 = vld [vmem:[%s1 + $0xc] sm:$0xf]
      %v540 = vld [vmem:[%s1 + $0x10] sm:$0xf]
      %v541 = vld [vmem:[%s1 + $0x14] sm:$0xf]
      %v542 = vld [vmem:[%s1 + $0x18] sm:$0xf]
      %v543 = vld [vmem:[%s1 + $0x1c] sm:$0xf]
      %v544 = vld [vmem:[%s1 + $0x20] sm:$0xf]
      %v545 = vld [vmem:[%s1 + $0x24] sm:$0xf]
      %v546 = vld [vmem:[%s1 + $0x28] sm:$0xf]
      %v547 = vld [vmem:[%s1 + $0x2c] sm:$0xf]
      %v548 = vld [vmem:[%s1 + $0x30] sm:$0xf]
      %v549 = vld [vmem:[%s1 + $0x34] sm:$0xf]
      %v550 = vld [vmem:[%s1 + $0x38] sm:$0xf]
      %v551 = vld [vmem:[%s1 + $0x3c] sm:$0xf]
      %vm552 = vsmask.f32 7424
      %v554 = vshrl.u32 %v516, 16
      %v556 = vshll.u32 %v516, 16
      %v558 = vrot.slane %v556, 1
      %v559 = vor.u32 %v554, %v558
      %v561 = vshll.u32 %v517, 16
      %v563 = vrot.slane %v561, 1
      %v564 = vsel %vm552, %v559, %v563
      %v566 = vshrl.u32 %v518, 16
      %v568 = vshll.u32 %v518, 16
      %v570 = vrot.slane %v568, 1
      %v571 = vor.u32 %v566, %v570
      %v573 = vshll.u32 %v519, 16
      %v575 = vrot.slane %v573, 1
      %v576 = vsel %vm552, %v571, %v575
      %v578 = vshrl.u32 %v520, 16
      %v580 = vshll.u32 %v520, 16
      %v582 = vrot.slane %v580, 1
      %v583 = vor.u32 %v578, %v582
      %v585 = vshll.u32 %v521, 16
      %v587 = vrot.slane %v585, 1
      %v588 = vsel %vm552, %v583, %v587
      %v590 = vshrl.u32 %v522, 16
      %v592 = vshll.u32 %v522, 16
      %v594 = vrot.slane %v592, 1
      %v595 = vor.u32 %v590, %v594
      %v597 = vshll.u32 %v523, 16
      %v599 = vrot.slane %v597, 1
      %v600 = vsel %vm552, %v595, %v599
      %v602 = vshrl.u32 %v524, 16
      %v604 = vshll.u32 %v524, 16
      %v606 = vrot.slane %v604, 1
      %v607 = vor.u32 %v602, %v606
      %v609 = vshll.u32 %v525, 16
      %v611 = vrot.slane %v609, 1
      %v612 = vsel %vm552, %v607, %v611
      %v614 = vshrl.u32 %v526, 16
      %v616 = vshll.u32 %v526, 16
      %v618 = vrot.slane %v616, 1
      %v619 = vor.u32 %v614, %v618
      %v621 = vshll.u32 %v527, 16
      %v623 = vrot.slane %v621, 1
      %v624 = vsel %vm552, %v619, %v623
      %v626 = vshrl.u32 %v528, 16
      %v628 = vshll.u32 %v528, 16
      %v630 = vrot.slane %v628, 1
      %v631 = vor.u32 %v626, %v630
      %v633 = vshll.u32 %v529, 16
      %v635 = vrot.slane %v633, 1
      %v636 = vsel %vm552, %v631, %v635
      %v638 = vshrl.u32 %v530, 16
      %v640 = vshll.u32 %v530, 16
      %v642 = vrot.slane %v640, 1
      %v643 = vor.u32 %v638, %v642
      %v645 = vshll.u32 %v531, 16
      %v647 = vrot.slane %v645, 1
      %v648 = vsel %vm552, %v643, %v647
      %s657 = scalar_lea.vmem %s1, 64
      %v658 = vld [vmem:[%s657] sm:$0xf]
      %v659 = vld [vmem:[%s657 + $0x4] sm:$0xf]
      %v660 = vld [vmem:[%s657 + $0x8] sm:$0xf]
      %v661 = vld [vmem:[%s657 + $0xc] sm:$0xf]
      %v662 = vld [vmem:[%s657 + $0x10] sm:$0xf]
      %v663 = vld [vmem:[%s657 + $0x14] sm:$0xf]
      %v664 = vld [vmem:[%s657 + $0x18] sm:$0xf]
      %v665 = vld [vmem:[%s657 + $0x1c] sm:$0xf]
      %v666 = vld [vmem:[%s657 + $0x20] sm:$0xf]
      %v667 = vld [vmem:[%s657 + $0x24] sm:$0xf]
      %v668 = vld [vmem:[%s657 + $0x28] sm:$0xf]
      %v669 = vld [vmem:[%s657 + $0x2c] sm:$0xf]
      %v670 = vld [vmem:[%s657 + $0x30] sm:$0xf]
      %v671 = vld [vmem:[%s657 + $0x34] sm:$0xf]
      %v672 = vld [vmem:[%s657 + $0x38] sm:$0xf]
      %v673 = vld [vmem:[%s657 + $0x3c] sm:$0xf]
      %v690 = vunpack.c.l.b16 %v658
      %v691 = vunpack.c.l.b16 %v659
      %v692 = vunpack.c.l.b16 %v660
      %v693 = vunpack.c.l.b16 %v661
      %v694 = vunpack.c.l.b16 %v662
      %v695 = vunpack.c.l.b16 %v663
      %v696 = vunpack.c.l.b16 %v664
      %v697 = vunpack.c.l.b16 %v665
      %v698 = vunpack.c.l.b16 %v666
      %v699 = vunpack.c.l.b16 %v667
      %v700 = vunpack.c.l.b16 %v668
      %v701 = vunpack.c.l.b16 %v669
      %v702 = vunpack.c.l.b16 %v670
      %v703 = vunpack.c.l.b16 %v671
      %v704 = vunpack.c.l.b16 %v672
      %v705 = vunpack.c.l.b16 %v673
      %v706 = vpack.c.b16 %v691, %v690
      %v707 = vpack.c.b16 %v693, %v692
      %v708 = vpack.c.b16 %v695, %v694
      %v709 = vpack.c.b16 %v697, %v696
      %v710 = vpack.c.b16 %v699, %v698
      %v711 = vpack.c.b16 %v701, %v700
      %v712 = vpack.c.b16 %v703, %v702
      %v713 = vpack.c.b16 %v705, %v704
      %722 = vmatprep.subr.bf16.mxu0 0
      %723 = vmatpush1.bf16.msra.mxu0 %v713
      %724 = vmatprep.subr.bf16.mxu0 0
      %725 = vmatpush1.bf16.msra.mxu0 %v712
      %726 = vmatprep.subr.bf16.mxu0 0
      %727 = vmatpush1.bf16.msra.mxu0 %v711
      %728 = vmatprep.subr.bf16.mxu0 0
      %729 = vmatpush1.bf16.msra.mxu0 %v710
      %730 = vmatprep.subr.bf16.mxu0 0
      %731 = vmatpush1.bf16.msra.mxu0 %v709
      %732 = vmatprep.subr.bf16.mxu0 0
      %733 = vmatpush1.bf16.msra.mxu0 %v708
      %734 = vmatprep.subr.bf16.mxu0 0
      %735 = vmatpush1.bf16.msra.mxu0 %v707
      %736 = vmatprep.subr.bf16.mxu0 0
      %737 = vmatpush1.bf16.msra.mxu0 %v706
      %738 = vmatprep.subr.bf16.mxu0 0
      %739 = vmatpush2.bf16.msra.mxu0 0
      %740 = vmatprep.subr.bf16.mxu0 0
      %741 = vmatpush2.bf16.msra.mxu0 0
      %742 = vmatprep.subr.bf16.mxu0 0
      %743 = vmatpush2.bf16.msra.mxu0 0
      %744 = vmatprep.subr.bf16.mxu0 0
      %745 = vmatpush2.bf16.msra.mxu0 0
      %746 = vmatprep.subr.bf16.mxu0 0
      %747 = vmatpush2.bf16.msra.mxu0 0
      %748 = vmatprep.subr.bf16.mxu0 0
      %749 = vmatpush2.bf16.msra.mxu0 0
      %750 = vmatprep.subr.bf16.mxu0 0
      %751 = vmatpush2.bf16.msra.mxu0 0
      %752 = vmatprep.subr.bf16.mxu0 0
      %753 = vmatpush2.bf16.msra.mxu0 0
      %754 = vmatprep.mubr.bf16.mxu0 0
      %755 = vmatmul.mubr.bf16.gmra.mxu0 %v564
      %v756 = vpop.f32.mrf.mxu0
      %v757 = vadd.f32 0.0, %v756
      %v758 = vpop.f32.mrf.mxu0
      %v759 = vpop.f32.mrf.mxu0
      %v760 = vadd.f32 0.0, %v759
      %v761 = vpop.f32.mrf.mxu0
      %762 = vmatprep.mubr.bf16.mxu0 0
      %763 = vmatmul.mubr.bf16.gmra.mxu0 %v576
      %v764 = vpop.f32.mrf.mxu0
      %v765 = vadd.f32 0.0, %v764
      %v766 = vpop.f32.mrf.mxu0
      %v767 = vpop.f32.mrf.mxu0
      %v768 = vadd.f32 0.0, %v767
      %v769 = vpop.f32.mrf.mxu0
      %770 = vmatprep.mubr.bf16.mxu0 0
      %771 = vmatmul.mubr.bf16.gmra.mxu0 %v588
      %v772 = vpop.f32.mrf.mxu0
      %v773 = vadd.f32 0.0, %v772
      %v774 = vpop.f32.mrf.mxu0
      %v775 = vpop.f32.mrf.mxu0
      %v776 = vadd.f32 0.0, %v775
      %v777 = vpop.f32.mrf.mxu0
      %778 = vmatprep.mubr.bf16.mxu0 0
      %779 = vmatmul.mubr.bf16.gmra.mxu0 %v600
      %v780 = vpop.f32.mrf.mxu0
      %v781 = vadd.f32 0.0, %v780
      %v782 = vpop.f32.mrf.mxu0
      %v783 = vpop.f32.mrf.mxu0
      %v784 = vadd.f32 0.0, %v783
      %v785 = vpop.f32.mrf.mxu0
      %786 = vmatprep.mubr.bf16.mxu0 0
      %787 = vmatmul.mubr.bf16.gmra.mxu0 %v612
      %v788 = vpop.f32.mrf.mxu0
      %v789 = vadd.f32 0.0, %v788
      %v790 = vpop.f32.mrf.mxu0
      %v791 = vpop.f32.mrf.mxu0
      %v792 = vadd.f32 0.0, %v791
      %v793 = vpop.f32.mrf.mxu0
      %794 = vmatprep.mubr.bf16.mxu0 0
      %795 = vmatmul.mubr.bf16.gmra.mxu0 %v624
      %v796 = vpop.f32.mrf.mxu0
      %v797 = vadd.f32 0.0, %v796
      %v798 = vpop.f32.mrf.mxu0
      %v799 = vpop.f32.mrf.mxu0
      %v800 = vadd.f32 0.0, %v799
      %v801 = vpop.f32.mrf.mxu0
      %802 = vmatprep.mubr.bf16.mxu0 0
      %803 = vmatmul.mubr.bf16.gmra.mxu0 %v636
      %v804 = vpop.f32.mrf.mxu0
      %v805 = vadd.f32 0.0, %v804
      %v806 = vpop.f32.mrf.mxu0
      %v807 = vpop.f32.mrf.mxu0
      %v808 = vadd.f32 0.0, %v807
      %v809 = vpop.f32.mrf.mxu0
      %810 = vmatprep.mubr.bf16.mxu0 0
      %811 = vmatmul.mubr.bf16.gmra.mxu0 %v648
      %v812 = vpop.f32.mrf.mxu0
      %v813 = vadd.f32 0.0, %v812
      %v814 = vpop.f32.mrf.mxu0
      %v815 = vpop.f32.mrf.mxu0
      %v816 = vadd.f32 0.0, %v815
      %v817 = vpop.f32.mrf.mxu0
      %818 = vdwg.mxu0
      %v835 = vunpack.c.l.b16 %v536
      %v836 = vunpack.c.l.b16 %v537
      %v837 = vunpack.c.l.b16 %v538
      %v838 = vunpack.c.l.b16 %v539
      %v839 = vunpack.c.l.b16 %v540
      %v840 = vunpack.c.l.b16 %v541
      %v841 = vunpack.c.l.b16 %v542
      %v842 = vunpack.c.l.b16 %v543
      %v843 = vunpack.c.l.b16 %v544
      %v844 = vunpack.c.l.b16 %v545
      %v845 = vunpack.c.l.b16 %v546
      %v846 = vunpack.c.l.b16 %v547
      %v847 = vunpack.c.l.b16 %v548
      %v848 = vunpack.c.l.b16 %v549
      %v849 = vunpack.c.l.b16 %v550
      %v850 = vunpack.c.l.b16 %v551
      %v851 = vpack.c.b16 %v836, %v835
      %v852 = vpack.c.b16 %v838, %v837
      %v853 = vpack.c.b16 %v840, %v839
      %v854 = vpack.c.b16 %v842, %v841
      %v855 = vpack.c.b16 %v844, %v843
      %v856 = vpack.c.b16 %v846, %v845
      %v857 = vpack.c.b16 %v848, %v847
      %v858 = vpack.c.b16 %v850, %v849
      %867 = vmatprep.subr.bf16.mxu0 0
      %868 = vmatpush1.bf16.msra.mxu0 %v858
      %869 = vmatprep.subr.bf16.mxu0 0
      %870 = vmatpush1.bf16.msra.mxu0 %v857
      %871 = vmatprep.subr.bf16.mxu0 0
      %872 = vmatpush1.bf16.msra.mxu0 %v856
      %873 = vmatprep.subr.bf16.mxu0 0
      %874 = vmatpush1.bf16.msra.mxu0 %v855
      %875 = vmatprep.subr.bf16.mxu0 0
      %876 = vmatpush1.bf16.msra.mxu0 %v854
      %877 = vmatprep.subr.bf16.mxu0 0
      %878 = vmatpush1.bf16.msra.mxu0 %v853
      %879 = vmatprep.subr.bf16.mxu0 0
      %880 = vmatpush1.bf16.msra.mxu0 %v852
      %881 = vmatprep.subr.bf16.mxu0 0
      %882 = vmatpush1.bf16.msra.mxu0 %v851
      %883 = vmatprep.subr.bf16.mxu0 0
      %884 = vmatpush2.bf16.msra.mxu0 0
      %885 = vmatprep.subr.bf16.mxu0 0
      %886 = vmatpush2.bf16.msra.mxu0 0
      %887 = vmatprep.subr.bf16.mxu0 0
      %888 = vmatpush2.bf16.msra.mxu0 0
      %889 = vmatprep.subr.bf16.mxu0 0
      %890 = vmatpush2.bf16.msra.mxu0 0
      %891 = vmatprep.subr.bf16.mxu0 0
      %892 = vmatpush2.bf16.msra.mxu0 0
      %893 = vmatprep.subr.bf16.mxu0 0
      %894 = vmatpush2.bf16.msra.mxu0 0
      %895 = vmatprep.subr.bf16.mxu0 0
      %896 = vmatpush2.bf16.msra.mxu0 0
      %897 = vmatprep.subr.bf16.mxu0 0
      %898 = vmatpush2.bf16.msra.mxu0 0
      %899 = vmatprep.mubr.bf16.mxu0 0
      %900 = vmatmul.mubr.bf16.gmra.mxu0 %v516
      %v901 = vpop.f32.mrf.mxu0
      %v902 = vadd.f32 %v757, %v901
      %v903 = vpop.f32.mrf.mxu0
      %v904 = vpop.f32.mrf.mxu0
      %v905 = vadd.f32 %v760, %v904
      %v906 = vpop.f32.mrf.mxu0
      %907 = vmatprep.mubr.bf16.mxu0 0
      %908 = vmatmul.mubr.bf16.gmra.mxu0 %v518
      %v909 = vpop.f32.mrf.mxu0
      %v910 = vadd.f32 %v765, %v909
      %v911 = vpop.f32.mrf.mxu0
      %v912 = vpop.f32.mrf.mxu0
      %v913 = vadd.f32 %v768, %v912
      %v914 = vpop.f32.mrf.mxu0
      %915 = vmatprep.mubr.bf16.mxu0 0
      %916 = vmatmul.mubr.bf16.gmra.mxu0 %v520
      %v917 = vpop.f32.mrf.mxu0
      %v918 = vadd.f32 %v773, %v917
      %v919 = vpop.f32.mrf.mxu0
      %v920 = vpop.f32.mrf.mxu0
      %v921 = vadd.f32 %v776, %v920
      %v922 = vpop.f32.mrf.mxu0
      %923 = vmatprep.mubr.bf16.mxu0 0
      %924 = vmatmul.mubr.bf16.gmra.mxu0 %v522
      %v925 = vpop.f32.mrf.mxu0
      %v926 = vadd.f32 %v781, %v925
      %v927 = vpop.f32.mrf.mxu0
      %v928 = vpop.f32.mrf.mxu0
      %v929 = vadd.f32 %v784, %v928
      %v930 = vpop.f32.mrf.mxu0
      %931 = vmatprep.mubr.bf16.mxu0 0
      %932 = vmatmul.mubr.bf16.gmra.mxu0 %v524
      %v933 = vpop.f32.mrf.mxu0
      %v934 = vadd.f32 %v789, %v933
      %v935 = vpop.f32.mrf.mxu0
      %v936 = vpop.f32.mrf.mxu0
      %v937 = vadd.f32 %v792, %v936
      %v938 = vpop.f32.mrf.mxu0
      %939 = vmatprep.mubr.bf16.mxu0 0
      %940 = vmatmul.mubr.bf16.gmra.mxu0 %v526
      %v941 = vpop.f32.mrf.mxu0
      %v942 = vadd.f32 %v797, %v941
      %v943 = vpop.f32.mrf.mxu0
      %v944 = vpop.f32.mrf.mxu0
      %v945 = vadd.f32 %v800, %v944
      %v946 = vpop.f32.mrf.mxu0
      %947 = vmatprep.mubr.bf16.mxu0 0
      %948 = vmatmul.mubr.bf16.gmra.mxu0 %v528
      %v949 = vpop.f32.mrf.mxu0
      %v950 = vadd.f32 %v805, %v949
      %v951 = vpop.f32.mrf.mxu0
      %v952 = vpop.f32.mrf.mxu0
      %v953 = vadd.f32 %v808, %v952
      %v954 = vpop.f32.mrf.mxu0
      %955 = vmatprep.mubr.bf16.mxu0 0
      %956 = vmatmul.mubr.bf16.gmra.mxu0 %v530
      %v957 = vpop.f32.mrf.mxu0
      %v958 = vadd.f32 %v813, %v957
      %v959 = vpop.f32.mrf.mxu0
      %v960 = vpop.f32.mrf.mxu0
      %v961 = vadd.f32 %v816, %v960
      %v962 = vpop.f32.mrf.mxu0
      %963 = vdwg.mxu0
      %vm980 = vcmask 1046528
      %v981 = vrot.slane %v516, 1
      %v982 = vrot.slane %v517, 1
      %v983 = vsel %vm980, %v981, %v982
      %v984 = vrot.slane %v518, 1
      %v985 = vrot.slane %v519, 1
      %v986 = vsel %vm980, %v984, %v985
      %v987 = vrot.slane %v520, 1
      %v988 = vrot.slane %v521, 1
      %v989 = vsel %vm980, %v987, %v988
      %v990 = vrot.slane %v522, 1
      %v991 = vrot.slane %v523, 1
      %v992 = vsel %vm980, %v990, %v991
      %v993 = vrot.slane %v524, 1
      %v994 = vrot.slane %v525, 1
      %v995 = vsel %vm980, %v993, %v994
      %v996 = vrot.slane %v526, 1
      %v997 = vrot.slane %v527, 1
      %v998 = vsel %vm980, %v996, %v997
      %v999 = vrot.slane %v528, 1
      %v1000 = vrot.slane %v529, 1
      %v1001 = vsel %vm980, %v999, %v1000
      %v1002 = vrot.slane %v530, 1
      %v1003 = vrot.slane %v531, 1
      %v1004 = vsel %vm980, %v1002, %v1003
      %s1013 = scalar_lea.vmem %s1, 128
      %v1014 = vld [vmem:[%s1013] sm:$0xf]
      %v1015 = vld [vmem:[%s1013 + $0x4] sm:$0xf]
      %v1016 = vld [vmem:[%s1013 + $0x8] sm:$0xf]
      %v1017 = vld [vmem:[%s1013 + $0xc] sm:$0xf]
      %v1018 = vld [vmem:[%s1013 + $0x10] sm:$0xf]
      %v1019 = vld [vmem:[%s1013 + $0x14] sm:$0xf]
      %v1020 = vld [vmem:[%s1013 + $0x18] sm:$0xf]
      %v1021 = vld [vmem:[%s1013 + $0x1c] sm:$0xf]
      %v1022 = vld [vmem:[%s1013 + $0x20] sm:$0xf]
      %v1023 = vld [vmem:[%s1013 + $0x24] sm:$0xf]
      %v1024 = vld [vmem:[%s1013 + $0x28] sm:$0xf]
      %v1025 = vld [vmem:[%s1013 + $0x2c] sm:$0xf]
      %v1026 = vld [vmem:[%s1013 + $0x30] sm:$0xf]
      %v1027 = vld [vmem:[%s1013 + $0x34] sm:$0xf]
      %v1028 = vld [vmem:[%s1013 + $0x38] sm:$0xf]
      %v1029 = vld [vmem:[%s1013 + $0x3c] sm:$0xf]
      %v1046 = vunpack.c.l.b16 %v1014
      %v1047 = vunpack.c.l.b16 %v1015
      %v1048 = vunpack.c.l.b16 %v1016
      %v1049 = vunpack.c.l.b16 %v1017
      %v1050 = vunpack.c.l.b16 %v1018
      %v1051 = vunpack.c.l.b16 %v1019
      %v1052 = vunpack.c.l.b16 %v1020
      %v1053 = vunpack.c.l.b16 %v1021
      %v1054 = vunpack.c.l.b16 %v1022
      %v1055 = vunpack.c.l.b16 %v1023
      %v1056 = vunpack.c.l.b16 %v1024
      %v1057 = vunpack.c.l.b16 %v1025
      %v1058 = vunpack.c.l.b16 %v1026
      %v1059 = vunpack.c.l.b16 %v1027
      %v1060 = vunpack.c.l.b16 %v1028
      %v1061 = vunpack.c.l.b16 %v1029
      %v1062 = vpack.c.b16 %v1047, %v1046
      %v1063 = vpack.c.b16 %v1049, %v1048
      %v1064 = vpack.c.b16 %v1051, %v1050
      %v1065 = vpack.c.b16 %v1053, %v1052
      %v1066 = vpack.c.b16 %v1055, %v1054
      %v1067 = vpack.c.b16 %v1057, %v1056
      %v1068 = vpack.c.b16 %v1059, %v1058
      %v1069 = vpack.c.b16 %v1061, %v1060
      %1078 = vmatprep.subr.bf16.mxu0 0
      %1079 = vmatpush1.bf16.msra.mxu0 %v1069
      %1080 = vmatprep.subr.bf16.mxu0 0
      %1081 = vmatpush1.bf16.msra.mxu0 %v1068
      %1082 = vmatprep.subr.bf16.mxu0 0
      %1083 = vmatpush1.bf16.msra.mxu0 %v1067
      %1084 = vmatprep.subr.bf16.mxu0 0
      %1085 = vmatpush1.bf16.msra.mxu0 %v1066
      %1086 = vmatprep.subr.bf16.mxu0 0
      %1087 = vmatpush1.bf16.msra.mxu0 %v1065
      %1088 = vmatprep.subr.bf16.mxu0 0
      %1089 = vmatpush1.bf16.msra.mxu0 %v1064
      %1090 = vmatprep.subr.bf16.mxu0 0
      %1091 = vmatpush1.bf16.msra.mxu0 %v1063
      %1092 = vmatprep.subr.bf16.mxu0 0
      %1093 = vmatpush1.bf16.msra.mxu0 %v1062
      %1094 = vmatprep.subr.bf16.mxu0 0
      %1095 = vmatpush2.bf16.msra.mxu0 0
      %1096 = vmatprep.subr.bf16.mxu0 0
      %1097 = vmatpush2.bf16.msra.mxu0 0
      %1098 = vmatprep.subr.bf16.mxu0 0
      %1099 = vmatpush2.bf16.msra.mxu0 0
      %1100 = vmatprep.subr.bf16.mxu0 0
      %1101 = vmatpush2.bf16.msra.mxu0 0
      %1102 = vmatprep.subr.bf16.mxu0 0
      %1103 = vmatpush2.bf16.msra.mxu0 0
      %1104 = vmatprep.subr.bf16.mxu0 0
      %1105 = vmatpush2.bf16.msra.mxu0 0
      %1106 = vmatprep.subr.bf16.mxu0 0
      %1107 = vmatpush2.bf16.msra.mxu0 0
      %1108 = vmatprep.subr.bf16.mxu0 0
      %1109 = vmatpush2.bf16.msra.mxu0 0
      %1110 = vmatprep.mubr.bf16.mxu0 0
      %1111 = vmatmul.mubr.bf16.gmra.mxu0 %v983
      %v1112 = vpop.f32.mrf.mxu0
      %v1113 = vadd.f32 0.0, %v1112
      %v1114 = vpop.f32.mrf.mxu0
      %v1115 = vpop.f32.mrf.mxu0
      %v1116 = vadd.f32 0.0, %v1115
      %v1117 = vpop.f32.mrf.mxu0
      %1118 = vmatprep.mubr.bf16.mxu0 0
      %1119 = vmatmul.mubr.bf16.gmra.mxu0 %v986
      %v1120 = vpop.f32.mrf.mxu0
      %v1121 = vadd.f32 0.0, %v1120
      %v1122 = vpop.f32.mrf.mxu0
      %v1123 = vpop.f32.mrf.mxu0
      %v1124 = vadd.f32 0.0, %v1123
      %v1125 = vpop.f32.mrf.mxu0
      %1126 = vmatprep.mubr.bf16.mxu0 0
      %1127 = vmatmul.mubr.bf16.gmra.mxu0 %v989
      %v1128 = vpop.f32.mrf.mxu0
      %v1129 = vadd.f32 0.0, %v1128
      %v1130 = vpop.f32.mrf.mxu0
      %v1131 = vpop.f32.mrf.mxu0
      %v1132 = vadd.f32 0.0, %v1131
      %v1133 = vpop.f32.mrf.mxu0
      %1134 = vmatprep.mubr.bf16.mxu0 0
      %1135 = vmatmul.mubr.bf16.gmra.mxu0 %v992
      %v1136 = vpop.f32.mrf.mxu0
      %v1137 = vadd.f32 0.0, %v1136
      %v1138 = vpop.f32.mrf.mxu0
      %v1139 = vpop.f32.mrf.mxu0
      %v1140 = vadd.f32 0.0, %v1139
      %v1141 = vpop.f32.mrf.mxu0
      %1142 = vmatprep.mubr.bf16.mxu0 0
      %1143 = vmatmul.mubr.bf16.gmra.mxu0 %v995
      %v1144 = vpop.f32.mrf.mxu0
      %v1145 = vadd.f32 0.0, %v1144
      %v1146 = vpop.f32.mrf.mxu0
      %v1147 = vpop.f32.mrf.mxu0
      %v1148 = vadd.f32 0.0, %v1147
      %v1149 = vpop.f32.mrf.mxu0
      %1150 = vmatprep.mubr.bf16.mxu0 0
      %1151 = vmatmul.mubr.bf16.gmra.mxu0 %v998
      %v1152 = vpop.f32.mrf.mxu0
      %v1153 = vadd.f32 0.0, %v1152
      %v1154 = vpop.f32.mrf.mxu0
      %v1155 = vpop.f32.mrf.mxu0
      %v1156 = vadd.f32 0.0, %v1155
      %v1157 = vpop.f32.mrf.mxu0
      %1158 = vmatprep.mubr.bf16.mxu0 0
      %1159 = vmatmul.mubr.bf16.gmra.mxu0 %v1001
      %v1160 = vpop.f32.mrf.mxu0
      %v1161 = vadd.f32 0.0, %v1160
      %v1162 = vpop.f32.mrf.mxu0
      %v1163 = vpop.f32.mrf.mxu0
      %v1164 = vadd.f32 0.0, %v1163
      %v1165 = vpop.f32.mrf.mxu0
      %1166 = vmatprep.mubr.bf16.mxu0 0
      %1167 = vmatmul.mubr.bf16.gmra.mxu0 %v1004
      %v1168 = vpop.f32.mrf.mxu0
      %v1169 = vadd.f32 0.0, %v1168
      %v1170 = vpop.f32.mrf.mxu0
      %v1171 = vpop.f32.mrf.mxu0
      %v1172 = vadd.f32 0.0, %v1171
      %v1173 = vpop.f32.mrf.mxu0
      %1174 = vdwg.mxu0
      %v1175 = vadd.f32 %v902, %v1113
      %v1176 = vadd.f32 %v905, %v1116
      %v1177 = vadd.f32 %v910, %v1121
      %v1178 = vadd.f32 %v913, %v1124
      %v1179 = vadd.f32 %v918, %v1129
      %v1180 = vadd.f32 %v921, %v1132
      %v1181 = vadd.f32 %v926, %v1137
      %v1182 = vadd.f32 %v929, %v1140
      %v1183 = vadd.f32 %v934, %v1145
      %v1184 = vadd.f32 %v937, %v1148
      %v1185 = vadd.f32 %v942, %v1153
      %v1186 = vadd.f32 %v945, %v1156
      %v1187 = vadd.f32 %v950, %v1161
      %v1188 = vadd.f32 %v953, %v1164
      %v1189 = vadd.f32 %v958, %v1169
      %v1190 = vadd.f32 %v961, %v1172
      %s1191 = scalar_lea.vmem %s1, 192
      %v1192 = vld [vmem:[%s1191] sm:$0xf]
      %v1193 = vld [vmem:[%s1191 + $0x4] sm:$0xf]
      %v1194 = vld [vmem:[%s1191 + $0x8] sm:$0xf]
      %v1195 = vld [vmem:[%s1191 + $0xc] sm:$0xf]
      %v1196 = vld [vmem:[%s1191 + $0x10] sm:$0xf]
      %v1197 = vld [vmem:[%s1191 + $0x14] sm:$0xf]
      %v1198 = vld [vmem:[%s1191 + $0x18] sm:$0xf]
      %v1199 = vld [vmem:[%s1191 + $0x1c] sm:$0xf]
      %v1200 = vld [vmem:[%s1191 + $0x20] sm:$0xf]
      %v1201 = vld [vmem:[%s1191 + $0x24] sm:$0xf]
      %v1202 = vld [vmem:[%s1191 + $0x28] sm:$0xf]
      %v1203 = vld [vmem:[%s1191 + $0x2c] sm:$0xf]
      %v1204 = vld [vmem:[%s1191 + $0x30] sm:$0xf]
      %v1205 = vld [vmem:[%s1191 + $0x34] sm:$0xf]
      %v1206 = vld [vmem:[%s1191 + $0x38] sm:$0xf]
      %v1207 = vld [vmem:[%s1191 + $0x3c] sm:$0xf]
      %v1224 = vunpack.c.l.b16 %v1192
      %v1225 = vunpack.c.l.b16 %v1193
      %v1226 = vunpack.c.l.b16 %v1194
      %v1227 = vunpack.c.l.b16 %v1195
      %v1228 = vunpack.c.l.b16 %v1196
      %v1229 = vunpack.c.l.b16 %v1197
      %v1230 = vunpack.c.l.b16 %v1198
      %v1231 = vunpack.c.l.b16 %v1199
      %v1232 = vunpack.c.l.b16 %v1200
      %v1233 = vunpack.c.l.b16 %v1201
      %v1234 = vunpack.c.l.b16 %v1202
      %v1235 = vunpack.c.l.b16 %v1203
      %v1236 = vunpack.c.l.b16 %v1204
      %v1237 = vunpack.c.l.b16 %v1205
      %v1238 = vunpack.c.l.b16 %v1206
      %v1239 = vunpack.c.l.b16 %v1207
      %v1240 = vpack.c.b16 %v1225, %v1224
      %v1241 = vpack.c.b16 %v1227, %v1226
      %v1242 = vpack.c.b16 %v1229, %v1228
      %v1243 = vpack.c.b16 %v1231, %v1230
      %v1244 = vpack.c.b16 %v1233, %v1232
      %v1245 = vpack.c.b16 %v1235, %v1234
      %v1246 = vpack.c.b16 %v1237, %v1236
      %v1247 = vpack.c.b16 %v1239, %v1238
      %1256 = vmatprep.subr.bf16.mxu0 0
      %1257 = vmatpush1.bf16.msra.mxu0 %v1247
      %1258 = vmatprep.subr.bf16.mxu0 0
      %1259 = vmatpush1.bf16.msra.mxu0 %v1246
      %1260 = vmatprep.subr.bf16.mxu0 0
      %1261 = vmatpush1.bf16.msra.mxu0 %v1245
      %1262 = vmatprep.subr.bf16.mxu0 0
      %1263 = vmatpush1.bf16.msra.mxu0 %v1244
      %1264 = vmatprep.subr.bf16.mxu0 0
      %1265 = vmatpush1.bf16.msra.mxu0 %v1243
      %1266 = vmatprep.subr.bf16.mxu0 0
      %1267 = vmatpush1.bf16.msra.mxu0 %v1242
      %1268 = vmatprep.subr.bf16.mxu0 0
      %1269 = vmatpush1.bf16.msra.mxu0 %v1241
      %1270 = vmatprep.subr.bf16.mxu0 0
      %1271 = vmatpush1.bf16.msra.mxu0 %v1240
      %1272 = vmatprep.subr.bf16.mxu0 0
      %1273 = vmatpush2.bf16.msra.mxu0 0
      %1274 = vmatprep.subr.bf16.mxu0 0
      %1275 = vmatpush2.bf16.msra.mxu0 0
      %1276 = vmatprep.subr.bf16.mxu0 0
      %1277 = vmatpush2.bf16.msra.mxu0 0
      %1278 = vmatprep.subr.bf16.mxu0 0
      %1279 = vmatpush2.bf16.msra.mxu0 0
      %1280 = vmatprep.subr.bf16.mxu0 0
      %1281 = vmatpush2.bf16.msra.mxu0 0
      %1282 = vmatprep.subr.bf16.mxu0 0
      %1283 = vmatpush2.bf16.msra.mxu0 0
      %1284 = vmatprep.subr.bf16.mxu0 0
      %1285 = vmatpush2.bf16.msra.mxu0 0
      %1286 = vmatprep.subr.bf16.mxu0 0
      %1287 = vmatpush2.bf16.msra.mxu0 0
      %1288 = vmatprep.mubr.bf16.mxu0 0
      %1289 = vmatmul.mubr.bf16.gmra.mxu0 %v518
      %v1290 = vpop.f32.mrf.mxu0
      %v1291 = vadd.f32 0.0, %v1290
      %v1292 = vpop.f32.mrf.mxu0
      %v1293 = vpop.f32.mrf.mxu0
      %v1294 = vadd.f32 0.0, %v1293
      %v1295 = vpop.f32.mrf.mxu0
      %1296 = vmatprep.mubr.bf16.mxu0 0
      %1297 = vmatmul.mubr.bf16.gmra.mxu0 %v520
      %v1298 = vpop.f32.mrf.mxu0
      %v1299 = vadd.f32 0.0, %v1298
      %v1300 = vpop.f32.mrf.mxu0
      %v1301 = vpop.f32.mrf.mxu0
      %v1302 = vadd.f32 0.0, %v1301
      %v1303 = vpop.f32.mrf.mxu0
      %1304 = vmatprep.mubr.bf16.mxu0 0
      %1305 = vmatmul.mubr.bf16.gmra.mxu0 %v522
      %v1306 = vpop.f32.mrf.mxu0
      %v1307 = vadd.f32 0.0, %v1306
      %v1308 = vpop.f32.mrf.mxu0
      %v1309 = vpop.f32.mrf.mxu0
      %v1310 = vadd.f32 0.0, %v1309
      %v1311 = vpop.f32.mrf.mxu0
      %1312 = vmatprep.mubr.bf16.mxu0 0
      %1313 = vmatmul.mubr.bf16.gmra.mxu0 %v524
      %v1314 = vpop.f32.mrf.mxu0
      %v1315 = vadd.f32 0.0, %v1314
      %v1316 = vpop.f32.mrf.mxu0
      %v1317 = vpop.f32.mrf.mxu0
      %v1318 = vadd.f32 0.0, %v1317
      %v1319 = vpop.f32.mrf.mxu0
      %1320 = vmatprep.mubr.bf16.mxu0 0
      %1321 = vmatmul.mubr.bf16.gmra.mxu0 %v526
      %v1322 = vpop.f32.mrf.mxu0
      %v1323 = vadd.f32 0.0, %v1322
      %v1324 = vpop.f32.mrf.mxu0
      %v1325 = vpop.f32.mrf.mxu0
      %v1326 = vadd.f32 0.0, %v1325
      %v1327 = vpop.f32.mrf.mxu0
      %1328 = vmatprep.mubr.bf16.mxu0 0
      %1329 = vmatmul.mubr.bf16.gmra.mxu0 %v528
      %v1330 = vpop.f32.mrf.mxu0
      %v1331 = vadd.f32 0.0, %v1330
      %v1332 = vpop.f32.mrf.mxu0
      %v1333 = vpop.f32.mrf.mxu0
      %v1334 = vadd.f32 0.0, %v1333
      %v1335 = vpop.f32.mrf.mxu0
      %1336 = vmatprep.mubr.bf16.mxu0 0
      %1337 = vmatmul.mubr.bf16.gmra.mxu0 %v530
      %v1338 = vpop.f32.mrf.mxu0
      %v1339 = vadd.f32 0.0, %v1338
      %v1340 = vpop.f32.mrf.mxu0
      %v1341 = vpop.f32.mrf.mxu0
      %v1342 = vadd.f32 0.0, %v1341
      %v1343 = vpop.f32.mrf.mxu0
      %1344 = vmatprep.mubr.bf16.mxu0 0
      %1345 = vmatmul.mubr.bf16.gmra.mxu0 %v532
      %v1346 = vpop.f32.mrf.mxu0
      %v1347 = vadd.f32 0.0, %v1346
      %v1348 = vpop.f32.mrf.mxu0
      %v1349 = vpop.f32.mrf.mxu0
      %v1350 = vadd.f32 0.0, %v1349
      %v1351 = vpop.f32.mrf.mxu0
      %1352 = vdwg.mxu0
      %v1353 = vadd.f32 %v1175, %v1291
      %v1354 = vadd.f32 %v1176, %v1294
      %v1355 = vadd.f32 %v1177, %v1299
      %v1356 = vadd.f32 %v1178, %v1302
      %v1357 = vadd.f32 %v1179, %v1307
      %v1358 = vadd.f32 %v1180, %v1310
      %v1359 = vadd.f32 %v1181, %v1315
      %v1360 = vadd.f32 %v1182, %v1318
      %v1361 = vadd.f32 %v1183, %v1323
      %v1362 = vadd.f32 %v1184, %v1326
      %v1363 = vadd.f32 %v1185, %v1331
      %v1364 = vadd.f32 %v1186, %v1334
      %v1365 = vadd.f32 %v1187, %v1339
      %v1366 = vadd.f32 %v1188, %v1342
      %v1367 = vadd.f32 %v1189, %v1347
      %v1368 = vadd.f32 %v1190, %v1350
      %v1370 = vshrl.u32 %v532, 16
      %v1372 = vshll.u32 %v532, 16
      %v1374 = vrot.slane %v1372, 1
      %v1375 = vor.u32 %v1370, %v1374
      %v1377 = vshll.u32 %v533, 16
      %v1379 = vrot.slane %v1377, 1
      %v1380 = vsel %vm552, %v1375, %v1379
      %s1382 = scalar_lea.vmem %s1, 256
      %v1383 = vld [vmem:[%s1382] sm:$0xf]
      %v1384 = vld [vmem:[%s1382 + $0x4] sm:$0xf]
      %v1385 = vld [vmem:[%s1382 + $0x8] sm:$0xf]
      %v1386 = vld [vmem:[%s1382 + $0xc] sm:$0xf]
      %v1387 = vld [vmem:[%s1382 + $0x10] sm:$0xf]
      %v1388 = vld [vmem:[%s1382 + $0x14] sm:$0xf]
      %v1389 = vld [vmem:[%s1382 + $0x18] sm:$0xf]
      %v1390 = vld [vmem:[%s1382 + $0x1c] sm:$0xf]
      %v1391 = vld [vmem:[%s1382 + $0x20] sm:$0xf]
      %v1392 = vld [vmem:[%s1382 + $0x24] sm:$0xf]
      %v1393 = vld [vmem:[%s1382 + $0x28] sm:$0xf]
      %v1394 = vld [vmem:[%s1382 + $0x2c] sm:$0xf]
      %v1395 = vld [vmem:[%s1382 + $0x30] sm:$0xf]
      %v1396 = vld [vmem:[%s1382 + $0x34] sm:$0xf]
      %v1397 = vld [vmem:[%s1382 + $0x38] sm:$0xf]
      %v1398 = vld [vmem:[%s1382 + $0x3c] sm:$0xf]
      %v1415 = vunpack.c.l.b16 %v1383
      %v1416 = vunpack.c.l.b16 %v1384
      %v1417 = vunpack.c.l.b16 %v1385
      %v1418 = vunpack.c.l.b16 %v1386
      %v1419 = vunpack.c.l.b16 %v1387
      %v1420 = vunpack.c.l.b16 %v1388
      %v1421 = vunpack.c.l.b16 %v1389
      %v1422 = vunpack.c.l.b16 %v1390
      %v1423 = vunpack.c.l.b16 %v1391
      %v1424 = vunpack.c.l.b16 %v1392
      %v1425 = vunpack.c.l.b16 %v1393
      %v1426 = vunpack.c.l.b16 %v1394
      %v1427 = vunpack.c.l.b16 %v1395
      %v1428 = vunpack.c.l.b16 %v1396
      %v1429 = vunpack.c.l.b16 %v1397
      %v1430 = vunpack.c.l.b16 %v1398
      %v1431 = vpack.c.b16 %v1416, %v1415
      %v1432 = vpack.c.b16 %v1418, %v1417
      %v1433 = vpack.c.b16 %v1420, %v1419
      %v1434 = vpack.c.b16 %v1422, %v1421
      %v1435 = vpack.c.b16 %v1424, %v1423
      %v1436 = vpack.c.b16 %v1426, %v1425
      %v1437 = vpack.c.b16 %v1428, %v1427
      %v1438 = vpack.c.b16 %v1430, %v1429
      %1447 = vmatprep.subr.bf16.mxu0 0
      %1448 = vmatpush1.bf16.msra.mxu0 %v1438
      %1449 = vmatprep.subr.bf16.mxu0 0
      %1450 = vmatpush1.bf16.msra.mxu0 %v1437
      %1451 = vmatprep.subr.bf16.mxu0 0
      %1452 = vmatpush1.bf16.msra.mxu0 %v1436
      %1453 = vmatprep.subr.bf16.mxu0 0
      %1454 = vmatpush1.bf16.msra.mxu0 %v1435
      %1455 = vmatprep.subr.bf16.mxu0 0
      %1456 = vmatpush1.bf16.msra.mxu0 %v1434
      %1457 = vmatprep.subr.bf16.mxu0 0
      %1458 = vmatpush1.bf16.msra.mxu0 %v1433
      %1459 = vmatprep.subr.bf16.mxu0 0
      %1460 = vmatpush1.bf16.msra.mxu0 %v1432
      %1461 = vmatprep.subr.bf16.mxu0 0
      %1462 = vmatpush1.bf16.msra.mxu0 %v1431
      %1463 = vmatprep.subr.bf16.mxu0 0
      %1464 = vmatpush2.bf16.msra.mxu0 0
      %1465 = vmatprep.subr.bf16.mxu0 0
      %1466 = vmatpush2.bf16.msra.mxu0 0
      %1467 = vmatprep.subr.bf16.mxu0 0
      %1468 = vmatpush2.bf16.msra.mxu0 0
      %1469 = vmatprep.subr.bf16.mxu0 0
      %1470 = vmatpush2.bf16.msra.mxu0 0
      %1471 = vmatprep.subr.bf16.mxu0 0
      %1472 = vmatpush2.bf16.msra.mxu0 0
      %1473 = vmatprep.subr.bf16.mxu0 0
      %1474 = vmatpush2.bf16.msra.mxu0 0
      %1475 = vmatprep.subr.bf16.mxu0 0
      %1476 = vmatpush2.bf16.msra.mxu0 0
      %1477 = vmatprep.subr.bf16.mxu0 0
      %1478 = vmatpush2.bf16.msra.mxu0 0
      %1479 = vmatprep.mubr.bf16.mxu0 0
      %1480 = vmatmul.mubr.bf16.gmra.mxu0 %v576
      %v1481 = vpop.f32.mrf.mxu0
      %v1482 = vadd.f32 0.0, %v1481
      %v1483 = vpop.f32.mrf.mxu0
      %v1484 = vpop.f32.mrf.mxu0
      %v1485 = vadd.f32 0.0, %v1484
      %v1486 = vpop.f32.mrf.mxu0
      %1487 = vmatprep.mubr.bf16.mxu0 0
      %1488 = vmatmul.mubr.bf16.gmra.mxu0 %v588
      %v1489 = vpop.f32.mrf.mxu0
      %v1490 = vadd.f32 0.0, %v1489
      %v1491 = vpop.f32.mrf.mxu0
      %v1492 = vpop.f32.mrf.mxu0
      %v1493 = vadd.f32 0.0, %v1492
      %v1494 = vpop.f32.mrf.mxu0
      %1495 = vmatprep.mubr.bf16.mxu0 0
      %1496 = vmatmul.mubr.bf16.gmra.mxu0 %v600
      %v1497 = vpop.f32.mrf.mxu0
      %v1498 = vadd.f32 0.0, %v1497
      %v1499 = vpop.f32.mrf.mxu0
      %v1500 = vpop.f32.mrf.mxu0
      %v1501 = vadd.f32 0.0, %v1500
      %v1502 = vpop.f32.mrf.mxu0
      %1503 = vmatprep.mubr.bf16.mxu0 0
      %1504 = vmatmul.mubr.bf16.gmra.mxu0 %v612
      %v1505 = vpop.f32.mrf.mxu0
      %v1506 = vadd.f32 0.0, %v1505
      %v1507 = vpop.f32.mrf.mxu0
      %v1508 = vpop.f32.mrf.mxu0
      %v1509 = vadd.f32 0.0, %v1508
      %v1510 = vpop.f32.mrf.mxu0
      %1511 = vmatprep.mubr.bf16.mxu0 0
      %1512 = vmatmul.mubr.bf16.gmra.mxu0 %v624
      %v1513 = vpop.f32.mrf.mxu0
      %v1514 = vadd.f32 0.0, %v1513
      %v1515 = vpop.f32.mrf.mxu0
      %v1516 = vpop.f32.mrf.mxu0
      %v1517 = vadd.f32 0.0, %v1516
      %v1518 = vpop.f32.mrf.mxu0
      %1519 = vmatprep.mubr.bf16.mxu0 0
      %1520 = vmatmul.mubr.bf16.gmra.mxu0 %v636
      %v1521 = vpop.f32.mrf.mxu0
      %v1522 = vadd.f32 0.0, %v1521
      %v1523 = vpop.f32.mrf.mxu0
      %v1524 = vpop.f32.mrf.mxu0
      %v1525 = vadd.f32 0.0, %v1524
      %v1526 = vpop.f32.mrf.mxu0
      %1527 = vmatprep.mubr.bf16.mxu0 0
      %1528 = vmatmul.mubr.bf16.gmra.mxu0 %v648
      %v1529 = vpop.f32.mrf.mxu0
      %v1530 = vadd.f32 0.0, %v1529
      %v1531 = vpop.f32.mrf.mxu0
      %v1532 = vpop.f32.mrf.mxu0
      %v1533 = vadd.f32 0.0, %v1532
      %v1534 = vpop.f32.mrf.mxu0
      %1535 = vmatprep.mubr.bf16.mxu0 0
      %1536 = vmatmul.mubr.bf16.gmra.mxu0 %v1380
      %v1537 = vpop.f32.mrf.mxu0
      %v1538 = vadd.f32 0.0, %v1537
      %v1539 = vpop.f32.mrf.mxu0
      %v1540 = vpop.f32.mrf.mxu0
      %v1541 = vadd.f32 0.0, %v1540
      %v1542 = vpop.f32.mrf.mxu0
      %1543 = vdwg.mxu0
      %v1544 = vadd.f32 %v1353, %v1482
      %v1545 = vadd.f32 %v1354, %v1485
      %v1546 = vadd.f32 %v1355, %v1490
      %v1547 = vadd.f32 %v1356, %v1493
      %v1548 = vadd.f32 %v1357, %v1498
      %v1549 = vadd.f32 %v1358, %v1501
      %v1550 = vadd.f32 %v1359, %v1506
      %v1551 = vadd.f32 %v1360, %v1509
      %v1552 = vadd.f32 %v1361, %v1514
      %v1553 = vadd.f32 %v1362, %v1517
      %v1554 = vadd.f32 %v1363, %v1522
      %v1555 = vadd.f32 %v1364, %v1525
      %v1556 = vadd.f32 %v1365, %v1530
      %v1557 = vadd.f32 %v1366, %v1533
      %v1558 = vadd.f32 %v1367, %v1538
      %v1559 = vadd.f32 %v1368, %v1541
      %v1562 = vrot.slane %v532, 1
      %v1563 = vrot.slane %v533, 1
      %v1564 = vsel %vm980, %v1562, %v1563
      %s1566 = scalar_lea.vmem %s1, 320
      %v1567 = vld [vmem:[%s1566] sm:$0xf]
      %v1568 = vld [vmem:[%s1566 + $0x4] sm:$0xf]
      %v1569 = vld [vmem:[%s1566 + $0x8] sm:$0xf]
      %v1570 = vld [vmem:[%s1566 + $0xc] sm:$0xf]
      %v1571 = vld [vmem:[%s1566 + $0x10] sm:$0xf]
      %v1572 = vld [vmem:[%s1566 + $0x14] sm:$0xf]
      %v1573 = vld [vmem:[%s1566 + $0x18] sm:$0xf]
      %v1574 = vld [vmem:[%s1566 + $0x1c] sm:$0xf]
      %v1575 = vld [vmem:[%s1566 + $0x20] sm:$0xf]
      %v1576 = vld [vmem:[%s1566 + $0x24] sm:$0xf]
      %v1577 = vld [vmem:[%s1566 + $0x28] sm:$0xf]
      %v1578 = vld [vmem:[%s1566 + $0x2c] sm:$0xf]
      %v1579 = vld [vmem:[%s1566 + $0x30] sm:$0xf]
      %v1580 = vld [vmem:[%s1566 + $0x34] sm:$0xf]
      %v1581 = vld [vmem:[%s1566 + $0x38] sm:$0xf]
      %v1582 = vld [vmem:[%s1566 + $0x3c] sm:$0xf]
      %v1599 = vunpack.c.l.b16 %v1567
      %v1600 = vunpack.c.l.b16 %v1568
      %v1601 = vunpack.c.l.b16 %v1569
      %v1602 = vunpack.c.l.b16 %v1570
      %v1603 = vunpack.c.l.b16 %v1571
      %v1604 = vunpack.c.l.b16 %v1572
      %v1605 = vunpack.c.l.b16 %v1573
      %v1606 = vunpack.c.l.b16 %v1574
      %v1607 = vunpack.c.l.b16 %v1575
      %v1608 = vunpack.c.l.b16 %v1576
      %v1609 = vunpack.c.l.b16 %v1577
      %v1610 = vunpack.c.l.b16 %v1578
      %v1611 = vunpack.c.l.b16 %v1579
      %v1612 = vunpack.c.l.b16 %v1580
      %v1613 = vunpack.c.l.b16 %v1581
      %v1614 = vunpack.c.l.b16 %v1582
      %v1615 = vpack.c.b16 %v1600, %v1599
      %v1616 = vpack.c.b16 %v1602, %v1601
      %v1617 = vpack.c.b16 %v1604, %v1603
      %v1618 = vpack.c.b16 %v1606, %v1605
      %v1619 = vpack.c.b16 %v1608, %v1607
      %v1620 = vpack.c.b16 %v1610, %v1609
      %v1621 = vpack.c.b16 %v1612, %v1611
      %v1622 = vpack.c.b16 %v1614, %v1613
      %1631 = vmatprep.subr.bf16.mxu0 0
      %1632 = vmatpush1.bf16.msra.mxu0 %v1622
      %1633 = vmatprep.subr.bf16.mxu0 0
      %1634 = vmatpush1.bf16.msra.mxu0 %v1621
      %1635 = vmatprep.subr.bf16.mxu0 0
      %1636 = vmatpush1.bf16.msra.mxu0 %v1620
      %1637 = vmatprep.subr.bf16.mxu0 0
      %1638 = vmatpush1.bf16.msra.mxu0 %v1619
      %1639 = vmatprep.subr.bf16.mxu0 0
      %1640 = vmatpush1.bf16.msra.mxu0 %v1618
      %1641 = vmatprep.subr.bf16.mxu0 0
      %1642 = vmatpush1.bf16.msra.mxu0 %v1617
      %1643 = vmatprep.subr.bf16.mxu0 0
      %1644 = vmatpush1.bf16.msra.mxu0 %v1616
      %1645 = vmatprep.subr.bf16.mxu0 0
      %1646 = vmatpush1.bf16.msra.mxu0 %v1615
      %1647 = vmatprep.subr.bf16.mxu0 0
      %1648 = vmatpush2.bf16.msra.mxu0 0
      %1649 = vmatprep.subr.bf16.mxu0 0
      %1650 = vmatpush2.bf16.msra.mxu0 0
      %1651 = vmatprep.subr.bf16.mxu0 0
      %1652 = vmatpush2.bf16.msra.mxu0 0
      %1653 = vmatprep.subr.bf16.mxu0 0
      %1654 = vmatpush2.bf16.msra.mxu0 0
      %1655 = vmatprep.subr.bf16.mxu0 0
      %1656 = vmatpush2.bf16.msra.mxu0 0
      %1657 = vmatprep.subr.bf16.mxu0 0
      %1658 = vmatpush2.bf16.msra.mxu0 0
      %1659 = vmatprep.subr.bf16.mxu0 0
      %1660 = vmatpush2.bf16.msra.mxu0 0
      %1661 = vmatprep.subr.bf16.mxu0 0
      %1662 = vmatpush2.bf16.msra.mxu0 0
      %1663 = vmatprep.mubr.bf16.mxu0 0
      %1664 = vmatmul.mubr.bf16.gmra.mxu0 %v986
      %v1665 = vpop.f32.mrf.mxu0
      %v1666 = vadd.f32 0.0, %v1665
      %v1667 = vpop.f32.mrf.mxu0
      %v1668 = vpop.f32.mrf.mxu0
      %v1669 = vadd.f32 0.0, %v1668
      %v1670 = vpop.f32.mrf.mxu0
      %1671 = vmatprep.mubr.bf16.mxu0 0
      %1672 = vmatmul.mubr.bf16.gmra.mxu0 %v989
      %v1673 = vpop.f32.mrf.mxu0
      %v1674 = vadd.f32 0.0, %v1673
      %v1675 = vpop.f32.mrf.mxu0
      %v1676 = vpop.f32.mrf.mxu0
      %v1677 = vadd.f32 0.0, %v1676
      %v1678 = vpop.f32.mrf.mxu0
      %1679 = vmatprep.mubr.bf16.mxu0 0
      %1680 = vmatmul.mubr.bf16.gmra.mxu0 %v992
      %v1681 = vpop.f32.mrf.mxu0
      %v1682 = vadd.f32 0.0, %v1681
      %v1683 = vpop.f32.mrf.mxu0
      %v1684 = vpop.f32.mrf.mxu0
      %v1685 = vadd.f32 0.0, %v1684
      %v1686 = vpop.f32.mrf.mxu0
      %1687 = vmatprep.mubr.bf16.mxu0 0
      %1688 = vmatmul.mubr.bf16.gmra.mxu0 %v995
      %v1689 = vpop.f32.mrf.mxu0
      %v1690 = vadd.f32 0.0, %v1689
      %v1691 = vpop.f32.mrf.mxu0
      %v1692 = vpop.f32.mrf.mxu0
      %v1693 = vadd.f32 0.0, %v1692
      %v1694 = vpop.f32.mrf.mxu0
      %1695 = vmatprep.mubr.bf16.mxu0 0
      %1696 = vmatmul.mubr.bf16.gmra.mxu0 %v998
      %v1697 = vpop.f32.mrf.mxu0
      %v1698 = vadd.f32 0.0, %v1697
      %v1699 = vpop.f32.mrf.mxu0
      %v1700 = vpop.f32.mrf.mxu0
      %v1701 = vadd.f32 0.0, %v1700
      %v1702 = vpop.f32.mrf.mxu0
      %1703 = vmatprep.mubr.bf16.mxu0 0
      %1704 = vmatmul.mubr.bf16.gmra.mxu0 %v1001
      %v1705 = vpop.f32.mrf.mxu0
      %v1706 = vadd.f32 0.0, %v1705
      %v1707 = vpop.f32.mrf.mxu0
      %v1708 = vpop.f32.mrf.mxu0
      %v1709 = vadd.f32 0.0, %v1708
      %v1710 = vpop.f32.mrf.mxu0
      %1711 = vmatprep.mubr.bf16.mxu0 0
      %1712 = vmatmul.mubr.bf16.gmra.mxu0 %v1004
      %v1713 = vpop.f32.mrf.mxu0
      %v1714 = vadd.f32 0.0, %v1713
      %v1715 = vpop.f32.mrf.mxu0
      %v1716 = vpop.f32.mrf.mxu0
      %v1717 = vadd.f32 0.0, %v1716
      %v1718 = vpop.f32.mrf.mxu0
      %1719 = vmatprep.mubr.bf16.mxu0 0
      %1720 = vmatmul.mubr.bf16.gmra.mxu0 %v1564
      %v1721 = vpop.f32.mrf.mxu0
      %v1722 = vadd.f32 0.0, %v1721
      %v1723 = vpop.f32.mrf.mxu0
      %v1724 = vpop.f32.mrf.mxu0
      %v1725 = vadd.f32 0.0, %v1724
      %v1726 = vpop.f32.mrf.mxu0
      %1727 = vdwg.mxu0
      %v1728 = vadd.f32 %v1544, %v1666
      %v1729 = vadd.f32 %v1545, %v1669
      %v1730 = vadd.f32 %v1546, %v1674
      %v1731 = vadd.f32 %v1547, %v1677
      %v1732 = vadd.f32 %v1548, %v1682
      %v1733 = vadd.f32 %v1549, %v1685
      %v1734 = vadd.f32 %v1550, %v1690
      %v1735 = vadd.f32 %v1551, %v1693
      %v1736 = vadd.f32 %v1552, %v1698
      %v1737 = vadd.f32 %v1553, %v1701
      %v1738 = vadd.f32 %v1554, %v1706
      %v1739 = vadd.f32 %v1555, %v1709
      %v1740 = vadd.f32 %v1556, %v1714
      %v1741 = vadd.f32 %v1557, %v1717
      %v1742 = vadd.f32 %v1558, %v1722
      %v1743 = vadd.f32 %v1559, %v1725
      %s1744 = scalar_lea.vmem %s1, 384
      %v1745 = vld [vmem:[%s1744] sm:$0xf]
      %v1746 = vld [vmem:[%s1744 + $0x4] sm:$0xf]
      %v1747 = vld [vmem:[%s1744 + $0x8] sm:$0xf]
      %v1748 = vld [vmem:[%s1744 + $0xc] sm:$0xf]
      %v1749 = vld [vmem:[%s1744 + $0x10] sm:$0xf]
      %v1750 = vld [vmem:[%s1744 + $0x14] sm:$0xf]
      %v1751 = vld [vmem:[%s1744 + $0x18] sm:$0xf]
      %v1752 = vld [vmem:[%s1744 + $0x1c] sm:$0xf]
      %v1753 = vld [vmem:[%s1744 + $0x20] sm:$0xf]
      %v1754 = vld [vmem:[%s1744 + $0x24] sm:$0xf]
      %v1755 = vld [vmem:[%s1744 + $0x28] sm:$0xf]
      %v1756 = vld [vmem:[%s1744 + $0x2c] sm:$0xf]
      %v1757 = vld [vmem:[%s1744 + $0x30] sm:$0xf]
      %v1758 = vld [vmem:[%s1744 + $0x34] sm:$0xf]
      %v1759 = vld [vmem:[%s1744 + $0x38] sm:$0xf]
      %v1760 = vld [vmem:[%s1744 + $0x3c] sm:$0xf]
      %v1777 = vunpack.c.l.b16 %v1745
      %v1778 = vunpack.c.l.b16 %v1746
      %v1779 = vunpack.c.l.b16 %v1747
      %v1780 = vunpack.c.l.b16 %v1748
      %v1781 = vunpack.c.l.b16 %v1749
      %v1782 = vunpack.c.l.b16 %v1750
      %v1783 = vunpack.c.l.b16 %v1751
      %v1784 = vunpack.c.l.b16 %v1752
      %v1785 = vunpack.c.l.b16 %v1753
      %v1786 = vunpack.c.l.b16 %v1754
      %v1787 = vunpack.c.l.b16 %v1755
      %v1788 = vunpack.c.l.b16 %v1756
      %v1789 = vunpack.c.l.b16 %v1757
      %v1790 = vunpack.c.l.b16 %v1758
      %v1791 = vunpack.c.l.b16 %v1759
      %v1792 = vunpack.c.l.b16 %v1760
      %v1793 = vpack.c.b16 %v1778, %v1777
      %v1794 = vpack.c.b16 %v1780, %v1779
      %v1795 = vpack.c.b16 %v1782, %v1781
      %v1796 = vpack.c.b16 %v1784, %v1783
      %v1797 = vpack.c.b16 %v1786, %v1785
      %v1798 = vpack.c.b16 %v1788, %v1787
      %v1799 = vpack.c.b16 %v1790, %v1789
      %v1800 = vpack.c.b16 %v1792, %v1791
      %1809 = vmatprep.subr.bf16.mxu0 0
      %1810 = vmatpush1.bf16.msra.mxu0 %v1800
      %1811 = vmatprep.subr.bf16.mxu0 0
      %1812 = vmatpush1.bf16.msra.mxu0 %v1799
      %1813 = vmatprep.subr.bf16.mxu0 0
      %1814 = vmatpush1.bf16.msra.mxu0 %v1798
      %1815 = vmatprep.subr.bf16.mxu0 0
      %1816 = vmatpush1.bf16.msra.mxu0 %v1797
      %1817 = vmatprep.subr.bf16.mxu0 0
      %1818 = vmatpush1.bf16.msra.mxu0 %v1796
      %1819 = vmatprep.subr.bf16.mxu0 0
      %1820 = vmatpush1.bf16.msra.mxu0 %v1795
      %1821 = vmatprep.subr.bf16.mxu0 0
      %1822 = vmatpush1.bf16.msra.mxu0 %v1794
      %1823 = vmatprep.subr.bf16.mxu0 0
      %1824 = vmatpush1.bf16.msra.mxu0 %v1793
      %1825 = vmatprep.subr.bf16.mxu0 0
      %1826 = vmatpush2.bf16.msra.mxu0 0
      %1827 = vmatprep.subr.bf16.mxu0 0
      %1828 = vmatpush2.bf16.msra.mxu0 0
      %1829 = vmatprep.subr.bf16.mxu0 0
      %1830 = vmatpush2.bf16.msra.mxu0 0
      %1831 = vmatprep.subr.bf16.mxu0 0
      %1832 = vmatpush2.bf16.msra.mxu0 0
      %1833 = vmatprep.subr.bf16.mxu0 0
      %1834 = vmatpush2.bf16.msra.mxu0 0
      %1835 = vmatprep.subr.bf16.mxu0 0
      %1836 = vmatpush2.bf16.msra.mxu0 0
      %1837 = vmatprep.subr.bf16.mxu0 0
      %1838 = vmatpush2.bf16.msra.mxu0 0
      %1839 = vmatprep.subr.bf16.mxu0 0
      %1840 = vmatpush2.bf16.msra.mxu0 0
      %1841 = vmatprep.mubr.bf16.mxu0 0
      %1842 = vmatmul.mubr.bf16.gmra.mxu0 %v520
      %v1843 = vpop.f32.mrf.mxu0
      %v1844 = vadd.f32 0.0, %v1843
      %v1845 = vpop.f32.mrf.mxu0
      %v1846 = vpop.f32.mrf.mxu0
      %v1847 = vadd.f32 0.0, %v1846
      %v1848 = vpop.f32.mrf.mxu0
      %1849 = vmatprep.mubr.bf16.mxu0 0
      %1850 = vmatmul.mubr.bf16.gmra.mxu0 %v522
      %v1851 = vpop.f32.mrf.mxu0
      %v1852 = vadd.f32 0.0, %v1851
      %v1853 = vpop.f32.mrf.mxu0
      %v1854 = vpop.f32.mrf.mxu0
      %v1855 = vadd.f32 0.0, %v1854
      %v1856 = vpop.f32.mrf.mxu0
      %1857 = vmatprep.mubr.bf16.mxu0 0
      %1858 = vmatmul.mubr.bf16.gmra.mxu0 %v524
      %v1859 = vpop.f32.mrf.mxu0
      %v1860 = vadd.f32 0.0, %v1859
      %v1861 = vpop.f32.mrf.mxu0
      %v1862 = vpop.f32.mrf.mxu0
      %v1863 = vadd.f32 0.0, %v1862
      %v1864 = vpop.f32.mrf.mxu0
      %1865 = vmatprep.mubr.bf16.mxu0 0
      %1866 = vmatmul.mubr.bf16.gmra.mxu0 %v526
      %v1867 = vpop.f32.mrf.mxu0
      %v1868 = vadd.f32 0.0, %v1867
      %v1869 = vpop.f32.mrf.mxu0
      %v1870 = vpop.f32.mrf.mxu0
      %v1871 = vadd.f32 0.0, %v1870
      %v1872 = vpop.f32.mrf.mxu0
      %1873 = vmatprep.mubr.bf16.mxu0 0
      %1874 = vmatmul.mubr.bf16.gmra.mxu0 %v528
      %v1875 = vpop.f32.mrf.mxu0
      %v1876 = vadd.f32 0.0, %v1875
      %v1877 = vpop.f32.mrf.mxu0
      %v1878 = vpop.f32.mrf.mxu0
      %v1879 = vadd.f32 0.0, %v1878
      %v1880 = vpop.f32.mrf.mxu0
      %1881 = vmatprep.mubr.bf16.mxu0 0
      %1882 = vmatmul.mubr.bf16.gmra.mxu0 %v530
      %v1883 = vpop.f32.mrf.mxu0
      %v1884 = vadd.f32 0.0, %v1883
      %v1885 = vpop.f32.mrf.mxu0
      %v1886 = vpop.f32.mrf.mxu0
      %v1887 = vadd.f32 0.0, %v1886
      %v1888 = vpop.f32.mrf.mxu0
      %1889 = vmatprep.mubr.bf16.mxu0 0
      %1890 = vmatmul.mubr.bf16.gmra.mxu0 %v532
      %v1891 = vpop.f32.mrf.mxu0
      %v1892 = vadd.f32 0.0, %v1891
      %v1893 = vpop.f32.mrf.mxu0
      %v1894 = vpop.f32.mrf.mxu0
      %v1895 = vadd.f32 0.0, %v1894
      %v1896 = vpop.f32.mrf.mxu0
      %1897 = vmatprep.mubr.bf16.mxu0 0
      %1898 = vmatmul.mubr.bf16.gmra.mxu0 %v534
      %v1899 = vpop.f32.mrf.mxu0
      %v1900 = vadd.f32 0.0, %v1899
      %v1901 = vpop.f32.mrf.mxu0
      %v1902 = vpop.f32.mrf.mxu0
      %v1903 = vadd.f32 0.0, %v1902
      %v1904 = vpop.f32.mrf.mxu0
      %1905 = vdwg.mxu0
      %v1906 = vadd.f32 %v1728, %v1844
      %v1907 = vadd.f32 %v1729, %v1847
      %v1908 = vadd.f32 %v1730, %v1852
      %v1909 = vadd.f32 %v1731, %v1855
      %v1910 = vadd.f32 %v1732, %v1860
      %v1911 = vadd.f32 %v1733, %v1863
      %v1912 = vadd.f32 %v1734, %v1868
      %v1913 = vadd.f32 %v1735, %v1871
      %v1914 = vadd.f32 %v1736, %v1876
      %v1915 = vadd.f32 %v1737, %v1879
      %v1916 = vadd.f32 %v1738, %v1884
      %v1917 = vadd.f32 %v1739, %v1887
      %v1918 = vadd.f32 %v1740, %v1892
      %v1919 = vadd.f32 %v1741, %v1895
      %v1920 = vadd.f32 %v1742, %v1900
      %v1921 = vadd.f32 %v1743, %v1903
      %v1923 = vshrl.u32 %v534, 16
      %v1925 = vshll.u32 %v534, 16
      %v1927 = vrot.slane %v1925, 1
      %v1928 = vor.u32 %v1923, %v1927
      %v1930 = vshll.u32 %v535, 16
      %v1932 = vrot.slane %v1930, 1
      %v1933 = vsel %vm552, %v1928, %v1932
      %s1935 = scalar_lea.vmem %s1, 448
      %v1936 = vld [vmem:[%s1935] sm:$0xf]
      %v1937 = vld [vmem:[%s1935 + $0x4] sm:$0xf]
      %v1938 = vld [vmem:[%s1935 + $0x8] sm:$0xf]
      %v1939 = vld [vmem:[%s1935 + $0xc] sm:$0xf]
      %v1940 = vld [vmem:[%s1935 + $0x10] sm:$0xf]
      %v1941 = vld [vmem:[%s1935 + $0x14] sm:$0xf]
      %v1942 = vld [vmem:[%s1935 + $0x18] sm:$0xf]
      %v1943 = vld [vmem:[%s1935 + $0x1c] sm:$0xf]
      %v1944 = vld [vmem:[%s1935 + $0x20] sm:$0xf]
      %v1945 = vld [vmem:[%s1935 + $0x24] sm:$0xf]
      %v1946 = vld [vmem:[%s1935 + $0x28] sm:$0xf]
      %v1947 = vld [vmem:[%s1935 + $0x2c] sm:$0xf]
      %v1948 = vld [vmem:[%s1935 + $0x30] sm:$0xf]
      %v1949 = vld [vmem:[%s1935 + $0x34] sm:$0xf]
      %v1950 = vld [vmem:[%s1935 + $0x38] sm:$0xf]
      %v1951 = vld [vmem:[%s1935 + $0x3c] sm:$0xf]
      %v1968 = vunpack.c.l.b16 %v1936
      %v1969 = vunpack.c.l.b16 %v1937
      %v1970 = vunpack.c.l.b16 %v1938
      %v1971 = vunpack.c.l.b16 %v1939
      %v1972 = vunpack.c.l.b16 %v1940
      %v1973 = vunpack.c.l.b16 %v1941
      %v1974 = vunpack.c.l.b16 %v1942
      %v1975 = vunpack.c.l.b16 %v1943
      %v1976 = vunpack.c.l.b16 %v1944
      %v1977 = vunpack.c.l.b16 %v1945
      %v1978 = vunpack.c.l.b16 %v1946
      %v1979 = vunpack.c.l.b16 %v1947
      %v1980 = vunpack.c.l.b16 %v1948
      %v1981 = vunpack.c.l.b16 %v1949
      %v1982 = vunpack.c.l.b16 %v1950
      %v1983 = vunpack.c.l.b16 %v1951
      %v1984 = vpack.c.b16 %v1969, %v1968
      %v1985 = vpack.c.b16 %v1971, %v1970
      %v1986 = vpack.c.b16 %v1973, %v1972
      %v1987 = vpack.c.b16 %v1975, %v1974
      %v1988 = vpack.c.b16 %v1977, %v1976
      %v1989 = vpack.c.b16 %v1979, %v1978
      %v1990 = vpack.c.b16 %v1981, %v1980
      %v1991 = vpack.c.b16 %v1983, %v1982
      %2000 = vmatprep.subr.bf16.mxu0 0
      %2001 = vmatpush1.bf16.msra.mxu0 %v1991
      %2002 = vmatprep.subr.bf16.mxu0 0
      %2003 = vmatpush1.bf16.msra.mxu0 %v1990
      %2004 = vmatprep.subr.bf16.mxu0 0
      %2005 = vmatpush1.bf16.msra.mxu0 %v1989
      %2006 = vmatprep.subr.bf16.mxu0 0
      %2007 = vmatpush1.bf16.msra.mxu0 %v1988
      %2008 = vmatprep.subr.bf16.mxu0 0
      %2009 = vmatpush1.bf16.msra.mxu0 %v1987
      %2010 = vmatprep.subr.bf16.mxu0 0
      %2011 = vmatpush1.bf16.msra.mxu0 %v1986
      %2012 = vmatprep.subr.bf16.mxu0 0
      %2013 = vmatpush1.bf16.msra.mxu0 %v1985
      %2014 = vmatprep.subr.bf16.mxu0 0
      %2015 = vmatpush1.bf16.msra.mxu0 %v1984
      %2016 = vmatprep.subr.bf16.mxu0 0
      %2017 = vmatpush2.bf16.msra.mxu0 0
      %2018 = vmatprep.subr.bf16.mxu0 0
      %2019 = vmatpush2.bf16.msra.mxu0 0
      %2020 = vmatprep.subr.bf16.mxu0 0
      %2021 = vmatpush2.bf16.msra.mxu0 0
      %2022 = vmatprep.subr.bf16.mxu0 0
      %2023 = vmatpush2.bf16.msra.mxu0 0
      %2024 = vmatprep.subr.bf16.mxu0 0
      %2025 = vmatpush2.bf16.msra.mxu0 0
      %2026 = vmatprep.subr.bf16.mxu0 0
      %2027 = vmatpush2.bf16.msra.mxu0 0
      %2028 = vmatprep.subr.bf16.mxu0 0
      %2029 = vmatpush2.bf16.msra.mxu0 0
      %2030 = vmatprep.subr.bf16.mxu0 0
      %2031 = vmatpush2.bf16.msra.mxu0 0
      %2032 = vmatprep.mubr.bf16.mxu0 0
      %2033 = vmatmul.mubr.bf16.gmra.mxu0 %v588
      %v2034 = vpop.f32.mrf.mxu0
      %v2035 = vadd.f32 0.0, %v2034
      %v2036 = vpop.f32.mrf.mxu0
      %v2037 = vpop.f32.mrf.mxu0
      %v2038 = vadd.f32 0.0, %v2037
      %v2039 = vpop.f32.mrf.mxu0
      %2040 = vmatprep.mubr.bf16.mxu0 0
      %2041 = vmatmul.mubr.bf16.gmra.mxu0 %v600
      %v2042 = vpop.f32.mrf.mxu0
      %v2043 = vadd.f32 0.0, %v2042
      %v2044 = vpop.f32.mrf.mxu0
      %v2045 = vpop.f32.mrf.mxu0
      %v2046 = vadd.f32 0.0, %v2045
      %v2047 = vpop.f32.mrf.mxu0
      %2048 = vmatprep.mubr.bf16.mxu0 0
      %2049 = vmatmul.mubr.bf16.gmra.mxu0 %v612
      %v2050 = vpop.f32.mrf.mxu0
      %v2051 = vadd.f32 0.0, %v2050
      %v2052 = vpop.f32.mrf.mxu0
      %v2053 = vpop.f32.mrf.mxu0
      %v2054 = vadd.f32 0.0, %v2053
      %v2055 = vpop.f32.mrf.mxu0
      %2056 = vmatprep.mubr.bf16.mxu0 0
      %2057 = vmatmul.mubr.bf16.gmra.mxu0 %v624
      %v2058 = vpop.f32.mrf.mxu0
      %v2059 = vadd.f32 0.0, %v2058
      %v2060 = vpop.f32.mrf.mxu0
      %v2061 = vpop.f32.mrf.mxu0
      %v2062 = vadd.f32 0.0, %v2061
      %v2063 = vpop.f32.mrf.mxu0
      %2064 = vmatprep.mubr.bf16.mxu0 0
      %2065 = vmatmul.mubr.bf16.gmra.mxu0 %v636
      %v2066 = vpop.f32.mrf.mxu0
      %v2067 = vadd.f32 0.0, %v2066
      %v2068 = vpop.f32.mrf.mxu0
      %v2069 = vpop.f32.mrf.mxu0
      %v2070 = vadd.f32 0.0, %v2069
      %v2071 = vpop.f32.mrf.mxu0
      %2072 = vmatprep.mubr.bf16.mxu0 0
      %2073 = vmatmul.mubr.bf16.gmra.mxu0 %v648
      %v2074 = vpop.f32.mrf.mxu0
      %v2075 = vadd.f32 0.0, %v2074
      %v2076 = vpop.f32.mrf.mxu0
      %v2077 = vpop.f32.mrf.mxu0
      %v2078 = vadd.f32 0.0, %v2077
      %v2079 = vpop.f32.mrf.mxu0
      %2080 = vmatprep.mubr.bf16.mxu0 0
      %2081 = vmatmul.mubr.bf16.gmra.mxu0 %v1380
      %v2082 = vpop.f32.mrf.mxu0
      %v2083 = vadd.f32 0.0, %v2082
      %v2084 = vpop.f32.mrf.mxu0
      %v2085 = vpop.f32.mrf.mxu0
      %v2086 = vadd.f32 0.0, %v2085
      %v2087 = vpop.f32.mrf.mxu0
      %2088 = vmatprep.mubr.bf16.mxu0 0
      %2089 = vmatmul.mubr.bf16.gmra.mxu0 %v1933
      %v2090 = vpop.f32.mrf.mxu0
      %v2091 = vadd.f32 0.0, %v2090
      %v2092 = vpop.f32.mrf.mxu0
      %v2093 = vpop.f32.mrf.mxu0
      %v2094 = vadd.f32 0.0, %v2093
      %v2095 = vpop.f32.mrf.mxu0
      %2096 = vdwg.mxu0
      %v2097 = vadd.f32 %v1906, %v2035
      %v2098 = vadd.f32 %v1907, %v2038
      %v2099 = vadd.f32 %v1908, %v2043
      %v2100 = vadd.f32 %v1909, %v2046
      %v2101 = vadd.f32 %v1910, %v2051
      %v2102 = vadd.f32 %v1911, %v2054
      %v2103 = vadd.f32 %v1912, %v2059
      %v2104 = vadd.f32 %v1913, %v2062
      %v2105 = vadd.f32 %v1914, %v2067
      %v2106 = vadd.f32 %v1915, %v2070
      %v2107 = vadd.f32 %v1916, %v2075
      %v2108 = vadd.f32 %v1917, %v2078
      %v2109 = vadd.f32 %v1918, %v2083
      %v2110 = vadd.f32 %v1919, %v2086
      %v2111 = vadd.f32 %v1920, %v2091
      %v2112 = vadd.f32 %v1921, %v2094
      %v2115 = vrot.slane %v534, 1
      %v2116 = vrot.slane %v535, 1
      %v2117 = vsel %vm980, %v2115, %v2116
      %s2119 = scalar_lea.vmem %s1, 512
      %v2120 = vld [vmem:[%s2119] sm:$0xf]
      %v2121 = vld [vmem:[%s2119 + $0x4] sm:$0xf]
      %v2122 = vld [vmem:[%s2119 + $0x8] sm:$0xf]
      %v2123 = vld [vmem:[%s2119 + $0xc] sm:$0xf]
      %v2124 = vld [vmem:[%s2119 + $0x10] sm:$0xf]
      %v2125 = vld [vmem:[%s2119 + $0x14] sm:$0xf]
      %v2126 = vld [vmem:[%s2119 + $0x18] sm:$0xf]
      %v2127 = vld [vmem:[%s2119 + $0x1c] sm:$0xf]
      %v2128 = vld [vmem:[%s2119 + $0x20] sm:$0xf]
      %v2129 = vld [vmem:[%s2119 + $0x24] sm:$0xf]
      %v2130 = vld [vmem:[%s2119 + $0x28] sm:$0xf]
      %v2131 = vld [vmem:[%s2119 + $0x2c] sm:$0xf]
      %v2132 = vld [vmem:[%s2119 + $0x30] sm:$0xf]
      %v2133 = vld [vmem:[%s2119 + $0x34] sm:$0xf]
      %v2134 = vld [vmem:[%s2119 + $0x38] sm:$0xf]
      %v2135 = vld [vmem:[%s2119 + $0x3c] sm:$0xf]
      %v2152 = vunpack.c.l.b16 %v2120
      %v2153 = vunpack.c.l.b16 %v2121
      %v2154 = vunpack.c.l.b16 %v2122
      %v2155 = vunpack.c.l.b16 %v2123
      %v2156 = vunpack.c.l.b16 %v2124
      %v2157 = vunpack.c.l.b16 %v2125
      %v2158 = vunpack.c.l.b16 %v2126
      %v2159 = vunpack.c.l.b16 %v2127
      %v2160 = vunpack.c.l.b16 %v2128
      %v2161 = vunpack.c.l.b16 %v2129
      %v2162 = vunpack.c.l.b16 %v2130
      %v2163 = vunpack.c.l.b16 %v2131
      %v2164 = vunpack.c.l.b16 %v2132
      %v2165 = vunpack.c.l.b16 %v2133
      %v2166 = vunpack.c.l.b16 %v2134
      %v2167 = vunpack.c.l.b16 %v2135
      %v2168 = vpack.c.b16 %v2153, %v2152
      %v2169 = vpack.c.b16 %v2155, %v2154
      %v2170 = vpack.c.b16 %v2157, %v2156
      %v2171 = vpack.c.b16 %v2159, %v2158
      %v2172 = vpack.c.b16 %v2161, %v2160
      %v2173 = vpack.c.b16 %v2163, %v2162
      %v2174 = vpack.c.b16 %v2165, %v2164
      %v2175 = vpack.c.b16 %v2167, %v2166
      %2184 = vmatprep.subr.bf16.mxu0 0
      %2185 = vmatpush1.bf16.msra.mxu0 %v2175
      %2186 = vmatprep.subr.bf16.mxu0 0
      %2187 = vmatpush1.bf16.msra.mxu0 %v2174
      %2188 = vmatprep.subr.bf16.mxu0 0
      %2189 = vmatpush1.bf16.msra.mxu0 %v2173
      %2190 = vmatprep.subr.bf16.mxu0 0
      %2191 = vmatpush1.bf16.msra.mxu0 %v2172
      %2192 = vmatprep.subr.bf16.mxu0 0
      %2193 = vmatpush1.bf16.msra.mxu0 %v2171
      %2194 = vmatprep.subr.bf16.mxu0 0
      %2195 = vmatpush1.bf16.msra.mxu0 %v2170
      %2196 = vmatprep.subr.bf16.mxu0 0
      %2197 = vmatpush1.bf16.msra.mxu0 %v2169
      %2198 = vmatprep.subr.bf16.mxu0 0
      %2199 = vmatpush1.bf16.msra.mxu0 %v2168
      %2200 = vmatprep.subr.bf16.mxu0 0
      %2201 = vmatpush2.bf16.msra.mxu0 0
      %2202 = vmatprep.subr.bf16.mxu0 0
      %2203 = vmatpush2.bf16.msra.mxu0 0
      %2204 = vmatprep.subr.bf16.mxu0 0
      %2205 = vmatpush2.bf16.msra.mxu0 0
      %2206 = vmatprep.subr.bf16.mxu0 0
      %2207 = vmatpush2.bf16.msra.mxu0 0
      %2208 = vmatprep.subr.bf16.mxu0 0
      %2209 = vmatpush2.bf16.msra.mxu0 0
      %2210 = vmatprep.subr.bf16.mxu0 0
      %2211 = vmatpush2.bf16.msra.mxu0 0
      %2212 = vmatprep.subr.bf16.mxu0 0
      %2213 = vmatpush2.bf16.msra.mxu0 0
      %2214 = vmatprep.subr.bf16.mxu0 0
      %2215 = vmatpush2.bf16.msra.mxu0 0
      %2216 = vmatprep.mubr.bf16.mxu0 0
      %2217 = vmatmul.mubr.bf16.gmra.mxu0 %v989
      %v2218 = vpop.f32.mrf.mxu0
      %v2219 = vadd.f32 0.0, %v2218
      %v2220 = vpop.f32.mrf.mxu0
      %v2221 = vpop.f32.mrf.mxu0
      %v2222 = vadd.f32 0.0, %v2221
      %v2223 = vpop.f32.mrf.mxu0
      %2224 = vmatprep.mubr.bf16.mxu0 0
      %2225 = vmatmul.mubr.bf16.gmra.mxu0 %v992
      %v2226 = vpop.f32.mrf.mxu0
      %v2227 = vadd.f32 0.0, %v2226
      %v2228 = vpop.f32.mrf.mxu0
      %v2229 = vpop.f32.mrf.mxu0
      %v2230 = vadd.f32 0.0, %v2229
      %v2231 = vpop.f32.mrf.mxu0
      %2232 = vmatprep.mubr.bf16.mxu0 0
      %2233 = vmatmul.mubr.bf16.gmra.mxu0 %v995
      %v2234 = vpop.f32.mrf.mxu0
      %v2235 = vadd.f32 0.0, %v2234
      %v2236 = vpop.f32.mrf.mxu0
      %v2237 = vpop.f32.mrf.mxu0
      %v2238 = vadd.f32 0.0, %v2237
      %v2239 = vpop.f32.mrf.mxu0
      %2240 = vmatprep.mubr.bf16.mxu0 0
      %2241 = vmatmul.mubr.bf16.gmra.mxu0 %v998
      %v2242 = vpop.f32.mrf.mxu0
      %v2243 = vadd.f32 0.0, %v2242
      %v2244 = vpop.f32.mrf.mxu0
      %v2245 = vpop.f32.mrf.mxu0
      %v2246 = vadd.f32 0.0, %v2245
      %v2247 = vpop.f32.mrf.mxu0
      %2248 = vmatprep.mubr.bf16.mxu0 0
      %2249 = vmatmul.mubr.bf16.gmra.mxu0 %v1001
      %v2250 = vpop.f32.mrf.mxu0
      %v2251 = vadd.f32 0.0, %v2250
      %v2252 = vpop.f32.mrf.mxu0
      %v2253 = vpop.f32.mrf.mxu0
      %v2254 = vadd.f32 0.0, %v2253
      %v2255 = vpop.f32.mrf.mxu0
      %2256 = vmatprep.mubr.bf16.mxu0 0
      %2257 = vmatmul.mubr.bf16.gmra.mxu0 %v1004
      %v2258 = vpop.f32.mrf.mxu0
      %v2259 = vadd.f32 0.0, %v2258
      %v2260 = vpop.f32.mrf.mxu0
      %v2261 = vpop.f32.mrf.mxu0
      %v2262 = vadd.f32 0.0, %v2261
      %v2263 = vpop.f32.mrf.mxu0
      %2264 = vmatprep.mubr.bf16.mxu0 0
      %2265 = vmatmul.mubr.bf16.gmra.mxu0 %v1564
      %v2266 = vpop.f32.mrf.mxu0
      %v2267 = vadd.f32 0.0, %v2266
      %v2268 = vpop.f32.mrf.mxu0
      %v2269 = vpop.f32.mrf.mxu0
      %v2270 = vadd.f32 0.0, %v2269
      %v2271 = vpop.f32.mrf.mxu0
      %2272 = vmatprep.mubr.bf16.mxu0 0
      %2273 = vmatmul.mubr.bf16.gmra.mxu0 %v2117
      %v2274 = vpop.f32.mrf.mxu0
      %v2275 = vadd.f32 0.0, %v2274
      %v2276 = vpop.f32.mrf.mxu0
      %v2277 = vpop.f32.mrf.mxu0
      %v2278 = vadd.f32 0.0, %v2277
      %v2279 = vpop.f32.mrf.mxu0
      %2280 = vdwg.mxu0
      %v2281 = vadd.f32 %v2097, %v2219
      %v2282 = vadd.f32 %v2098, %v2222
      %v2283 = vadd.f32 %v2099, %v2227
      %v2284 = vadd.f32 %v2100, %v2230
      %v2285 = vadd.f32 %v2101, %v2235
      %v2286 = vadd.f32 %v2102, %v2238
      %v2287 = vadd.f32 %v2103, %v2243
      %v2288 = vadd.f32 %v2104, %v2246
      %v2289 = vadd.f32 %v2105, %v2251
      %v2290 = vadd.f32 %v2106, %v2254
      %v2291 = vadd.f32 %v2107, %v2259
      %v2292 = vadd.f32 %v2108, %v2262
      %v2293 = vadd.f32 %v2109, %v2267
      %v2294 = vadd.f32 %v2110, %v2270
      %v2295 = vadd.f32 %v2111, %v2275
      %v2296 = vadd.f32 %v2112, %v2278
      %v2297 = vpack.c.bf16 %v2282, %v2281
      %v2298 = vpack.c.bf16 %v2284, %v2283
      %v2299 = vpack.c.bf16 %v2286, %v2285
      %v2300 = vpack.c.bf16 %v2288, %v2287
      %v2301 = vpack.c.bf16 %v2290, %v2289
      %v2302 = vpack.c.bf16 %v2292, %v2291
      %v2303 = vpack.c.bf16 %v2294, %v2293
      %v2304 = vpack.c.bf16 %v2296, %v2295
      %v2313 = vunpack.c.l.b16 %v2297
      %v2314 = vunpack.c.h.b16 %v2297
      %v2315 = vunpack.c.l.b16 %v2298
      %v2316 = vunpack.c.h.b16 %v2298
      %v2317 = vunpack.c.l.b16 %v2299
      %v2318 = vunpack.c.h.b16 %v2299
      %v2319 = vunpack.c.l.b16 %v2300
      %v2320 = vunpack.c.h.b16 %v2300
      %v2321 = vunpack.c.l.b16 %v2301
      %v2322 = vunpack.c.h.b16 %v2301
      %v2323 = vunpack.c.l.b16 %v2302
      %v2324 = vunpack.c.h.b16 %v2302
      %v2325 = vunpack.c.l.b16 %v2303
      %v2326 = vunpack.c.h.b16 %v2303
      %v2327 = vunpack.c.l.b16 %v2304
      %v2328 = vunpack.c.h.b16 %v2304
      %v2329 = vpack.c.b16 %v2313, %v2313
      %v2330 = vpack.c.b16 %v2314, %v2314
      %v2331 = vpack.c.b16 %v2315, %v2315
      %v2332 = vpack.c.b16 %v2316, %v2316
      %v2333 = vpack.c.b16 %v2317, %v2317
      %v2334 = vpack.c.b16 %v2318, %v2318
      %v2335 = vpack.c.b16 %v2319, %v2319
      %v2336 = vpack.c.b16 %v2320, %v2320
      %v2337 = vpack.c.b16 %v2321, %v2321
      %v2338 = vpack.c.b16 %v2322, %v2322
      %v2339 = vpack.c.b16 %v2323, %v2323
      %v2340 = vpack.c.b16 %v2324, %v2324
      %v2341 = vpack.c.b16 %v2325, %v2325
      %v2342 = vpack.c.b16 %v2326, %v2326
      %v2343 = vpack.c.b16 %v2327, %v2327
      %v2344 = vpack.c.b16 %v2328, %v2328
      %2361 = vst [vmem:[%s275] sm:$0xf] %v2329
      %2362 = vst [vmem:[%s275 + $0x4] sm:$0xf] %v2330
      %2363 = vst [vmem:[%s275 + $0x8] sm:$0xf] %v2331
      %2364 = vst [vmem:[%s275 + $0xc] sm:$0xf] %v2332
      %2365 = vst [vmem:[%s275 + $0x10] sm:$0xf] %v2333
      %2366 = vst [vmem:[%s275 + $0x14] sm:$0xf] %v2334
      %2367 = vst [vmem:[%s275 + $0x18] sm:$0xf] %v2335
      %2368 = vst [vmem:[%s275 + $0x1c] sm:$0xf] %v2336
      %2369 = vst [vmem:[%s275 + $0x20] sm:$0xf] %v2337
      %2370 = vst [vmem:[%s275 + $0x24] sm:$0xf] %v2338
      %2371 = vst [vmem:[%s275 + $0x28] sm:$0xf] %v2339
      %2372 = vst [vmem:[%s275 + $0x2c] sm:$0xf] %v2340
      %2373 = vst [vmem:[%s275 + $0x30] sm:$0xf] %v2341
      %2374 = vst [vmem:[%s275 + $0x34] sm:$0xf] %v2342
      %2375 = vst [vmem:[%s275 + $0x38] sm:$0xf] %v2343
      %2376 = vst [vmem:[%s275 + $0x3c] sm:$0xf] %v2344
      %v2377 = vadd.f32 %v2281, %v2282
      %v2378 = vadd.f32 %v2377, %v2283
      %v2379 = vadd.f32 %v2378, %v2284
      %v2380 = vadd.f32 %v2379, %v2285
      %v2381 = vadd.f32 %v2380, %v2286
      %v2382 = vadd.f32 %v2381, %v2287
      %v2383 = vadd.f32 %v2382, %v2288
      %v2384 = vadd.f32 %v2383, %v2289
      %v2385 = vadd.f32 %v2384, %v2290
      %v2386 = vadd.f32 %v2385, %v2291
      %v2387 = vadd.f32 %v2386, %v2292
      %v2388 = vadd.f32 %v2387, %v2293
      %v2389 = vadd.f32 %v2388, %v2294
      %v2390 = vadd.f32 %v2389, %v2295
      %v2391 = vadd.f32 %v2390, %v2296
      %v2392 = vrot.slane %v2391, 4
      %v2393 = vadd.f32 %v2391, %v2392
      %v2394 = vrot.slane %v2393, 2
      %v2395 = vadd.f32 %v2393, %v2394
      %v2396 = vrot.slane %v2395, 1
      %v2397 = vadd.f32 %v2395, %v2396
      %2398 = vst [vmem:[%s284] sm:$0x1] %v2397
      %v2399 = vmul.f32 %v2281, %v2281
      %v2400 = vmul.f32 %v2282, %v2282
      %v2401 = vmul.f32 %v2283, %v2283
      %v2402 = vmul.f32 %v2284, %v2284
      %v2403 = vmul.f32 %v2285, %v2285
      %v2404 = vmul.f32 %v2286, %v2286
      %v2405 = vmul.f32 %v2287, %v2287
      %v2406 = vmul.f32 %v2288, %v2288
      %v2407 = vmul.f32 %v2289, %v2289
      %v2408 = vmul.f32 %v2290, %v2290
      %v2409 = vmul.f32 %v2291, %v2291
      %v2410 = vmul.f32 %v2292, %v2292
      %v2411 = vmul.f32 %v2293, %v2293
      %v2412 = vmul.f32 %v2294, %v2294
      %v2413 = vmul.f32 %v2295, %v2295
      %v2414 = vmul.f32 %v2296, %v2296
      %v2415 = vadd.f32 %v2399, %v2400
      %v2416 = vadd.f32 %v2415, %v2401
      %v2417 = vadd.f32 %v2416, %v2402
      %v2418 = vadd.f32 %v2417, %v2403
      %v2419 = vadd.f32 %v2418, %v2404
      %v2420 = vadd.f32 %v2419, %v2405
      %v2421 = vadd.f32 %v2420, %v2406
      %v2422 = vadd.f32 %v2421, %v2407
      %v2423 = vadd.f32 %v2422, %v2408
      %v2424 = vadd.f32 %v2423, %v2409
      %v2425 = vadd.f32 %v2424, %v2410
      %v2426 = vadd.f32 %v2425, %v2411
      %v2427 = vadd.f32 %v2426, %v2412
      %v2428 = vadd.f32 %v2427, %v2413
      %v2429 = vadd.f32 %v2428, %v2414
      %v2430 = vrot.slane %v2429, 4
      %v2431 = vadd.f32 %v2429, %v2430
      %v2432 = vrot.slane %v2431, 2
      %v2433 = vadd.f32 %v2431, %v2432
      %v2434 = vrot.slane %v2433, 1
      %v2435 = vadd.f32 %v2433, %v2434
      %2436 = vst [vmem:[%s284 + $0x1] sm:$0x1] %v2435
      %s2437 = smul.u32 8, %s22
      %p2438 = scmp.lt.s32.totalorder %s21, 1
      %s2439 = scalar_select %p2438, %s21, 1
      %p2440 = scmp.lt.s32.totalorder %s2437, 15
      %s2441 = scalar_select %p2440, %s2437, 15
      %s2442 = smul.addr %s2441, 2
      %s2443 = smul.addr %s2439, 32
      %s2444 = sadd.s32 %s2442, %s2443
      %s2445 = smul.addr %s2444, 4
      %s2446 = scalar_lea.vmem %s4, %s2445
      %p2447 = scmp.lt.s32.totalorder %s21, 1
      %s2448 = scalar_select %p2447, %s21, 1
      %p2449 = scmp.lt.s32.totalorder %s22, 1
      %s2450 = scalar_select %p2449, %s22, 1
      %s2451 = smul.addr %s2448, 2
      %s2452 = sadd.s32 %s2450, %s2451
      %s2453 = smul.addr %s2452, 2
      %s2454 = scalar_lea.vmem %s5, %s2453
      // Predicated region
      $region37: #{conv_block_forward.4} parent=35 // pred_check
        %p2455 = pneg %p140
      $region38: #{conv_block_forward.4} parent=35 // pred_check_branch
        %2457 = sbr.rel (%p2455) target = $region40
      $region39: #{conv_block_forward.4} parent=35 // pred_region
        %s2458 = smul.u32 8, %s22
      $region40: #{conv_block_forward.4} parent=35 // pred_fallthru
        _
      // Predicated region
      $region41: #{conv_block_forward.4} parent=35 // pred_check
        %p2459 = pneg %p168
      $region42: #{conv_block_forward.4} parent=35 // pred_check_branch
        %2461 = sbr.rel (%p2459) target = $region44
      $region43: #{conv_block_forward.4} parent=35 // pred_region
        _
      $region44: #{conv_block_forward.4} parent=35 // pred_fallthru
        _
    $region36: #{conv_block_forward.4} parent=5 // pred_fallthru
      _
    %p2462 = scmp.le.s32.totalorder 2, %s12
    // Predicated region
    $region45: #{conv_block_forward.4} parent=5 // pred_check
      %p2463 = pneg %p2462
    $region46: #{conv_block_forward.4} parent=5 // pred_check_branch
      %2465 = sbr.rel (%p2463) target = $region48
    $region47: #{conv_block_forward.4} parent=5 // pred_region
      %s2466 = ssub.s32 %s12, 2
      // Predicated region
      $region49: #{conv_block_forward.4} parent=47 // pred_check
        %p2467 = pneg %p146
      $region50: #{conv_block_forward.4} parent=47 // pred_check_branch
        %2469 = sbr.rel (%p2467) target = $region52
      $region51: #{conv_block_forward.4} parent=47 // pred_region
        %s2470 = smul.u32 8, %s24
        %p2471 = scmp.lt.s32.totalorder %s23, 1
        %s2472 = scalar_select %p2471, %s23, 1
        %p2473 = scmp.lt.s32.totalorder %s2470, 15
        %s2474 = scalar_select %p2473, %s2470, 15
        %s2475 = smul.addr %s2474, 2
        %s2476 = smul.addr %s2472, 32
        %s2477 = sadd.s32 %s2475, %s2476
        %s2478 = smul.addr %s2477, 4
        %s2479 = scalar_lea.vmem %s4, %s2478
      $region52: #{conv_block_forward.4} parent=47 // pred_fallthru
        _
      // Predicated region
      $region53: #{conv_block_forward.4} parent=47 // pred_check
        %p2480 = pneg %p174
      $region54: #{conv_block_forward.4} parent=47 // pred_check_branch
        %2482 = sbr.rel (%p2480) target = $region56
      $region55: #{conv_block_forward.4} parent=47 // pred_region
        %p2483 = scmp.lt.s32.totalorder %s23, 1
        %s2484 = scalar_select %p2483, %s23, 1
        %p2485 = scmp.lt.s32.totalorder %s24, 1
        %s2486 = scalar_select %p2485, %s24, 1
        %s2487 = smul.addr %s2484, 2
        %s2488 = sadd.s32 %s2486, %s2487
        %s2489 = smul.addr %s2488, 2
        %s2490 = scalar_lea.vmem %s5, %s2489
      $region56: #{conv_block_forward.4} parent=47 // pred_fallthru
        _
    $region48: #{conv_block_forward.4} parent=5 // pred_fallthru
      _
  $region6: #{conv_block_forward.4} parent=0 // loop_footer
    %s16 = sadd.s32 1, %s12
  $region7: #{conv_block_forward.4} parent=0 // loop_footer_branch
    %11 = sbr.rel target = $region3
  $region8: #{conv_block_forward.4} parent=0 // loop_exit
    _

// kernel: conv_block_forward.3
$region0: #{conv_block_forward.3}
  #allocation0 [shape = 'u32[]', space=smem, size = 0x4, offset = 0x4, fixed_abs, tag = 'smem constant byte address 0x4 - core index']
  #allocation1 [shape = 'u32[144,128]{1,0:T(1,128)}', space=vmem, size = 0x12000, scoped, tag = 'internal scratch']
  %s0 = inlined_call_operand.vmem [shape: bf16[2,2,10,18,128], index: 0, kind: input, shape index: {}]
  %s1 = inlined_call_operand.vmem [shape: bf16[9,128,128], index: 1, kind: input, shape index: {}]
  %s2 = inlined_call_operand.vmem [shape: bf16[2,16,16,128], index: 2, kind: output, shape index: {0}]
  %s3 = inlined_call_operand.vmem [shape: f32[2,2,2,128], index: 3, kind: output, shape index: {1}]
  %4 = xla_tuple %s2, %s3
  %s5 = sld [smem:[#allocation0]]
  $region49: #{conv_block_forward.3} parent=0
    _
  %s7 = ssub.s32 1, %s5
  %s8 = scalar_select 0, %s7, %s5
  loop: start=0, step=1, limit=6
  $region2: #{conv_block_forward.3} parent=0 // loop_pre_header
    _
  $region3: #{conv_block_forward.3} parent=0 // loop_header
    %s10 = sphi 0, %s14
    %p11 = scmp.ge.s32.totalorder %s10, 6
    %s17 = sphi 0, %s29
    %s18 = sphi 0, %s25
    %s19 = sphi 0, %s17
    %s20 = sphi 0, %s18
    %s21 = sphi 0, %s19
    %s22 = sphi 0, %s20
    %s34 = sphi 0, %s36
    %s37 = sphi 0, %s34
    %s38 = sphi 0, %s37
    %s54 = sphi 0, %s38
    %s58 = sphi 0, %s58
    %s60 = sphi 0, %s58
    %s61 = sphi 0, %s60
    %s75 = sphi 0, %s61
    %s83 = sphi 0, %s85
    %s86 = sphi 0, %s83
    %s87 = sphi 0, %s86
    %s103 = sphi 0, %s87
    %s111 = sphi 0, %s113
    %s114 = sphi 0, %s111
    %s115 = sphi 0, %s114
    %s131 = sphi 0, %s115
  $region4: #{conv_block_forward.3} parent=0 // loop_header_branch
    %13 = sbr.rel (%p11) target = $region8
  $region5: #{conv_block_forward.3} parent=0 // loop_body
    %s15 = ssub.s32 %s10, 1
    %s16 = ssub.s32 %s10, 2
    %s23 = sadd.s32 1, %s18
    %p24 = scmp.ge.s32.totalorder %s23, 2
    %s25 = scalar_select %p24, 0, %s23
    %s26 = sadd.s32 1, %s17
    %s27 = scalar_select %p24, %s26, %s17
    %p28 = scmp.ge.s32.totalorder %s27, 2
    %s29 = scalar_select %p28, 0, %s27
    %s30 = ssub.s32 %s17, %s29
    %s31 = ssub.s32 %s18, %s25
    %s32 = sor.u32 %s30, %s31
    %p33 = scmp.eq.s32.totalorder %s32, 0
    %s35 = sadd.s32 %s34, 1
    %s36 = scalar_select %p33, %s34, %s35
    %p39 = pneg %p33
    %p40 = scmp.eq.s32.totalorder %s10, 3
    %p41 = por %p39, %p40
    %p42 = scmp.ne.s32.totalorder %s34, %s37
    %p43 = scmp.eq.s32.totalorder %s10, 0
    %p44 = por %p42, %p43
    %p45 = scmp.ne.s32.totalorder %s34, %s37
    %p46 = scmp.eq.s32.totalorder %s15, 3
    %p47 = por %p45, %p46
    %p48 = scmp.ne.s32.totalorder %s37, %s38
    %p49 = scmp.eq.s32.totalorder %s15, 0
    %p50 = por %p48, %p49
    %p51 = scmp.ne.s32.totalorder %s37, %s38
    %p52 = scmp.eq.s32.totalorder %s16, 3
    %p53 = por %p51, %p52
    %p55 = scmp.ne.s32.totalorder %s38, %s54
    %p56 = scmp.eq.s32.totalorder %s16, 0
    %p57 = por %p55, %p56
    %s59 = sadd.s32 %s58, 1
    %p62 = scmp.eq.s32.totalorder %s10, 3
    %p63 = scmp.ne.s32.totalorder %s58, %s60
    %p64 = scmp.eq.s32.totalorder %s10, 0
    %p65 = por %p63, %p64
    %p66 = scmp.ne.s32.totalorder %s58, %s60
    %p67 = scmp.eq.s32.totalorder %s15, 3
    %p68 = por %p66, %p67
    %p69 = scmp.ne.s32.totalorder %s60, %s61
    %p70 = scmp.eq.s32.totalorder %s15, 0
    %p71 = por %p69, %p70
    %p72 = scmp.ne.s32.totalorder %s60, %s61
    %p73 = scmp.eq.s32.totalorder %s16, 3
    %p74 = por %p72, %p73
    %p76 = scmp.ne.s32.totalorder %s61, %s75
    %p77 = scmp.eq.s32.totalorder %s16, 0
    %p78 = por %p76, %p77
    %s79 = ssub.s32 %s17, %s29
    %s80 = ssub.s32 %s18, %s25
    %s81 = sor.u32 %s79, %s80
    %p82 = scmp.eq.s32.totalorder %s81, 0
    %s84 = sadd.s32 %s83, 1
    %s85 = scalar_select %p82, %s83, %s84
    %p88 = pneg %p82
    %p89 = scmp.eq.s32.totalorder %s10, 3
    %p90 = por %p88, %p89
    %p91 = scmp.ne.s32.totalorder %s83, %s86
    %p92 = scmp.eq.s32.totalorder %s10, 0
    %p93 = por %p91, %p92
    %p94 = scmp.ne.s32.totalorder %s83, %s86
    %p95 = scmp.eq.s32.totalorder %s15, 3
    %p96 = por %p94, %p95
    %p97 = scmp.ne.s32.totalorder %s86, %s87
    %p98 = scmp.eq.s32.totalorder %s15, 0
    %p99 = por %p97, %p98
    %p100 = scmp.ne.s32.totalorder %s86, %s87
    %p101 = scmp.eq.s32.totalorder %s16, 3
    %p102 = por %p100, %p101
    %p104 = scmp.ne.s32.totalorder %s87, %s103
    %p105 = scmp.eq.s32.totalorder %s16, 0
    %p106 = por %p104, %p105
    %s107 = ssub.s32 %s17, %s29
    %s108 = ssub.s32 %s18, %s25
    %s109 = sor.u32 %s107, %s108
    %p110 = scmp.eq.s32.totalorder %s109, 0
    %s112 = sadd.s32 %s111, 1
    %s113 = scalar_select %p110, %s111, %s112
    %p116 = pneg %p110
    %p117 = scmp.eq.s32.totalorder %s10, 3
    %p118 = por %p116, %p117
    %p119 = scmp.ne.s32.totalorder %s111, %s114
    %p120 = scmp.eq.s32.totalorder %s10, 0
    %p121 = por %p119, %p120
    %p122 = scmp.ne.s32.totalorder %s111, %s114
    %p123 = scmp.eq.s32.totalorder %s15, 3
    %p124 = por %p122, %p123
    %p125 = scmp.ne.s32.totalorder %s114, %s115
    %p126 = scmp.eq.s32.totalorder %s15, 0
    %p127 = por %p125, %p126
    %p128 = scmp.ne.s32.totalorder %s114, %s115
    %p129 = scmp.eq.s32.totalorder %s16, 3
    %p130 = por %p128, %p129
    %p132 = scmp.ne.s32.totalorder %s115, %s131
    %p133 = scmp.eq.s32.totalorder %s16, 0
    %p134 = por %p132, %p133
    %p135 = scmp.le.s32.totalorder 1, %s10
    %p136 = scmp.lt.s32.totalorder %s10, 5
    %p137 = pnand %p135, %p136
    %p138 = pneg %p137
    // Predicated region
    $region9: #{conv_block_forward.3} parent=5 // pred_check
      _
    $region10: #{conv_block_forward.3} parent=5 // pred_check_branch
      %140 = sbr.rel (%p137) target = $region12
    $region11: #{conv_block_forward.3} parent=5 // pred_region
      %s141 = ssub.s32 %s10, 1
      // Predicated region
      $region13: #{conv_block_forward.3} parent=11 // pred_check
        %p142 = pneg %p71
      $region14: #{conv_block_forward.3} parent=11 // pred_check_branch
        %144 = sbr.rel (%p142) target = $region16
      $region15: #{conv_block_forward.3} parent=11 // pred_region
        _
      $region16: #{conv_block_forward.3} parent=11 // pred_fallthru
        _
    $region12: #{conv_block_forward.3} parent=5 // pred_fallthru
      _
    %p145 = scmp.lt.s32.totalorder %s10, 4
    // Predicated region
    $region17: #{conv_block_forward.3} parent=5 // pred_check
      %p146 = pneg %p145
    $region18: #{conv_block_forward.3} parent=5 // pred_check_branch
      %148 = sbr.rel (%p146) target = $region20
    $region19: #{conv_block_forward.3} parent=5 // pred_region
      // Predicated region
      $region21: #{conv_block_forward.3} parent=19 // pred_check
        %p149 = pneg %p44
      $region22: #{conv_block_forward.3} parent=19 // pred_check_branch
        %151 = sbr.rel (%p149) target = $region24
      $region23: #{conv_block_forward.3} parent=19 // pred_region
        %p152 = scmp.lt.s32.totalorder %s17, 1
        %s153 = scalar_select %p152, %s17, 1
        %p154 = scmp.lt.s32.totalorder %s18, 1
        %s155 = scalar_select %p154, %s18, 1
        %s156 = smul.addr %s155, 30
        %s157 = smul.addr %s153, 60
        %s158 = sadd.s32 %s156, %s157
        %s159 = smul.addr %s158, 4
        %s160 = scalar_lea.vmem %s0, %s159
      $region24: #{conv_block_forward.3} parent=19 // pred_fallthru
        _
    $region20: #{conv_block_forward.3} parent=5 // pred_fallthru
      _
    %p161 = scmp.le.s32.totalorder 1, %s10
    %p162 = scmp.lt.s32.totalorder %s10, 5
    %p163 = pnand %p161, %p162
    %p164 = pneg %p163
    // Predicated region
    $region25: #{conv_block_forward.3} parent=5 // pred_check
      _
    $region26: #{conv_block_forward.3} parent=5 // pred_check_branch
      %166 = sbr.rel (%p163) target = $region28
    $region27: #{conv_block_forward.3} parent=5 // pred_region
      %s167 = ssub.s32 %s10, 1
      %p168 = scmp.lt.s32.totalorder %s19, 1
      %s169 = scalar_select %p168, %s19, 1
      %p170 = scmp.lt.s32.totalorder %s20, 1
      %s171 = scalar_select %p170, %s20, 1
      %s172 = smul.addr %s171, 30
      %s173 = smul.addr %s169, 60
      %s174 = sadd.s32 %s172, %s173
      %s175 = smul.addr %s174, 4
      %s176 = scalar_lea.vmem %s0, %s175
      %p177 = pneg %p50
      %p178 = pneg %p47
      %p179 = pneg %p71
      %p180 = pneg %p68
      %p181 = pneg %p99
      %p182 = pneg %p96
      %s183 = smul.u32 8, %s20
      %p184 = scmp.lt.s32.totalorder %s19, 1
      %s185 = scalar_select %p184, %s19, 1
      %p186 = scmp.lt.s32.totalorder %s183, 15
      %s187 = scalar_select %p186, %s183, 15
      %s188 = smul.addr %s187, 2
      %s189 = smul.addr %s185, 32
      %s190 = sadd.s32 %s188, %s189
      %s191 = smul.addr %s190, 4
      %s192 = scalar_lea.vmem %s2, %s191
      %p193 = pneg %p127
      %p194 = pneg %p124
      %p195 = scmp.lt.s32.totalorder %s19, 1
      %s196 = scalar_select %p195, %s19, 1
      %p197 = scmp.lt.s32.totalorder %s20, 1
      %s198 = scalar_select %p197, %s20, 1
      %s199 = smul.addr %s196, 2
      %s200 = sadd.s32 %s198, %s199
      %s201 = smul.addr %s200, 2
      %s202 = scalar_lea.vmem %s3, %s201
      %p203 = scmp.lt.s32.totalorder %s19, 1
      %s204 = scalar_select %p203, %s19, 1
      %p205 = scmp.lt.s32.totalorder %s20, 1
      %s206 = scalar_select %p205, %s20, 1
      %s207 = smul.addr %s206, 30
      %s208 = smul.addr %s204, 60
      %s209 = sadd.s32 %s207, %s208
      %s210 = smul.addr %s209, 4
      %s211 = scalar_lea.vmem %s0, %s210
      %s212 = smul.u32 8, %s20
      %p213 = scmp.lt.s32.totalorder %s19, 1
      %s214 = scalar_select %p213, %s19, 1
      %p215 = scmp.lt.s32.totalorder %s212, 15
      %s216 = scalar_select %p215, %s212, 15
      %s217 = smul.addr %s216, 2
      %s218 = smul.addr %s214, 32
      %s219 = sadd.s32 %s217, %s218
      %s220 = smul.addr %s219, 4
      %s221 = scalar_lea.vmem %s2, %s220
      %s222 = smul.u32 8, %s20
      %p223 = scmp.lt.s32.totalorder %s19, 1
      %s224 = scalar_select %p223, %s19, 1
      %p225 = scmp.lt.s32.totalorder %s20, 1
      %s226 = scalar_select %p225, %s20, 1
      %s227 = smul.addr %s224, 2
      %s228 = sadd.s32 %s226, %s227
      %s229 = smul.addr %s228, 2
      %s230 = scalar_lea.vmem %s3, %s229
      %v232 = vld [vmem:[%s211] sm:$0xf]
      %v233 = vld [vmem:[%s211 + $0x4] sm:$0xf]
      %v234 = vld [vmem:[%s211 + $0xc] sm:$0xf]
      %v235 = vld [vmem:[%s211 + $0x10] sm:$0xf]
      %v236 = vld [vmem:[%s211 + $0x18] sm:$0xf]
      %v237 = vld [vmem:[%s211 + $0x1c] sm:$0xf]
      %v238 = vld [vmem:[%s211 + $0x24] sm:$0xf]
      %v239 = vld [vmem:[%s211 + $0x28] sm:$0xf]
      %v240 = vld [vmem:[%s211 + $0x30] sm:$0xf]
      %v241 = vld [vmem:[%s211 + $0x34] sm:$0xf]
      %v242 = vld [vmem:[%s211 + $0x3c] sm:$0xf]
      %v243 = vld [vmem:[%s211 + $0x40] sm:$0xf]
      %v244 = vld [vmem:[%s211 + $0x48] sm:$0xf]
      %v245 = vld [vmem:[%s211 + $0x4c] sm:$0xf]
      %v246 = vld [vmem:[%s211 + $0x54] sm:$0xf]
      %v247 = vld [vmem:[%s211 + $0x58] sm:$0xf]
      %v248 = vld [vmem:[%s1] sm:$0xf]
      %v249 = vld [vmem:[%s1 + $0x4] sm:$0xf]
      %v250 = vld [vmem:[%s1 + $0x8] sm:$0xf]
      %v251 = vld [vmem:[%s1 + $0xc] sm:$0xf]
      %v252 = vld [vmem:[%s1 + $0x10] sm:$0xf]
      %v253 = vld [vmem:[%s1 + $0x14] sm:$0xf]
      %v254 = vld [vmem:[%s1 + $0x18] sm:$0xf]
      %v255 = vld [vmem:[%s1 + $0x1c] sm:$0xf]
      %v256 = vld [vmem:[%s1 + $0x20] sm:$0xf]
      %v257 = vld [vmem:[%s1 + $0x24] sm:$0xf]
      %v258 = vld [vmem:[%s1 + $0x28] sm:$0xf]
      %v259 = vld [vmem:[%s1 + $0x2c] sm:$0xf]
      %v260 = vld [vmem:[%s1 + $0x30] sm:$0xf]
      %v261 = vld [vmem:[%s1 + $0x34] sm:$0xf]
      %v262 = vld [vmem:[%s1 + $0x38] sm:$0xf]
      %v263 = vld [vmem:[%s1 + $0x3c] sm:$0xf]
      %v264 = vld [vmem:[%s211 + $0x8] sm:$0x1]
      %v265 = vld [vmem:[%s211 + $0x14] sm:$0x1]
      %v266 = vld [vmem:[%s211 + $0x20] sm:$0x1]
      %v267 = vld [vmem:[%s211 + $0x2c] sm:$0x1]
      %v268 = vld [vmem:[%s211 + $0x38] sm:$0x1]
      %v269 = vld [vmem:[%s211 + $0x44] sm:$0x1]
      %v270 = vld [vmem:[%s211 + $0x50] sm:$0x1]
      %v271 = vld [vmem:[%s211 + $0x5c] sm:$0x1]
      %vm272 = vsmask.f32 3328
      %vm273 = vsmask.f32 7440
      %vm274 = vmor %vm272, %vm273
      %v276 = vshrl.u32 %v232, 16
      %v278 = vrot.slane %v276, 4
      %v279 = vshll.u32 %v232, 16
      %v281 = vrot.slane %v279, 5
      %v282 = vor.u32 %v278, %v281
      %v283 = vrot.slane %v282, 4
      %v285 = vshll.u32 %v233, 16
      %v287 = vrot.slane %v285, 5
      %v288 = vsel %vm274, %v283, %v287
      %v289 = vshrl.u32 %v233, 16
      %v291 = vrot.slane %v289, 4
      %v292 = vor.u32 %v291, %v287
      %v293 = vrot.slane %v292, 4
      %v295 = vshll.u32 %v264, 16
      %v297 = vrot.slane %v295, 5
      %v298 = vsel %vm274, %v293, %v297
      %v300 = vshrl.u32 %v234, 16
      %v302 = vrot.slane %v300, 4
      %v303 = vshll.u32 %v234, 16
      %v305 = vrot.slane %v303, 5
      %v306 = vor.u32 %v302, %v305
      %v307 = vrot.slane %v306, 4
      %v309 = vshll.u32 %v235, 16
      %v311 = vrot.slane %v309, 5
      %v312 = vsel %vm274, %v307, %v311
      %v313 = vshrl.u32 %v235, 16
      %v315 = vrot.slane %v313, 4
      %v316 = vor.u32 %v315, %v311
      %v317 = vrot.slane %v316, 4
      %v319 = vshll.u32 %v265, 16
      %v321 = vrot.slane %v319, 5
      %v322 = vsel %vm274, %v317, %v321
      %v324 = vshrl.u32 %v236, 16
      %v326 = vrot.slane %v324, 4
      %v327 = vshll.u32 %v236, 16
      %v329 = vrot.slane %v327, 5
      %v330 = vor.u32 %v326, %v329
      %v331 = vrot.slane %v330, 4
      %v333 = vshll.u32 %v237, 16
      %v335 = vrot.slane %v333, 5
      %v336 = vsel %vm274, %v331, %v335
      %v337 = vshrl.u32 %v237, 16
      %v339 = vrot.slane %v337, 4
      %v340 = vor.u32 %v339, %v335
      %v341 = vrot.slane %v340, 4
      %v343 = vshll.u32 %v266, 16
      %v345 = vrot.slane %v343, 5
      %v346 = vsel %vm274, %v341, %v345
      %v348 = vshrl.u32 %v238, 16
      %v350 = vrot.slane %v348, 4
      %v351 = vshll.u32 %v238, 16
      %v353 = vrot.slane %v351, 5
      %v354 = vor.u32 %v350, %v353
      %v355 = vrot.slane %v354, 4
      %v357 = vshll.u32 %v239, 16
      %v359 = vrot.slane %v357, 5
      %v360 = vsel %vm274, %v355, %v359
      %v361 = vshrl.u32 %v239, 16
      %v363 = vrot.slane %v361, 4
      %v364 = vor.u32 %v363, %v359
      %v365 = vrot.slane %v364, 4
      %v367 = vshll.u32 %v267, 16
      %v369 = vrot.slane %v367, 5
      %v370 = vsel %vm274, %v365, %v369
      %v372 = vshrl.u32 %v240, 16
      %v374 = vrot.slane %v372, 4
      %v375 = vshll.u32 %v240, 16
      %v377 = vrot.slane %v375, 5
      %v378 = vor.u32 %v374, %v377
      %v379 = vrot.slane %v378, 4
      %v381 = vshll.u32 %v241, 16
      %v383 = vrot.slane %v381, 5
      %v384 = vsel %vm274, %v379, %v383
      %v385 = vshrl.u32 %v241, 16
      %v387 = vrot.slane %v385, 4
      %v388 = vor.u32 %v387, %v383
      %v389 = vrot.slane %v388, 4
      %v391 = vshll.u32 %v268, 16
      %v393 = vrot.slane %v391, 5
      %v394 = vsel %vm274, %v389, %v393
      %v396 = vshrl.u32 %v242, 16
      %v398 = vrot.slane %v396, 4
      %v399 = vshll.u32 %v242, 16
      %v401 = vrot.slane %v399, 5
      %v402 = vor.u32 %v398, %v401
      %v403 = vrot.slane %v402, 4
      %v405 = vshll.u32 %v243, 16
      %v407 = vrot.slane %v405, 5
      %v408 = vsel %vm274, %v403, %v407
      %v409 = vshrl.u32 %v243, 16
      %v411 = vrot.slane %v409, 4
      %v412 = vor.u32 %v411, %v407
      %v413 = vrot.slane %v412, 4
      %v415 = vshll.u32 %v269, 16
      %v417 = vrot.slane %v415, 5
      %v418 = vsel %vm274, %v413, %v417
      %v420 = vshrl.u32 %v244, 16
      %v422 = vrot.slane %v420, 4
      %v423 = vshll.u32 %v244, 16
      %v425 = vrot.slane %v423, 5
      %v426 = vor.u32 %v422, %v425
      %v427 = vrot.slane %v426, 4
      %v429 = vshll.u32 %v245, 16
      %v431 = vrot.slane %v429, 5
      %v432 = vsel %vm274, %v427, %v431
      %v433 = vshrl.u32 %v245, 16
      %v435 = vrot.slane %v433, 4
      %v436 = vor.u32 %v435, %v431
      %v437 = vrot.slane %v436, 4
      %v439 = vshll.u32 %v270, 16
      %v441 = vrot.slane %v439, 5
      %v442 = vsel %vm274, %v437, %v441
      %v444 = vshrl.u32 %v246, 16
      %v446 = vrot.slane %v444, 4
      %v447 = vshll.u32 %v246, 16
      %v449 = vrot.slane %v447, 5
      %v450 = vor.u32 %v446, %v449
      %v451 = vrot.slane %v450, 4
      %v453 = vshll.u32 %v247, 16
      %v455 = vrot.slane %v453, 5
      %v456 = vsel %vm274, %v451, %v455
      %v457 = vshrl.u32 %v247, 16
      %v459 = vrot.slane %v457, 4
      %v460 = vor.u32 %v459, %v455
      %v461 = vrot.slane %v460, 4
      %v463 = vshll.u32 %v271, 16
      %v465 = vrot.slane %v463, 5
      %v466 = vsel %vm274, %v461, %v465
      %s467 = scalar_lea.vmem %s1, 64
      %v468 = vld [vmem:[%s467] sm:$0xf]
      %v469 = vld [vmem:[%s467 + $0x4] sm:$0xf]
      %v470 = vld [vmem:[%s467 + $0x8] sm:$0xf]
      %v471 = vld [vmem:[%s467 + $0xc] sm:$0xf]
      %v472 = vld [vmem:[%s467 + $0x10] sm:$0xf]
      %v473 = vld [vmem:[%s467 + $0x14] sm:$0xf]
      %v474 = vld [vmem:[%s467 + $0x18] sm:$0xf]
      %v475 = vld [vmem:[%s467 + $0x1c] sm:$0xf]
      %v476 = vld [vmem:[%s467 + $0x20] sm:$0xf]
      %v477 = vld [vmem:[%s467 + $0x24] sm:$0xf]
      %v478 = vld [vmem:[%s467 + $0x28] sm:$0xf]
      %v479 = vld [vmem:[%s467 + $0x2c] sm:$0xf]
      %v480 = vld [vmem:[%s467 + $0x30] sm:$0xf]
      %v481 = vld [vmem:[%s467 + $0x34] sm:$0xf]
      %v482 = vld [vmem:[%s467 + $0x38] sm:$0xf]
      %v483 = vld [vmem:[%s467 + $0x3c] sm:$0xf]
      %v484 = vunpack.c.l.b16 %v288
      %v485 = vunpack.c.l.b16 %v298
      %v486 = vunpack.c.l.b16 %v312
      %v487 = vunpack.c.l.b16 %v322
      %v488 = vunpack.c.l.b16 %v336
      %v489 = vunpack.c.l.b16 %v346
      %v490 = vunpack.c.l.b16 %v360
      %v491 = vunpack.c.l.b16 %v370
      %v492 = vunpack.c.l.b16 %v384
      %v493 = vunpack.c.l.b16 %v394
      %v494 = vunpack.c.l.b16 %v408
      %v495 = vunpack.c.l.b16 %v418
      %v496 = vunpack.c.l.b16 %v432
      %v497 = vunpack.c.l.b16 %v442
      %v498 = vunpack.c.l.b16 %v456
      %v499 = vunpack.c.l.b16 %v466
      %v500 = vpack.c.b16 %v485, %v484
      %v501 = vpack.c.b16 %v487, %v486
      %v502 = vpack.c.b16 %v489, %v488
      %v503 = vpack.c.b16 %v491, %v490
      %v504 = vpack.c.b16 %v493, %v492
      %v505 = vpack.c.b16 %v495, %v494
      %v506 = vpack.c.b16 %v497, %v496
      %v507 = vpack.c.b16 %v499, %v498
      %v532 = vunpack.c.l.b16 %v468
      %v533 = vunpack.c.l.b16 %v469
      %v534 = vunpack.c.l.b16 %v470
      %v535 = vunpack.c.l.b16 %v471
      %v536 = vunpack.c.l.b16 %v472
      %v537 = vunpack.c.l.b16 %v473
      %v538 = vunpack.c.l.b16 %v474
      %v539 = vunpack.c.l.b16 %v475
      %v540 = vunpack.c.l.b16 %v476
      %v541 = vunpack.c.l.b16 %v477
      %v542 = vunpack.c.l.b16 %v478
      %v543 = vunpack.c.l.b16 %v479
      %v544 = vunpack.c.l.b16 %v480
      %v545 = vunpack.c.l.b16 %v481
      %v546 = vunpack.c.l.b16 %v482
      %v547 = vunpack.c.l.b16 %v483
      %v548 = vpack.c.b16 %v533, %v532
      %v549 = vpack.c.b16 %v535, %v534
      %v550 = vpack.c.b16 %v537, %v536
      %v551 = vpack.c.b16 %v539, %v538
      %v552 = vpack.c.b16 %v541, %v540
      %v553 = vpack.c.b16 %v543, %v542
      %v554 = vpack.c.b16 %v545, %v544
      %v555 = vpack.c.b16 %v547, %v546
      %564 = vmatprep.subr.bf16.mxu0 0
      %565 = vmatpush1.bf16.msra.mxu0 %v555
      %566 = vmatprep.subr.bf16.mxu0 0
      %567 = vmatpush1.bf16.msra.mxu0 %v554
      %568 = vmatprep.subr.bf16.mxu0 0
      %569 = vmatpush1.bf16.msra.mxu0 %v553
      %570 = vmatprep.subr.bf16.mxu0 0
      %571 = vmatpush1.bf16.msra.mxu0 %v552
      %572 = vmatprep.subr.bf16.mxu0 0
      %573 = vmatpush1.bf16.msra.mxu0 %v551
      %574 = vmatprep.subr.bf16.mxu0 0
      %575 = vmatpush1.bf16.msra.mxu0 %v550
      %576 = vmatprep.subr.bf16.mxu0 0
      %577 = vmatpush1.bf16.msra.mxu0 %v549
      %578 = vmatprep.subr.bf16.mxu0 0
      %579 = vmatpush1.bf16.msra.mxu0 %v548
      %580 = vmatprep.subr.bf16.mxu0 0
      %581 = vmatpush2.bf16.msra.mxu0 0
      %582 = vmatprep.subr.bf16.mxu0 0
      %583 = vmatpush2.bf16.msra.mxu0 0
      %584 = vmatprep.subr.bf16.mxu0 0
      %585 = vmatpush2.bf16.msra.mxu0 0
      %586 = vmatprep.subr.bf16.mxu0 0
      %587 = vmatpush2.bf16.msra.mxu0 0
      %588 = vmatprep.subr.bf16.mxu0 0
      %589 = vmatpush2.bf16.msra.mxu0 0
      %590 = vmatprep.subr.bf16.mxu0 0
      %591 = vmatpush2.bf16.msra.mxu0 0
      %592 = vmatprep.subr.bf16.mxu0 0
      %593 = vmatpush2.bf16.msra.mxu0 0
      %594 = vmatprep.subr.bf16.mxu0 0
      %595 = vmatpush2.bf16.msra.mxu0 0
      %596 = vmatprep.mubr.bf16.mxu0 0
      %597 = vmatmul.mubr.bf16.gmra.mxu0 %v500
      %v598 = vpop.f32.mrf.mxu0
      %v599 = vadd.f32 0.0, %v598
      %v600 = vpop.f32.mrf.mxu0
      %v601 = vpop.f32.mrf.mxu0
      %v602 = vadd.f32 0.0, %v601
      %v603 = vpop.f32.mrf.mxu0
      %604 = vmatprep.mubr.bf16.mxu0 0
      %605 = vmatmul.mubr.bf16.gmra.mxu0 %v501
      %v606 = vpop.f32.mrf.mxu0
      %v607 = vadd.f32 0.0, %v606
      %v608 = vpop.f32.mrf.mxu0
      %v609 = vpop.f32.mrf.mxu0
      %v610 = vadd.f32 0.0, %v609
      %v611 = vpop.f32.mrf.mxu0
      %612 = vmatprep.mubr.bf16.mxu0 0
      %613 = vmatmul.mubr.bf16.gmra.mxu0 %v502
      %v614 = vpop.f32.mrf.mxu0
      %v615 = vadd.f32 0.0, %v614
      %v616 = vpop.f32.mrf.mxu0
      %v617 = vpop.f32.mrf.mxu0
      %v618 = vadd.f32 0.0, %v617
      %v619 = vpop.f32.mrf.mxu0
      %620 = vmatprep.mubr.bf16.mxu0 0
      %621 = vmatmul.mubr.bf16.gmra.mxu0 %v503
      %v622 = vpop.f32.mrf.mxu0
      %v623 = vadd.f32 0.0, %v622
      %v624 = vpop.f32.mrf.mxu0
      %v625 = vpop.f32.mrf.mxu0
      %v626 = vadd.f32 0.0, %v625
      %v627 = vpop.f32.mrf.mxu0
      %628 = vmatprep.mubr.bf16.mxu0 0
      %629 = vmatmul.mubr.bf16.gmra.mxu0 %v504
      %v630 = vpop.f32.mrf.mxu0
      %v631 = vadd.f32 0.0, %v630
      %v632 = vpop.f32.mrf.mxu0
      %v633 = vpop.f32.mrf.mxu0
      %v634 = vadd.f32 0.0, %v633
      %v635 = vpop.f32.mrf.mxu0
      %636 = vmatprep.mubr.bf16.mxu0 0
      %637 = vmatmul.mubr.bf16.gmra.mxu0 %v505
      %v638 = vpop.f32.mrf.mxu0
      %v639 = vadd.f32 0.0, %v638
      %v640 = vpop.f32.mrf.mxu0
      %v641 = vpop.f32.mrf.mxu0
      %v642 = vadd.f32 0.0, %v641
      %v643 = vpop.f32.mrf.mxu0
      %644 = vmatprep.mubr.bf16.mxu0 0
      %645 = vmatmul.mubr.bf16.gmra.mxu0 %v506
      %v646 = vpop.f32.mrf.mxu0
      %v647 = vadd.f32 0.0, %v646
      %v648 = vpop.f32.mrf.mxu0
      %v649 = vpop.f32.mrf.mxu0
      %v650 = vadd.f32 0.0, %v649
      %v651 = vpop.f32.mrf.mxu0
      %652 = vmatprep.mubr.bf16.mxu0 0
      %653 = vmatmul.mubr.bf16.gmra.mxu0 %v507
      %v654 = vpop.f32.mrf.mxu0
      %v655 = vadd.f32 0.0, %v654
      %v656 = vpop.f32.mrf.mxu0
      %v657 = vpop.f32.mrf.mxu0
      %v658 = vadd.f32 0.0, %v657
      %v659 = vpop.f32.mrf.mxu0
      %660 = vdwg.mxu0
      %v677 = vunpack.c.l.b16 %v232
      %v678 = vunpack.c.l.b16 %v233
      %v679 = vunpack.c.l.b16 %v234
      %v680 = vunpack.c.l.b16 %v235
      %v681 = vunpack.c.l.b16 %v236
      %v682 = vunpack.c.l.b16 %v237
      %v683 = vunpack.c.l.b16 %v238
      %v684 = vunpack.c.l.b16 %v239
      %v685 = vunpack.c.l.b16 %v240
      %v686 = vunpack.c.l.b16 %v241
      %v687 = vunpack.c.l.b16 %v242
      %v688 = vunpack.c.l.b16 %v243
      %v689 = vunpack.c.l.b16 %v244
      %v690 = vunpack.c.l.b16 %v245
      %v691 = vunpack.c.l.b16 %v246
      %v692 = vunpack.c.l.b16 %v247
      %v693 = vpack.c.b16 %v678, %v677
      %v694 = vpack.c.b16 %v680, %v679
      %v695 = vpack.c.b16 %v682, %v681
      %v696 = vpack.c.b16 %v684, %v683
      %v697 = vpack.c.b16 %v686, %v685
      %v698 = vpack.c.b16 %v688, %v687
      %v699 = vpack.c.b16 %v690, %v689
      %v700 = vpack.c.b16 %v692, %v691
      %v725 = vunpack.c.l.b16 %v248
      %v726 = vunpack.c.l.b16 %v249
      %v727 = vunpack.c.l.b16 %v250
      %v728 = vunpack.c.l.b16 %v251
      %v729 = vunpack.c.l.b16 %v252
      %v730 = vunpack.c.l.b16 %v253
      %v731 = vunpack.c.l.b16 %v254
      %v732 = vunpack.c.l.b16 %v255
      %v733 = vunpack.c.l.b16 %v256
      %v734 = vunpack.c.l.b16 %v257
      %v735 = vunpack.c.l.b16 %v258
      %v736 = vunpack.c.l.b16 %v259
      %v737 = vunpack.c.l.b16 %v260
      %v738 = vunpack.c.l.b16 %v261
      %v739 = vunpack.c.l.b16 %v262
      %v740 = vunpack.c.l.b16 %v263
      %v741 = vpack.c.b16 %v726, %v725
      %v742 = vpack.c.b16 %v728, %v727
      %v743 = vpack.c.b16 %v730, %v729
      %v744 = vpack.c.b16 %v732, %v731
      %v745 = vpack.c.b16 %v734, %v733
      %v746 = vpack.c.b16 %v736, %v735
      %v747 = vpack.c.b16 %v738, %v737
      %v748 = vpack.c.b16 %v740, %v739
      %757 = vmatprep.subr.bf16.mxu0 0
      %758 = vmatpush1.bf16.msra.mxu0 %v748
      %759 = vmatprep.subr.bf16.mxu0 0
      %760 = vmatpush1.bf16.msra.mxu0 %v747
      %761 = vmatprep.subr.bf16.mxu0 0
      %762 = vmatpush1.bf16.msra.mxu0 %v746
      %763 = vmatprep.subr.bf16.mxu0 0
      %764 = vmatpush1.bf16.msra.mxu0 %v745
      %765 = vmatprep.subr.bf16.mxu0 0
      %766 = vmatpush1.bf16.msra.mxu0 %v744
      %767 = vmatprep.subr.bf16.mxu0 0
      %768 = vmatpush1.bf16.msra.mxu0 %v743
      %769 = vmatprep.subr.bf16.mxu0 0
      %770 = vmatpush1.bf16.msra.mxu0 %v742
      %771 = vmatprep.subr.bf16.mxu0 0
      %772 = vmatpush1.bf16.msra.mxu0 %v741
      %773 = vmatprep.subr.bf16.mxu0 0
      %774 = vmatpush2.bf16.msra.mxu0 0
      %775 = vmatprep.subr.bf16.mxu0 0
      %776 = vmatpush2.bf16.msra.mxu0 0
      %777 = vmatprep.subr.bf16.mxu0 0
      %778 = vmatpush2.bf16.msra.mxu0 0
      %779 = vmatprep.subr.bf16.mxu0 0
      %780 = vmatpush2.bf16.msra.mxu0 0
      %781 = vmatprep.subr.bf16.mxu0 0
      %782 = vmatpush2.bf16.msra.mxu0 0
      %783 = vmatprep.subr.bf16.mxu0 0
      %784 = vmatpush2.bf16.msra.mxu0 0
      %785 = vmatprep.subr.bf16.mxu0 0
      %786 = vmatpush2.bf16.msra.mxu0 0
      %787 = vmatprep.subr.bf16.mxu0 0
      %788 = vmatpush2.bf16.msra.mxu0 0
      %789 = vmatprep.mubr.bf16.mxu0 0
      %790 = vmatmul.mubr.bf16.gmra.mxu0 %v693
      %v791 = vpop.f32.mrf.mxu0
      %v792 = vadd.f32 %v599, %v791
      %v793 = vpop.f32.mrf.mxu0
      %v794 = vpop.f32.mrf.mxu0
      %v795 = vadd.f32 %v602, %v794
      %v796 = vpop.f32.mrf.mxu0
      %797 = vmatprep.mubr.bf16.mxu0 0
      %798 = vmatmul.mubr.bf16.gmra.mxu0 %v694
      %v799 = vpop.f32.mrf.mxu0
      %v800 = vadd.f32 %v607, %v799
      %v801 = vpop.f32.mrf.mxu0
      %v802 = vpop.f32.mrf.mxu0
      %v803 = vadd.f32 %v610, %v802
      %v804 = vpop.f32.mrf.mxu0
      %805 = vmatprep.mubr.bf16.mxu0 0
      %806 = vmatmul.mubr.bf16.gmra.mxu0 %v695
      %v807 = vpop.f32.mrf.mxu0
      %v808 = vadd.f32 %v615, %v807
      %v809 = vpop.f32.mrf.mxu0
      %v810 = vpop.f32.mrf.mxu0
      %v811 = vadd.f32 %v618, %v810
      %v812 = vpop.f32.mrf.mxu0
      %813 = vmatprep.mubr.bf16.mxu0 0
      %814 = vmatmul.mubr.bf16.gmra.mxu0 %v696
      %v815 = vpop.f32.mrf.mxu0
      %v816 = vadd.f32 %v623, %v815
      %v817 = vpop.f32.mrf.mxu0
      %v818 = vpop.f32.mrf.mxu0
      %v819 = vadd.f32 %v626, %v818
      %v820 = vpop.f32.mrf.mxu0
      %821 = vmatprep.mubr.bf16.mxu0 0
      %822 = vmatmul.mubr.bf16.gmra.mxu0 %v697
      %v823 = vpop.f32.mrf.mxu0
      %v824 = vadd.f32 %v631, %v823
      %v825 = vpop.f32.mrf.mxu0
      %v826 = vpop.f32.mrf.mxu0
      %v827 = vadd.f32 %v634, %v826
      %v828 = vpop.f32.mrf.mxu0
      %829 = vmatprep.mubr.bf16.mxu0 0
      %830 = vmatmul.mubr.bf16.gmra.mxu0 %v698
      %v831 = vpop.f32.mrf.mxu0
      %v832 = vadd.f32 %v639, %v831
      %v833 = vpop.f32.mrf.mxu0
      %v834 = vpop.f32.mrf.mxu0
      %v835 = vadd.f32 %v642, %v834
      %v836 = vpop.f32.mrf.mxu0
      %837 = vmatprep.mubr.bf16.mxu0 0
      %838 = vmatmul.mubr.bf16.gmra.mxu0 %v699
      %v839 = vpop.f32.mrf.mxu0
      %v840 = vadd.f32 %v647, %v839
      %v841 = vpop.f32.mrf.mxu0
      %v842 = vpop.f32.mrf.mxu0
      %v843 = vadd.f32 %v650, %v842
      %v844 = vpop.f32.mrf.mxu0
      %845 = vmatprep.mubr.bf16.mxu0 0
      %846 = vmatmul.mubr.bf16.gmra.mxu0 %v700
      %v847 = vpop.f32.mrf.mxu0
      %v848 = vadd.f32 %v655, %v847
      %v849 = vpop.f32.mrf.mxu0
      %v850 = vpop.f32.mrf.mxu0
      %v851 = vadd.f32 %v658, %v850
      %v852 = vpop.f32.mrf.mxu0
      %853 = vdwg.mxu0
      %v854 = vld [vmem:[%s211] sm:$0xe]
      %v855 = vld [vmem:[%s211 + $0xc] sm:$0xe]
      %v856 = vld [vmem:[%s211 + $0x18] sm:$0xe]
      %v857 = vld [vmem:[%s211 + $0x24] sm:$0xe]
      %v858 = vld [vmem:[%s211 + $0x30] sm:$0xe]
      %v859 = vld [vmem:[%s211 + $0x3c] sm:$0xe]
      %v860 = vld [vmem:[%s211 + $0x48] sm:$0xe]
      %v861 = vld [vmem:[%s211 + $0x54] sm:$0xe]
      %vm878 = vcmask 1042432
      %vm879 = vcmask 1046532
      %vm880 = vmor %vm878, %vm879
      %v881 = vrot.slane %v854, 5
      %v882 = vrot.slane %v881, 4
      %v883 = vrot.slane %v233, 5
      %v884 = vsel %vm880, %v882, %v883
      %v885 = vrot.slane %v883, 4
      %v886 = vrot.slane %v264, 5
      %v887 = vsel %vm880, %v885, %v886
      %v888 = vrot.slane %v855, 5
      %v889 = vrot.slane %v888, 4
      %v890 = vrot.slane %v235, 5
      %v891 = vsel %vm880, %v889, %v890
      %v892 = vrot.slane %v890, 4
      %v893 = vrot.slane %v265, 5
      %v894 = vsel %vm880, %v892, %v893
      %v895 = vrot.slane %v856, 5
      %v896 = vrot.slane %v895, 4
      %v897 = vrot.slane %v237, 5
      %v898 = vsel %vm880, %v896, %v897
      %v899 = vrot.slane %v897, 4
      %v900 = vrot.slane %v266, 5
      %v901 = vsel %vm880, %v899, %v900
      %v902 = vrot.slane %v857, 5
      %v903 = vrot.slane %v902, 4
      %v904 = vrot.slane %v239, 5
      %v905 = vsel %vm880, %v903, %v904
      %v906 = vrot.slane %v904, 4
      %v907 = vrot.slane %v267, 5
      %v908 = vsel %vm880, %v906, %v907
      %v909 = vrot.slane %v858, 5
      %v910 = vrot.slane %v909, 4
      %v911 = vrot.slane %v241, 5
      %v912 = vsel %vm880, %v910, %v911
      %v913 = vrot.slane %v911, 4
      %v914 = vrot.slane %v268, 5
      %v915 = vsel %vm880, %v913, %v914
      %v916 = vrot.slane %v859, 5
      %v917 = vrot.slane %v916, 4
      %v918 = vrot.slane %v243, 5
      %v919 = vsel %vm880, %v917, %v918
      %v920 = vrot.slane %v918, 4
      %v921 = vrot.slane %v269, 5
      %v922 = vsel %vm880, %v920, %v921
      %v923 = vrot.slane %v860, 5
      %v924 = vrot.slane %v923, 4
      %v925 = vrot.slane %v245, 5
      %v926 = vsel %vm880, %v924, %v925
      %v927 = vrot.slane %v925, 4
      %v928 = vrot.slane %v270, 5
      %v929 = vsel %vm880, %v927, %v928
      %v930 = vrot.slane %v861, 5
      %v931 = vrot.slane %v930, 4
      %v932 = vrot.slane %v247, 5
      %v933 = vsel %vm880, %v931, %v932
      %v934 = vrot.slane %v932, 4
      %v935 = vrot.slane %v271, 5
      %v936 = vsel %vm880, %v934, %v935
      %s937 = scalar_lea.vmem %s1, 128
      %v938 = vld [vmem:[%s937] sm:$0xf]
      %v939 = vld [vmem:[%s937 + $0x4] sm:$0xf]
      %v940 = vld [vmem:[%s937 + $0x8] sm:$0xf]
      %v941 = vld [vmem:[%s937 + $0xc] sm:$0xf]
      %v942 = vld [vmem:[%s937 + $0x10] sm:$0xf]
      %v943 = vld [vmem:[%s937 + $0x14] sm:$0xf]
      %v944 = vld [vmem:[%s937 + $0x18] sm:$0xf]
      %v945 = vld [vmem:[%s937 + $0x1c] sm:$0xf]
      %v946 = vld [vmem:[%s937 + $0x20] sm:$0xf]
      %v947 = vld [vmem:[%s937 + $0x24] sm:$0xf]
      %v948 = vld [vmem:[%s937 + $0x28] sm:$0xf]
      %v949 = vld [vmem:[%s937 + $0x2c] sm:$0xf]
      %v950 = vld [vmem:[%s937 + $0x30] sm:$0xf]
      %v951 = vld [vmem:[%s937 + $0x34] sm:$0xf]
      %v952 = vld [vmem:[%s937 + $0x38] sm:$0xf]
      %v953 = vld [vmem:[%s937 + $0x3c] sm:$0xf]
      %v954 = vunpack.c.l.b16 %v884
      %v955 = vunpack.c.l.b16 %v887
      %v956 = vunpack.c.l.b16 %v891
      %v957 = vunpack.c.l.b16 %v894
      %v958 = vunpack.c.l.b16 %v898
      %v959 = vunpack.c.l.b16 %v901
      %v960 = vunpack.c.l.b16 %v905
      %v961 = vunpack.c.l.b16 %v908
      %v962 = vunpack.c.l.b16 %v912
      %v963 = vunpack.c.l.b16 %v915
      %v964 = vunpack.c.l.b16 %v919
      %v965 = vunpack.c.l.b16 %v922
      %v966 = vunpack.c.l.b16 %v926
      %v967 = vunpack.c.l.b16 %v929
      %v968 = vunpack.c.l.b16 %v933
      %v969 = vunpack.c.l.b16 %v936
      %v970 = vpack.c.b16 %v955, %v954
      %v971 = vpack.c.b16 %v957, %v956
      %v972 = vpack.c.b16 %v959, %v958
      %v973 = vpack.c.b16 %v961, %v960
      %v974 = vpack.c.b16 %v963, %v962
      %v975 = vpack.c.b16 %v965, %v964
      %v976 = vpack.c.b16 %v967, %v966
      %v977 = vpack.c.b16 %v969, %v968
      %v1002 = vunpack.c.l.b16 %v938
      %v1003 = vunpack.c.l.b16 %v939
      %v1004 = vunpack.c.l.b16 %v940
      %v1005 = vunpack.c.l.b16 %v941
      %v1006 = vunpack.c.l.b16 %v942
      %v1007 = vunpack.c.l.b16 %v943
      %v1008 = vunpack.c.l.b16 %v944
      %v1009 = vunpack.c.l.b16 %v945
      %v1010 = vunpack.c.l.b16 %v946
      %v1011 = vunpack.c.l.b16 %v947
      %v1012 = vunpack.c.l.b16 %v948
      %v1013 = vunpack.c.l.b16 %v949
      %v1014 = vunpack.c.l.b16 %v950
      %v1015 = vunpack.c.l.b16 %v951
      %v1016 = vunpack.c.l.b16 %v952
      %v1017 = vunpack.c.l.b16 %v953
      %v1018 = vpack.c.b16 %v1003, %v1002
      %v1019 = vpack.c.b16 %v1005, %v1004
      %v1020 = vpack.c.b16 %v1007, %v1006
      %v1021 = vpack.c.b16 %v1009, %v1008
      %v1022 = vpack.c.b16 %v1011, %v1010
      %v1023 = vpack.c.b16 %v1013, %v1012
      %v1024 = vpack.c.b16 %v1015, %v1014
      %v1025 = vpack.c.b16 %v1017, %v1016
      %1034 = vmatprep.subr.bf16.mxu0 0
      %1035 = vmatpush1.bf16.msra.mxu0 %v1025
      %1036 = vmatprep.subr.bf16.mxu0 0
      %1037 = vmatpush1.bf16.msra.mxu0 %v1024
      %1038 = vmatprep.subr.bf16.mxu0 0
      %1039 = vmatpush1.bf16.msra.mxu0 %v1023
      %1040 = vmatprep.subr.bf16.mxu0 0
      %1041 = vmatpush1.bf16.msra.mxu0 %v1022
      %1042 = vmatprep.subr.bf16.mxu0 0
      %1043 = vmatpush1.bf16.msra.mxu0 %v1021
      %1044 = vmatprep.subr.bf16.mxu0 0
      %1045 = vmatpush1.bf16.msra.mxu0 %v1020
      %1046 = vmatprep.subr.bf16.mxu0 0
      %1047 = vmatpush1.bf16.msra.mxu0 %v1019
      %1048 = vmatprep.subr.bf16.mxu0 0
      %1049 = vmatpush1.bf16.msra.mxu0 %v1018
      %1050 = vmatprep.subr.bf16.mxu0 0
      %1051 = vmatpush2.bf16.msra.mxu0 0
      %1052 = vmatprep.subr.bf16.mxu0 0
      %1053 = vmatpush2.bf16.msra.mxu0 0
      %1054 = vmatprep.subr.bf16.mxu0 0
      %1055 = vmatpush2.bf16.msra.mxu0 0
      %1056 = vmatprep.subr.bf16.mxu0 0
      %1057 = vmatpush2.bf16.msra.mxu0 0
      %1058 = vmatprep.subr.bf16.mxu0 0
      %1059 = vmatpush2.bf16.msra.mxu0 0
      %1060 = vmatprep.subr.bf16.mxu0 0
      %1061 = vmatpush2.bf16.msra.mxu0 0
      %1062 = vmatprep.subr.bf16.mxu0 0
      %1063 = vmatpush2.bf16.msra.mxu0 0
      %1064 = vmatprep.subr.bf16.mxu0 0
      %1065 = vmatpush2.bf16.msra.mxu0 0
      %1066 = vmatprep.mubr.bf16.mxu0 0
      %1067 = vmatmul.mubr.bf16.gmra.mxu0 %v970
      %v1068 = vpop.f32.mrf.mxu0
      %v1069 = vadd.f32 0.0, %v1068
      %v1070 = vpop.f32.mrf.mxu0
      %v1071 = vpop.f32.mrf.mxu0
      %v1072 = vadd.f32 0.0, %v1071
      %v1073 = vpop.f32.mrf.mxu0
      %1074 = vmatprep.mubr.bf16.mxu0 0
      %1075 = vmatmul.mubr.bf16.gmra.mxu0 %v971
      %v1076 = vpop.f32.mrf.mxu0
      %v1077 = vadd.f32 0.0, %v1076
      %v1078 = vpop.f32.mrf.mxu0
      %v1079 = vpop.f32.mrf.mxu0
      %v1080 = vadd.f32 0.0, %v1079
      %v1081 = vpop.f32.mrf.mxu0
      %1082 = vmatprep.mubr.bf16.mxu0 0
      %1083 = vmatmul.mubr.bf16.gmra.mxu0 %v972
      %v1084 = vpop.f32.mrf.mxu0
      %v1085 = vadd.f32 0.0, %v1084
      %v1086 = vpop.f32.mrf.mxu0
      %v1087 = vpop.f32.mrf.mxu0
      %v1088 = vadd.f32 0.0, %v1087
      %v1089 = vpop.f32.mrf.mxu0
      %1090 = vmatprep.mubr.bf16.mxu0 0
      %1091 = vmatmul.mubr.bf16.gmra.mxu0 %v973
      %v1092 = vpop.f32.mrf.mxu0
      %v1093 = vadd.f32 0.0, %v1092
      %v1094 = vpop.f32.mrf.mxu0
      %v1095 = vpop.f32.mrf.mxu0
      %v1096 = vadd.f32 0.0, %v1095
      %v1097 = vpop.f32.mrf.mxu0
      %1098 = vmatprep.mubr.bf16.mxu0 0
      %1099 = vmatmul.mubr.bf16.gmra.mxu0 %v974
      %v1100 = vpop.f32.mrf.mxu0
      %v1101 = vadd.f32 0.0, %v1100
      %v1102 = vpop.f32.mrf.mxu0
      %v1103 = vpop.f32.mrf.mxu0
      %v1104 = vadd.f32 0.0, %v1103
      %v1105 = vpop.f32.mrf.mxu0
      %1106 = vmatprep.mubr.bf16.mxu0 0
      %1107 = vmatmul.mubr.bf16.gmra.mxu0 %v975
      %v1108 = vpop.f32.mrf.mxu0
      %v1109 = vadd.f32 0.0, %v1108
      %v1110 = vpop.f32.mrf.mxu0
      %v1111 = vpop.f32.mrf.mxu0
      %v1112 = vadd.f32 0.0, %v1111
      %v1113 = vpop.f32.mrf.mxu0
      %1114 = vmatprep.mubr.bf16.mxu0 0
      %1115 = vmatmul.mubr.bf16.gmra.mxu0 %v976
      %v1116 = vpop.f32.mrf.mxu0
      %v1117 = vadd.f32 0.0, %v1116
      %v1118 = vpop.f32.mrf.mxu0
      %v1119 = vpop.f32.mrf.mxu0
      %v1120 = vadd.f32 0.0, %v1119
      %v1121 = vpop.f32.mrf.mxu0
      %1122 = vmatprep.mubr.bf16.mxu0 0
      %1123 = vmatmul.mubr.bf16.gmra.mxu0 %v977
      %v1124 = vpop.f32.mrf.mxu0
      %v1125 = vadd.f32 0.0, %v1124
      %v1126 = vpop.f32.mrf.mxu0
      %v1127 = vpop.f32.mrf.mxu0
      %v1128 = vadd.f32 0.0, %v1127
      %v1129 = vpop.f32.mrf.mxu0
      %1130 = vdwg.mxu0
      %v1131 = vadd.f32 %v792, %v1069
      %v1132 = vadd.f32 %v795, %v1072
      %v1133 = vadd.f32 %v800, %v1077
      %v1134 = vadd.f32 %v803, %v1080
      %v1135 = vadd.f32 %v808, %v1085
      %v1136 = vadd.f32 %v811, %v1088
      %v1137 = vadd.f32 %v816, %v1093
      %v1138 = vadd.f32 %v819, %v1096
      %v1139 = vadd.f32 %v824, %v1101
      %v1140 = vadd.f32 %v827, %v1104
      %v1141 = vadd.f32 %v832, %v1109
      %v1142 = vadd.f32 %v835, %v1112
      %v1143 = vadd.f32 %v840, %v1117
      %v1144 = vadd.f32 %v843, %v1120
      %v1145 = vadd.f32 %v848, %v1125
      %v1146 = vadd.f32 %v851, %v1128
      %s1147 = scalar_lea.vmem %s211, 12
      %v1148 = vld [vmem:[%s1147] sm:$0xf]
      %v1149 = vld [vmem:[%s1147 + $0x4] sm:$0xf]
      %v1150 = vld [vmem:[%s1147 + $0xc] sm:$0xf]
      %v1151 = vld [vmem:[%s1147 + $0x10] sm:$0xf]
      %v1152 = vld [vmem:[%s1147 + $0x18] sm:$0xf]
      %v1153 = vld [vmem:[%s1147 + $0x1c] sm:$0xf]
      %v1154 = vld [vmem:[%s1147 + $0x24] sm:$0xf]
      %v1155 = vld [vmem:[%s1147 + $0x28] sm:$0xf]
      %v1156 = vld [vmem:[%s1147 + $0x30] sm:$0xf]
      %v1157 = vld [vmem:[%s1147 + $0x34] sm:$0xf]
      %v1158 = vld [vmem:[%s1147 + $0x3c] sm:$0xf]
      %v1159 = vld [vmem:[%s1147 + $0x40] sm:$0xf]
      %v1160 = vld [vmem:[%s1147 + $0x48] sm:$0xf]
      %v1161 = vld [vmem:[%s1147 + $0x4c] sm:$0xf]
      %v1162 = vld [vmem:[%s1147 + $0x54] sm:$0xf]
      %v1163 = vld [vmem:[%s1147 + $0x58] sm:$0xf]
      %s1164 = scalar_lea.vmem %s1, 192
      %v1165 = vld [vmem:[%s1164] sm:$0xf]
      %v1166 = vld [vmem:[%s1164 + $0x4] sm:$0xf]
      %v1167 = vld [vmem:[%s1164 + $0x8] sm:$0xf]
      %v1168 = vld [vmem:[%s1164 + $0xc] sm:$0xf]
      %v1169 = vld [vmem:[%s1164 + $0x10] sm:$0xf]
      %v1170 = vld [vmem:[%s1164 + $0x14] sm:$0xf]
      %v1171 = vld [vmem:[%s1164 + $0x18] sm:$0xf]
      %v1172 = vld [vmem:[%s1164 + $0x1c] sm:$0xf]
      %v1173 = vld [vmem:[%s1164 + $0x20] sm:$0xf]
      %v1174 = vld [vmem:[%s1164 + $0x24] sm:$0xf]
      %v1175 = vld [vmem:[%s1164 + $0x28] sm:$0xf]
      %v1176 = vld [vmem:[%s1164 + $0x2c] sm:$0xf]
      %v1177 = vld [vmem:[%s1164 + $0x30] sm:$0xf]
      %v1178 = vld [vmem:[%s1164 + $0x34] sm:$0xf]
      %v1179 = vld [vmem:[%s1164 + $0x38] sm:$0xf]
      %v1180 = vld [vmem:[%s1164 + $0x3c] sm:$0xf]
      %v1197 = vunpack.c.l.b16 %v1148
      %v1198 = vunpack.c.l.b16 %v1149
      %v1199 = vunpack.c.l.b16 %v1150
      %v1200 = vunpack.c.l.b16 %v1151
      %v1201 = vunpack.c.l.b16 %v1152
      %v1202 = vunpack.c.l.b16 %v1153
      %v1203 = vunpack.c.l.b16 %v1154
      %v1204 = vunpack.c.l.b16 %v1155
      %v1205 = vunpack.c.l.b16 %v1156
      %v1206 = vunpack.c.l.b16 %v1157
      %v1207 = vunpack.c.l.b16 %v1158
      %v1208 = vunpack.c.l.b16 %v1159
      %v1209 = vunpack.c.l.b16 %v1160
      %v1210 = vunpack.c.l.b16 %v1161
      %v1211 = vunpack.c.l.b16 %v1162
      %v1212 = vunpack.c.l.b16 %v1163
      %v1213 = vpack.c.b16 %v1198, %v1197
      %v1214 = vpack.c.b16 %v1200, %v1199
      %v1215 = vpack.c.b16 %v1202, %v1201
      %v1216 = vpack.c.b16 %v1204, %v1203
      %v1217 = vpack.c.b16 %v1206, %v1205
      %v1218 = vpack.c.b16 %v1208, %v1207
      %v1219 = vpack.c.b16 %v1210, %v1209
      %v1220 = vpack.c.b16 %v1212, %v1211
      %v1245 = vunpack.c.l.b16 %v1165
      %v1246 = vunpack.c.l.b16 %v1166
      %v1247 = vunpack.c.l.b16 %v1167
      %v1248 = vunpack.c.l.b16 %v1168
      %v1249 = vunpack.c.l.b16 %v1169
      %v1250 = vunpack.c.l.b16 %v1170
      %v1251 = vunpack.c.l.b16 %v1171
      %v1252 = vunpack.c.l.b16 %v1172
      %v1253 = vunpack.c.l.b16 %v1173
      %v1254 = vunpack.c.l.b16 %v1174
      %v1255 = vunpack.c.l.b16 %v1175
      %v1256 = vunpack.c.l.b16 %v1176
      %v1257 = vunpack.c.l.b16 %v1177
      %v1258 = vunpack.c.l.b16 %v1178
      %v1259 = vunpack.c.l.b16 %v1179
      %v1260 = vunpack.c.l.b16 %v1180
      %v1261 = vpack.c.b16 %v1246, %v1245
      %v1262 = vpack.c.b16 %v1248, %v1247
      %v1263 = vpack.c.b16 %v1250, %v1249
      %v1264 = vpack.c.b16 %v1252, %v1251
      %v1265 = vpack.c.b16 %v1254, %v1253
      %v1266 = vpack.c.b16 %v1256, %v1255
      %v1267 = vpack.c.b16 %v1258, %v1257
      %v1268 = vpack.c.b16 %v1260, %v1259
      %1277 = vmatprep.subr.bf16.mxu0 0
      %1278 = vmatpush1.bf16.msra.mxu0 %v1268
      %1279 = vmatprep.subr.bf16.mxu0 0
      %1280 = vmatpush1.bf16.msra.mxu0 %v1267
      %1281 = vmatprep.subr.bf16.mxu0 0
      %1282 = vmatpush1.bf16.msra.mxu0 %v1266
      %1283 = vmatprep.subr.bf16.mxu0 0
      %1284 = vmatpush1.bf16.msra.mxu0 %v1265
      %1285 = vmatprep.subr.bf16.mxu0 0
      %1286 = vmatpush1.bf16.msra.mxu0 %v1264
      %1287 = vmatprep.subr.bf16.mxu0 0
      %1288 = vmatpush1.bf16.msra.mxu0 %v1263
      %1289 = vmatprep.subr.bf16.mxu0 0
      %1290 = vmatpush1.bf16.msra.mxu0 %v1262
      %1291 = vmatprep.subr.bf16.mxu0 0
      %1292 = vmatpush1.bf16.msra.mxu0 %v1261
      %1293 = vmatprep.subr.bf16.mxu0 0
      %1294 = vmatpush2.bf16.msra.mxu0 0
      %1295 = vmatprep.subr.bf16.mxu0 0
      %1296 = vmatpush2.bf16.msra.mxu0 0
      %1297 = vmatprep.subr.bf16.mxu0 0
      %1298 = vmatpush2.bf16.msra.mxu0 0
      %1299 = vmatprep.subr.bf16.mxu0 0
      %1300 = vmatpush2.bf16.msra.mxu0 0
      %1301 = vmatprep.subr.bf16.mxu0 0
      %1302 = vmatpush2.bf16.msra.mxu0 0
      %1303 = vmatprep.subr.bf16.mxu0 0
      %1304 = vmatpush2.bf16.msra.mxu0 0
      %1305 = vmatprep.subr.bf16.mxu0 0
      %1306 = vmatpush2.bf16.msra.mxu0 0
      %1307 = vmatprep.subr.bf16.mxu0 0
      %1308 = vmatpush2.bf16.msra.mxu0 0
      %1309 = vmatprep.mubr.bf16.mxu0 0
      %1310 = vmatmul.mubr.bf16.gmra.mxu0 %v1213
      %v1311 = vpop.f32.mrf.mxu0
      %v1312 = vadd.f32 0.0, %v1311
      %v1313 = vpop.f32.mrf.mxu0
      %v1314 = vpop.f32.mrf.mxu0
      %v1315 = vadd.f32 0.0, %v1314
      %v1316 = vpop.f32.mrf.mxu0
      %1317 = vmatprep.mubr.bf16.mxu0 0
      %1318 = vmatmul.mubr.bf16.gmra.mxu0 %v1214
      %v1319 = vpop.f32.mrf.mxu0
      %v1320 = vadd.f32 0.0, %v1319
      %v1321 = vpop.f32.mrf.mxu0
      %v1322 = vpop.f32.mrf.mxu0
      %v1323 = vadd.f32 0.0, %v1322
      %v1324 = vpop.f32.mrf.mxu0
      %1325 = vmatprep.mubr.bf16.mxu0 0
      %1326 = vmatmul.mubr.bf16.gmra.mxu0 %v1215
      %v1327 = vpop.f32.mrf.mxu0
      %v1328 = vadd.f32 0.0, %v1327
      %v1329 = vpop.f32.mrf.mxu0
      %v1330 = vpop.f32.mrf.mxu0
      %v1331 = vadd.f32 0.0, %v1330
      %v1332 = vpop.f32.mrf.mxu0
      %1333 = vmatprep.mubr.bf16.mxu0 0
      %1334 = vmatmul.mubr.bf16.gmra.mxu0 %v1216
      %v1335 = vpop.f32.mrf.mxu0
      %v1336 = vadd.f32 0.0, %v1335
      %v1337 = vpop.f32.mrf.mxu0
      %v1338 = vpop.f32.mrf.mxu0
      %v1339 = vadd.f32 0.0, %v1338
      %v1340 = vpop.f32.mrf.mxu0
      %1341 = vmatprep.mubr.bf16.mxu0 0
      %1342 = vmatmul.mubr.bf16.gmra.mxu0 %v1217
      %v1343 = vpop.f32.mrf.mxu0
      %v1344 = vadd.f32 0.0, %v1343
      %v1345 = vpop.f32.mrf.mxu0
      %v1346 = vpop.f32.mrf.mxu0
      %v1347 = vadd.f32 0.0, %v1346
      %v1348 = vpop.f32.mrf.mxu0
      %1349 = vmatprep.mubr.bf16.mxu0 0
      %1350 = vmatmul.mubr.bf16.gmra.mxu0 %v1218
      %v1351 = vpop.f32.mrf.mxu0
      %v1352 = vadd.f32 0.0, %v1351
      %v1353 = vpop.f32.mrf.mxu0
      %v1354 = vpop.f32.mrf.mxu0
      %v1355 = vadd.f32 0.0, %v1354
      %v1356 = vpop.f32.mrf.mxu0
      %1357 = vmatprep.mubr.bf16.mxu0 0
      %1358 = vmatmul.mubr.bf16.gmra.mxu0 %v1219
      %v1359 = vpop.f32.mrf.mxu0
      %v1360 = vadd.f32 0.0, %v1359
      %v1361 = vpop.f32.mrf.mxu0
      %v1362 = vpop.f32.mrf.mxu0
      %v1363 = vadd.f32 0.0, %v1362
      %v1364 = vpop.f32.mrf.mxu0
      %1365 = vmatprep.mubr.bf16.mxu0 0
      %1366 = vmatmul.mubr.bf16.gmra.mxu0 %v1220
      %v1367 = vpop.f32.mrf.mxu0
      %v1368 = vadd.f32 0.0, %v1367
      %v1369 = vpop.f32.mrf.mxu0
      %v1370 = vpop.f32.mrf.mxu0
      %v1371 = vadd.f32 0.0, %v1370
      %v1372 = vpop.f32.mrf.mxu0
      %1373 = vdwg.mxu0
      %v1374 = vadd.f32 %v1131, %v1312
      %v1375 = vadd.f32 %v1132, %v1315
      %v1376 = vadd.f32 %v1133, %v1320
      %v1377 = vadd.f32 %v1134, %v1323
      %v1378 = vadd.f32 %v1135, %v1328
      %v1379 = vadd.f32 %v1136, %v1331
      %v1380 = vadd.f32 %v1137, %v1336
      %v1381 = vadd.f32 %v1138, %v1339
      %v1382 = vadd.f32 %v1139, %v1344
      %v1383 = vadd.f32 %v1140, %v1347
      %v1384 = vadd.f32 %v1141, %v1352
      %v1385 = vadd.f32 %v1142, %v1355
      %v1386 = vadd.f32 %v1143, %v1360
      %v1387 = vadd.f32 %v1144, %v1363
      %v1388 = vadd.f32 %v1145, %v1368
      %v1389 = vadd.f32 %v1146, %v1371
      %v1390 = vld [vmem:[%s1147] sm:$0xf]
      %v1391 = vld [vmem:[%s1147 + $0x4] sm:$0xf]
      %v1392 = vld [vmem:[%s1147 + $0x8] sm:$0x1]
      %v1393 = vld [vmem:[%s1147 + $0xc] sm:$0xf]
      %v1394 = vld [vmem:[%s1147 + $0x10] sm:$0xf]
      %v1395 = vld [vmem:[%s1147 + $0x14] sm:$0x1]
      %v1396 = vld [vmem:[%s1147 + $0x18] sm:$0xf]
      %v1397 = vld [vmem:[%s1147 + $0x1c] sm:$0xf]
      %v1398 = vld [vmem:[%s1147 + $0x20] sm:$0x1]
      %v1399 = vld [vmem:[%s1147 + $0x24] sm:$0xf]
      %v1400 = vld [vmem:[%s1147 + $0x28] sm:$0xf]
      %v1401 = vld [vmem:[%s1147 + $0x2c] sm:$0x1]
      %v1402 = vld [vmem:[%s1147 + $0x30] sm:$0xf]
      %v1403 = vld [vmem:[%s1147 + $0x34] sm:$0xf]
      %v1404 = vld [vmem:[%s1147 + $0x38] sm:$0x1]
      %v1405 = vld [vmem:[%s1147 + $0x3c] sm:$0xf]
      %v1406 = vld [vmem:[%s1147 + $0x40] sm:$0xf]
      %v1407 = vld [vmem:[%s1147 + $0x44] sm:$0x1]
      %v1408 = vld [vmem:[%s1147 + $0x48] sm:$0xf]
      %v1409 = vld [vmem:[%s1147 + $0x4c] sm:$0xf]
      %v1410 = vld [vmem:[%s1147 + $0x50] sm:$0x1]
      %v1411 = vld [vmem:[%s1147 + $0x54] sm:$0xf]
      %v1412 = vld [vmem:[%s1147 + $0x58] sm:$0xf]
      %v1413 = vld [vmem:[%s1147 + $0x5c] sm:$0x1]
      %v1415 = vshrl.u32 %v1390, 16
      %v1417 = vrot.slane %v1415, 4
      %v1418 = vshll.u32 %v1390, 16
      %v1420 = vrot.slane %v1418, 5
      %v1421 = vor.u32 %v1417, %v1420
      %v1422 = vrot.slane %v1421, 4
      %v1424 = vshll.u32 %v1391, 16
      %v1426 = vrot.slane %v1424, 5
      %v1427 = vsel %vm274, %v1422, %v1426
      %v1428 = vshrl.u32 %v1391, 16
      %v1430 = vrot.slane %v1428, 4
      %v1431 = vor.u32 %v1430, %v1426
      %v1432 = vrot.slane %v1431, 4
      %v1434 = vshll.u32 %v1392, 16
      %v1436 = vrot.slane %v1434, 5
      %v1437 = vsel %vm274, %v1432, %v1436
      %v1439 = vshrl.u32 %v1393, 16
      %v1441 = vrot.slane %v1439, 4
      %v1442 = vshll.u32 %v1393, 16
      %v1444 = vrot.slane %v1442, 5
      %v1445 = vor.u32 %v1441, %v1444
      %v1446 = vrot.slane %v1445, 4
      %v1448 = vshll.u32 %v1394, 16
      %v1450 = vrot.slane %v1448, 5
      %v1451 = vsel %vm274, %v1446, %v1450
      %v1452 = vshrl.u32 %v1394, 16
      %v1454 = vrot.slane %v1452, 4
      %v1455 = vor.u32 %v1454, %v1450
      %v1456 = vrot.slane %v1455, 4
      %v1458 = vshll.u32 %v1395, 16
      %v1460 = vrot.slane %v1458, 5
      %v1461 = vsel %vm274, %v1456, %v1460
      %v1463 = vshrl.u32 %v1396, 16
      %v1465 = vrot.slane %v1463, 4
      %v1466 = vshll.u32 %v1396, 16
      %v1468 = vrot.slane %v1466, 5
      %v1469 = vor.u32 %v1465, %v1468
      %v1470 = vrot.slane %v1469, 4
      %v1472 = vshll.u32 %v1397, 16
      %v1474 = vrot.slane %v1472, 5
      %v1475 = vsel %vm274, %v1470, %v1474
      %v1476 = vshrl.u32 %v1397, 16
      %v1478 = vrot.slane %v1476, 4
      %v1479 = vor.u32 %v1478, %v1474
      %v1480 = vrot.slane %v1479, 4
      %v1482 = vshll.u32 %v1398, 16
      %v1484 = vrot.slane %v1482, 5
      %v1485 = vsel %vm274, %v1480, %v1484
      %v1487 = vshrl.u32 %v1399, 16
      %v1489 = vrot.slane %v1487, 4
      %v1490 = vshll.u32 %v1399, 16
      %v1492 = vrot.slane %v1490, 5
      %v1493 = vor.u32 %v1489, %v1492
      %v1494 = vrot.slane %v1493, 4
      %v1496 = vshll.u32 %v1400, 16
      %v1498 = vrot.slane %v1496, 5
      %v1499 = vsel %vm274, %v1494, %v1498
      %v1500 = vshrl.u32 %v1400, 16
      %v1502 = vrot.slane %v1500, 4
      %v1503 = vor.u32 %v1502, %v1498
      %v1504 = vrot.slane %v1503, 4
      %v1506 = vshll.u32 %v1401, 16
      %v1508 = vrot.slane %v1506, 5
      %v1509 = vsel %vm274, %v1504, %v1508
      %v1511 = vshrl.u32 %v1402, 16
      %v1513 = vrot.slane %v1511, 4
      %v1514 = vshll.u32 %v1402, 16
      %v1516 = vrot.slane %v1514, 5
      %v1517 = vor.u32 %v1513, %v1516
      %v1518 = vrot.slane %v1517, 4
      %v1520 = vshll.u32 %v1403, 16
      %v1522 = vrot.slane %v1520, 5
      %v1523 = vsel %vm274, %v1518, %v1522
      %v1524 = vshrl.u32 %v1403, 16
      %v1526 = vrot.slane %v1524, 4
      %v1527 = vor.u32 %v1526, %v1522
      %v1528 = vrot.slane %v1527, 4
      %v1530 = vshll.u32 %v1404, 16
      %v1532 = vrot.slane %v1530, 5
      %v1533 = vsel %vm274, %v1528, %v1532
      %v1535 = vshrl.u32 %v1405, 16
      %v1537 = vrot.slane %v1535, 4
      %v1538 = vshll.u32 %v1405, 16
      %v1540 = vrot.slane %v1538, 5
      %v1541 = vor.u32 %v1537, %v1540
      %v1542 = vrot.slane %v1541, 4
      %v1544 = vshll.u32 %v1406, 16
      %v1546 = vrot.slane %v1544, 5
      %v1547 = vsel %vm274, %v1542, %v1546
      %v1548 = vshrl.u32 %v1406, 16
      %v1550 = vrot.slane %v1548, 4
      %v1551 = vor.u32 %v1550, %v1546
      %v1552 = vrot.slane %v1551, 4
      %v1554 = vshll.u32 %v1407, 16
      %v1556 = vrot.slane %v1554, 5
      %v1557 = vsel %vm274, %v1552, %v1556
      %v1559 = vshrl.u32 %v1408, 16
      %v1561 = vrot.slane %v1559, 4
      %v1562 = vshll.u32 %v1408, 16
      %v1564 = vrot.slane %v1562, 5
      %v1565 = vor.u32 %v1561, %v1564
      %v1566 = vrot.slane %v1565, 4
      %v1568 = vshll.u32 %v1409, 16
      %v1570 = vrot.slane %v1568, 5
      %v1571 = vsel %vm274, %v1566, %v1570
      %v1572 = vshrl.u32 %v1409, 16
      %v1574 = vrot.slane %v1572, 4
      %v1575 = vor.u32 %v1574, %v1570
      %v1576 = vrot.slane %v1575, 4
      %v1578 = vshll.u32 %v1410, 16
      %v1580 = vrot.slane %v1578, 5
      %v1581 = vsel %vm274, %v1576, %v1580
      %v1583 = vshrl.u32 %v1411, 16
      %v1585 = vrot.slane %v1583, 4
      %v1586 = vshll.u32 %v1411, 16
      %v1588 = vrot.slane %v1586, 5
      %v1589 = vor.u32 %v1585, %v1588
      %v1590 = vrot.slane %v1589, 4
      %v1592 = vshll.u32 %v1412, 16
      %v1594 = vrot.slane %v1592, 5
      %v1595 = vsel %vm274, %v1590, %v1594
      %v1596 = vshrl.u32 %v1412, 16
      %v1598 = vrot.slane %v1596, 4
      %v1599 = vor.u32 %v1598, %v1594
      %v1600 = vrot.slane %v1599, 4
      %v1602 = vshll.u32 %v1413, 16
      %v1604 = vrot.slane %v1602, 5
      %v1605 = vsel %vm274, %v1600, %v1604
      %s1606 = scalar_lea.vmem %s1, 256
      %v1607 = vld [vmem:[%s1606] sm:$0xf]
      %v1608 = vld [vmem:[%s1606 + $0x4] sm:$0xf]
      %v1609 = vld [vmem:[%s1606 + $0x8] sm:$0xf]
      %v1610 = vld [vmem:[%s1606 + $0xc] sm:$0xf]
      %v1611 = vld [vmem:[%s1606 + $0x10] sm:$0xf]
      %v1612 = vld [vmem:[%s1606 + $0x14] sm:$0xf]
      %v1613 = vld [vmem:[%s1606 + $0x18] sm:$0xf]
      %v1614 = vld [vmem:[%s1606 + $0x1c] sm:$0xf]
      %v1615 = vld [vmem:[%s1606 + $0x20] sm:$0xf]
      %v1616 = vld [vmem:[%s1606 + $0x24] sm:$0xf]
      %v1617 = vld [vmem:[%s1606 + $0x28] sm:$0xf]
      %v1618 = vld [vmem:[%s1606 + $0x2c] sm:$0xf]
      %v1619 = vld [vmem:[%s1606 + $0x30] sm:$0xf]
      %v1620 = vld [vmem:[%s1606 + $0x34] sm:$0xf]
      %v1621 = vld [vmem:[%s1606 + $0x38] sm:$0xf]
      %v1622 = vld [vmem:[%s1606 + $0x3c] sm:$0xf]
      %v1623 = vunpack.c.l.b16 %v1427
      %v1624 = vunpack.c.l.b16 %v1437
      %v1625 = vunpack.c.l.b16 %v1451
      %v1626 = vunpack.c.l.b16 %v1461
      %v1627 = vunpack.c.l.b16 %v1475
      %v1628 = vunpack.c.l.b16 %v1485
      %v1629 = vunpack.c.l.b16 %v1499
      %v1630 = vunpack.c.l.b16 %v1509
      %v1631 = vunpack.c.l.b16 %v1523
      %v1632 = vunpack.c.l.b16 %v1533
      %v1633 = vunpack.c.l.b16 %v1547
      %v1634 = vunpack.c.l.b16 %v1557
      %v1635 = vunpack.c.l.b16 %v1571
      %v1636 = vunpack.c.l.b16 %v1581
      %v1637 = vunpack.c.l.b16 %v1595
      %v1638 = vunpack.c.l.b16 %v1605
      %v1639 = vpack.c.b16 %v1624, %v1623
      %v1640 = vpack.c.b16 %v1626, %v1625
      %v1641 = vpack.c.b16 %v1628, %v1627
      %v1642 = vpack.c.b16 %v1630, %v1629
      %v1643 = vpack.c.b16 %v1632, %v1631
      %v1644 = vpack.c.b16 %v1634, %v1633
      %v1645 = vpack.c.b16 %v1636, %v1635
      %v1646 = vpack.c.b16 %v1638, %v1637
      %v1671 = vunpack.c.l.b16 %v1607
      %v1672 = vunpack.c.l.b16 %v1608
      %v1673 = vunpack.c.l.b16 %v1609
      %v1674 = vunpack.c.l.b16 %v1610
      %v1675 = vunpack.c.l.b16 %v1611
      %v1676 = vunpack.c.l.b16 %v1612
      %v1677 = vunpack.c.l.b16 %v1613
      %v1678 = vunpack.c.l.b16 %v1614
      %v1679 = vunpack.c.l.b16 %v1615
      %v1680 = vunpack.c.l.b16 %v1616
      %v1681 = vunpack.c.l.b16 %v1617
      %v1682 = vunpack.c.l.b16 %v1618
      %v1683 = vunpack.c.l.b16 %v1619
      %v1684 = vunpack.c.l.b16 %v1620
      %v1685 = vunpack.c.l.b16 %v1621
      %v1686 = vunpack.c.l.b16 %v1622
      %v1687 = vpack.c.b16 %v1672, %v1671
      %v1688 = vpack.c.b16 %v1674, %v1673
      %v1689 = vpack.c.b16 %v1676, %v1675
      %v1690 = vpack.c.b16 %v1678, %v1677
      %v1691 = vpack.c.b16 %v1680, %v1679
      %v1692 = vpack.c.b16 %v1682, %v1681
      %v1693 = vpack.c.b16 %v1684, %v1683
      %v1694 = vpack.c.b16 %v1686, %v1685
      %1703 = vmatprep.subr.bf16.mxu0 0
      %1704 = vmatpush1.bf16.msra.mxu0 %v1694
      %1705 = vmatprep.subr.bf16.mxu0 0
      %1706 = vmatpush1.bf16.msra.mxu0 %v1693
      %1707 = vmatprep.subr.bf16.mxu0 0
      %1708 = vmatpush1.bf16.msra.mxu0 %v1692
      %1709 = vmatprep.subr.bf16.mxu0 0
      %1710 = vmatpush1.bf16.msra.mxu0 %v1691
      %1711 = vmatprep.subr.bf16.mxu0 0
      %1712 = vmatpush1.bf16.msra.mxu0 %v1690
      %1713 = vmatprep.subr.bf16.mxu0 0
      %1714 = vmatpush1.bf16.msra.mxu0 %v1689
      %1715 = vmatprep.subr.bf16.mxu0 0
      %1716 = vmatpush1.bf16.msra.mxu0 %v1688
      %1717 = vmatprep.subr.bf16.mxu0 0
      %1718 = vmatpush1.bf16.msra.mxu0 %v1687
      %1719 = vmatprep.subr.bf16.mxu0 0
      %1720 = vmatpush2.bf16.msra.mxu0 0
      %1721 = vmatprep.subr.bf16.mxu0 0
      %1722 = vmatpush2.bf16.msra.mxu0 0
      %1723 = vmatprep.subr.bf16.mxu0 0
      %1724 = vmatpush2.bf16.msra.mxu0 0
      %1725 = vmatprep.subr.bf16.mxu0 0
      %1726 = vmatpush2.bf16.msra.mxu0 0
      %1727 = vmatprep.subr.bf16.mxu0 0
      %1728 = vmatpush2.bf16.msra.mxu0 0
      %1729 = vmatprep.subr.bf16.mxu0 0
      %1730 = vmatpush2.bf16.msra.mxu0 0
      %1731 = vmatprep.subr.bf16.mxu0 0
      %1732 = vmatpush2.bf16.msra.mxu0 0
      %1733 = vmatprep.subr.bf16.mxu0 0
      %1734 = vmatpush2.bf16.msra.mxu0 0
      %1735 = vmatprep.mubr.bf16.mxu0 0
      %1736 = vmatmul.mubr.bf16.gmra.mxu0 %v1639
      %v1737 = vpop.f32.mrf.mxu0
      %v1738 = vadd.f32 0.0, %v1737
      %v1739 = vpop.f32.mrf.mxu0
      %v1740 = vpop.f32.mrf.mxu0
      %v1741 = vadd.f32 0.0, %v1740
      %v1742 = vpop.f32.mrf.mxu0
      %1743 = vmatprep.mubr.bf16.mxu0 0
      %1744 = vmatmul.mubr.bf16.gmra.mxu0 %v1640
      %v1745 = vpop.f32.mrf.mxu0
      %v1746 = vadd.f32 0.0, %v1745
      %v1747 = vpop.f32.mrf.mxu0
      %v1748 = vpop.f32.mrf.mxu0
      %v1749 = vadd.f32 0.0, %v1748
      %v1750 = vpop.f32.mrf.mxu0
      %1751 = vmatprep.mubr.bf16.mxu0 0
      %1752 = vmatmul.mubr.bf16.gmra.mxu0 %v1641
      %v1753 = vpop.f32.mrf.mxu0
      %v1754 = vadd.f32 0.0, %v1753
      %v1755 = vpop.f32.mrf.mxu0
      %v1756 = vpop.f32.mrf.mxu0
      %v1757 = vadd.f32 0.0, %v1756
      %v1758 = vpop.f32.mrf.mxu0
      %1759 = vmatprep.mubr.bf16.mxu0 0
      %1760 = vmatmul.mubr.bf16.gmra.mxu0 %v1642
      %v1761 = vpop.f32.mrf.mxu0
      %v1762 = vadd.f32 0.0, %v1761
      %v1763 = vpop.f32.mrf.mxu0
      %v1764 = vpop.f32.mrf.mxu0
      %v1765 = vadd.f32 0.0, %v1764
      %v1766 = vpop.f32.mrf.mxu0
      %1767 = vmatprep.mubr.bf16.mxu0 0
      %1768 = vmatmul.mubr.bf16.gmra.mxu0 %v1643
      %v1769 = vpop.f32.mrf.mxu0
      %v1770 = vadd.f32 0.0, %v1769
      %v1771 = vpop.f32.mrf.mxu0
      %v1772 = vpop.f32.mrf.mxu0
      %v1773 = vadd.f32 0.0, %v1772
      %v1774 = vpop.f32.mrf.mxu0
      %1775 = vmatprep.mubr.bf16.mxu0 0
      %1776 = vmatmul.mubr.bf16.gmra.mxu0 %v1644
      %v1777 = vpop.f32.mrf.mxu0
      %v1778 = vadd.f32 0.0, %v1777
      %v1779 = vpop.f32.mrf.mxu0
      %v1780 = vpop.f32.mrf.mxu0
      %v1781 = vadd.f32 0.0, %v1780
      %v1782 = vpop.f32.mrf.mxu0
      %1783 = vmatprep.mubr.bf16.mxu0 0
      %1784 = vmatmul.mubr.bf16.gmra.mxu0 %v1645
      %v1785 = vpop.f32.mrf.mxu0
      %v1786 = vadd.f32 0.0, %v1785
      %v1787 = vpop.f32.mrf.mxu0
      %v1788 = vpop.f32.mrf.mxu0
      %v1789 = vadd.f32 0.0, %v1788
      %v1790 = vpop.f32.mrf.mxu0
      %1791 = vmatprep.mubr.bf16.mxu0 0
      %1792 = vmatmul.mubr.bf16.gmra.mxu0 %v1646
      %v1793 = vpop.f32.mrf.mxu0
      %v1794 = vadd.f32 0.0, %v1793
      %v1795 = vpop.f32.mrf.mxu0
      %v1796 = vpop.f32.mrf.mxu0
      %v1797 = vadd.f32 0.0, %v1796
      %v1798 = vpop.f32.mrf.mxu0
      %1799 = vdwg.mxu0
      %v1800 = vadd.f32 %v1374, %v1738
      %v1801 = vadd.f32 %v1375, %v1741
      %v1802 = vadd.f32 %v1376, %v1746
      %v1803 = vadd.f32 %v1377, %v1749
      %v1804 = vadd.f32 %v1378, %v1754
      %v1805 = vadd.f32 %v1379, %v1757
      %v1806 = vadd.f32 %v1380, %v1762
      %v1807 = vadd.f32 %v1381, %v1765
      %v1808 = vadd.f32 %v1382, %v1770
      %v1809 = vadd.f32 %v1383, %v1773
      %v1810 = vadd.f32 %v1384, %v1778
      %v1811 = vadd.f32 %v1385, %v1781
      %v1812 = vadd.f32 %v1386, %v1786
      %v1813 = vadd.f32 %v1387, %v1789
      %v1814 = vadd.f32 %v1388, %v1794
      %v1815 = vadd.f32 %v1389, %v1797
      %v1816 = vld [vmem:[%s1147] sm:$0xe]
      %v1817 = vld [vmem:[%s1147 + $0xc] sm:$0xe]
      %v1818 = vld [vmem:[%s1147 + $0x18] sm:$0xe]
      %v1819 = vld [vmem:[%s1147 + $0x24] sm:$0xe]
      %v1820 = vld [vmem:[%s1147 + $0x30] sm:$0xe]
      %v1821 = vld [vmem:[%s1147 + $0x3c] sm:$0xe]
      %v1822 = vld [vmem:[%s1147 + $0x48] sm:$0xe]
      %v1823 = vld [vmem:[%s1147 + $0x54] sm:$0xe]
      %v1848 = vrot.slane %v1816, 5
      %v1849 = vrot.slane %v1848, 4
      %v1850 = vrot.slane %v1391, 5
      %v1851 = vsel %vm880, %v1849, %v1850
      %v1852 = vrot.slane %v1850, 4
      %v1853 = vrot.slane %v1392, 5
      %v1854 = vsel %vm880, %v1852, %v1853
      %v1855 = vrot.slane %v1817, 5
      %v1856 = vrot.slane %v1855, 4
      %v1857 = vrot.slane %v1394, 5
      %v1858 = vsel %vm880, %v1856, %v1857
      %v1859 = vrot.slane %v1857, 4
      %v1860 = vrot.slane %v1395, 5
      %v1861 = vsel %vm880, %v1859, %v1860
      %v1862 = vrot.slane %v1818, 5
      %v1863 = vrot.slane %v1862, 4
      %v1864 = vrot.slane %v1397, 5
      %v1865 = vsel %vm880, %v1863, %v1864
      %v1866 = vrot.slane %v1864, 4
      %v1867 = vrot.slane %v1398, 5
      %v1868 = vsel %vm880, %v1866, %v1867
      %v1869 = vrot.slane %v1819, 5
      %v1870 = vrot.slane %v1869, 4
      %v1871 = vrot.slane %v1400, 5
      %v1872 = vsel %vm880, %v1870, %v1871
      %v1873 = vrot.slane %v1871, 4
      %v1874 = vrot.slane %v1401, 5
      %v1875 = vsel %vm880, %v1873, %v1874
      %v1876 = vrot.slane %v1820, 5
      %v1877 = vrot.slane %v1876, 4
      %v1878 = vrot.slane %v1403, 5
      %v1879 = vsel %vm880, %v1877, %v1878
      %v1880 = vrot.slane %v1878, 4
      %v1881 = vrot.slane %v1404, 5
      %v1882 = vsel %vm880, %v1880, %v1881
      %v1883 = vrot.slane %v1821, 5
      %v1884 = vrot.slane %v1883, 4
      %v1885 = vrot.slane %v1406, 5
      %v1886 = vsel %vm880, %v1884, %v1885
      %v1887 = vrot.slane %v1885, 4
      %v1888 = vrot.slane %v1407, 5
      %v1889 = vsel %vm880, %v1887, %v1888
      %v1890 = vrot.slane %v1822, 5
      %v1891 = vrot.slane %v1890, 4
      %v1892 = vrot.slane %v1409, 5
      %v1893 = vsel %vm880, %v1891, %v1892
      %v1894 = vrot.slane %v1892, 4
      %v1895 = vrot.slane %v1410, 5
      %v1896 = vsel %vm880, %v1894, %v1895
      %v1897 = vrot.slane %v1823, 5
      %v1898 = vrot.slane %v1897, 4
      %v1899 = vrot.slane %v1412, 5
      %v1900 = vsel %vm880, %v1898, %v1899
      %v1901 = vrot.slane %v1899, 4
      %v1902 = vrot.slane %v1413, 5
      %v1903 = vsel %vm880, %v1901, %v1902
      %s1904 = scalar_lea.vmem %s1, 320
      %v1905 = vld [vmem:[%s1904] sm:$0xf]
      %v1906 = vld [vmem:[%s1904 + $0x4] sm:$0xf]
      %v1907 = vld [vmem:[%s1904 + $0x8] sm:$0xf]
      %v1908 = vld [vmem:[%s1904 + $0xc] sm:$0xf]
      %v1909 = vld [vmem:[%s1904 + $0x10] sm:$0xf]
      %v1910 = vld [vmem:[%s1904 + $0x14] sm:$0xf]
      %v1911 = vld [vmem:[%s1904 + $0x18] sm:$0xf]
      %v1912 = vld [vmem:[%s1904 + $0x1c] sm:$0xf]
      %v1913 = vld [vmem:[%s1904 + $0x20] sm:$0xf]
      %v1914 = vld [vmem:[%s1904 + $0x24] sm:$0xf]
      %v1915 = vld [vmem:[%s1904 + $0x28] sm:$0xf]
      %v1916 = vld [vmem:[%s1904 + $0x2c] sm:$0xf]
      %v1917 = vld [vmem:[%s1904 + $0x30] sm:$0xf]
      %v1918 = vld [vmem:[%s1904 + $0x34] sm:$0xf]
      %v1919 = vld [vmem:[%s1904 + $0x38] sm:$0xf]
      %v1920 = vld [vmem:[%s1904 + $0x3c] sm:$0xf]
      %v1921 = vunpack.c.l.b16 %v1851
      %v1922 = vunpack.c.l.b16 %v1854
      %v1923 = vunpack.c.l.b16 %v1858
      %v1924 = vunpack.c.l.b16 %v1861
      %v1925 = vunpack.c.l.b16 %v1865
      %v1926 = vunpack.c.l.b16 %v1868
      %v1927 = vunpack.c.l.b16 %v1872
      %v1928 = vunpack.c.l.b16 %v1875
      %v1929 = vunpack.c.l.b16 %v1879
      %v1930 = vunpack.c.l.b16 %v1882
      %v1931 = vunpack.c.l.b16 %v1886
      %v1932 = vunpack.c.l.b16 %v1889
      %v1933 = vunpack.c.l.b16 %v1893
      %v1934 = vunpack.c.l.b16 %v1896
      %v1935 = vunpack.c.l.b16 %v1900
      %v1936 = vunpack.c.l.b16 %v1903
      %v1937 = vpack.c.b16 %v1922, %v1921
      %v1938 = vpack.c.b16 %v1924, %v1923
      %v1939 = vpack.c.b16 %v1926, %v1925
      %v1940 = vpack.c.b16 %v1928, %v1927
      %v1941 = vpack.c.b16 %v1930, %v1929
      %v1942 = vpack.c.b16 %v1932, %v1931
      %v1943 = vpack.c.b16 %v1934, %v1933
      %v1944 = vpack.c.b16 %v1936, %v1935
      %v1969 = vunpack.c.l.b16 %v1905
      %v1970 = vunpack.c.l.b16 %v1906
      %v1971 = vunpack.c.l.b16 %v1907
      %v1972 = vunpack.c.l.b16 %v1908
      %v1973 = vunpack.c.l.b16 %v1909
      %v1974 = vunpack.c.l.b16 %v1910
      %v1975 = vunpack.c.l.b16 %v1911
      %v1976 = vunpack.c.l.b16 %v1912
      %v1977 = vunpack.c.l.b16 %v1913
      %v1978 = vunpack.c.l.b16 %v1914
      %v1979 = vunpack.c.l.b16 %v1915
      %v1980 = vunpack.c.l.b16 %v1916
      %v1981 = vunpack.c.l.b16 %v1917
      %v1982 = vunpack.c.l.b16 %v1918
      %v1983 = vunpack.c.l.b16 %v1919
      %v1984 = vunpack.c.l.b16 %v1920
      %v1985 = vpack.c.b16 %v1970, %v1969
      %v1986 = vpack.c.b16 %v1972, %v1971
      %v1987 = vpack.c.b16 %v1974, %v1973
      %v1988 = vpack.c.b16 %v1976, %v1975
      %v1989 = vpack.c.b16 %v1978, %v1977
      %v1990 = vpack.c.b16 %v1980, %v1979
      %v1991 = vpack.c.b16 %v1982, %v1981
      %v1992 = vpack.c.b16 %v1984, %v1983
      %2001 = vmatprep.subr.bf16.mxu0 0
      %2002 = vmatpush1.bf16.msra.mxu0 %v1992
      %2003 = vmatprep.subr.bf16.mxu0 0
      %2004 = vmatpush1.bf16.msra.mxu0 %v1991
      %2005 = vmatprep.subr.bf16.mxu0 0
      %2006 = vmatpush1.bf16.msra.mxu0 %v1990
      %2007 = vmatprep.subr.bf16.mxu0 0
      %2008 = vmatpush1.bf16.msra.mxu0 %v1989
      %2009 = vmatprep.subr.bf16.mxu0 0
      %2010 = vmatpush1.bf16.msra.mxu0 %v1988
      %2011 = vmatprep.subr.bf16.mxu0 0
      %2012 = vmatpush1.bf16.msra.mxu0 %v1987
      %2013 = vmatprep.subr.bf16.mxu0 0
      %2014 = vmatpush1.bf16.msra.mxu0 %v1986
      %2015 = vmatprep.subr.bf16.mxu0 0
      %2016 = vmatpush1.bf16.msra.mxu0 %v1985
      %2017 = vmatprep.subr.bf16.mxu0 0
      %2018 = vmatpush2.bf16.msra.mxu0 0
      %2019 = vmatprep.subr.bf16.mxu0 0
      %2020 = vmatpush2.bf16.msra.mxu0 0
      %2021 = vmatprep.subr.bf16.mxu0 0
      %2022 = vmatpush2.bf16.msra.mxu0 0
      %2023 = vmatprep.subr.bf16.mxu0 0
      %2024 = vmatpush2.bf16.msra.mxu0 0
      %2025 = vmatprep.subr.bf16.mxu0 0
      %2026 = vmatpush2.bf16.msra.mxu0 0
      %2027 = vmatprep.subr.bf16.mxu0 0
      %2028 = vmatpush2.bf16.msra.mxu0 0
      %2029 = vmatprep.subr.bf16.mxu0 0
      %2030 = vmatpush2.bf16.msra.mxu0 0
      %2031 = vmatprep.subr.bf16.mxu0 0
      %2032 = vmatpush2.bf16.msra.mxu0 0
      %2033 = vmatprep.mubr.bf16.mxu0 0
      %2034 = vmatmul.mubr.bf16.gmra.mxu0 %v1937
      %v2035 = vpop.f32.mrf.mxu0
      %v2036 = vadd.f32 0.0, %v2035
      %v2037 = vpop.f32.mrf.mxu0
      %v2038 = vpop.f32.mrf.mxu0
      %v2039 = vadd.f32 0.0, %v2038
      %v2040 = vpop.f32.mrf.mxu0
      %2041 = vmatprep.mubr.bf16.mxu0 0
      %2042 = vmatmul.mubr.bf16.gmra.mxu0 %v1938
      %v2043 = vpop.f32.mrf.mxu0
      %v2044 = vadd.f32 0.0, %v2043
      %v2045 = vpop.f32.mrf.mxu0
      %v2046 = vpop.f32.mrf.mxu0
      %v2047 = vadd.f32 0.0, %v2046
      %v2048 = vpop.f32.mrf.mxu0
      %2049 = vmatprep.mubr.bf16.mxu0 0
      %2050 = vmatmul.mubr.bf16.gmra.mxu0 %v1939
      %v2051 = vpop.f32.mrf.mxu0
      %v2052 = vadd.f32 0.0, %v2051
      %v2053 = vpop.f32.mrf.mxu0
      %v2054 = vpop.f32.mrf.mxu0
      %v2055 = vadd.f32 0.0, %v2054
      %v2056 = vpop.f32.mrf.mxu0
      %2057 = vmatprep.mubr.bf16.mxu0 0
      %2058 = vmatmul.mubr.bf16.gmra.mxu0 %v1940
      %v2059 = vpop.f32.mrf.mxu0
      %v2060 = vadd.f32 0.0, %v2059
      %v2061 = vpop.f32.mrf.mxu0
      %v2062 = vpop.f32.mrf.mxu0
      %v2063 = vadd.f32 0.0, %v2062
      %v2064 = vpop.f32.mrf.mxu0
      %2065 = vmatprep.mubr.bf16.mxu0 0
      %2066 = vmatmul.mubr.bf16.gmra.mxu0 %v1941
      %v2067 = vpop.f32.mrf.mxu0
      %v2068 = vadd.f32 0.0, %v2067
      %v2069 = vpop.f32.mrf.mxu0
      %v2070 = vpop.f32.mrf.mxu0
      %v2071 = vadd.f32 0.0, %v2070
      %v2072 = vpop.f32.mrf.mxu0
      %2073 = vmatprep.mubr.bf16.mxu0 0
      %2074 = vmatmul.mubr.bf16.gmra.mxu0 %v1942
      %v2075 = vpop.f32.mrf.mxu0
      %v2076 = vadd.f32 0.0, %v2075
      %v2077 = vpop.f32.mrf.mxu0
      %v2078 = vpop.f32.mrf.mxu0
      %v2079 = vadd.f32 0.0, %v2078
      %v2080 = vpop.f32.mrf.mxu0
      %2081 = vmatprep.mubr.bf16.mxu0 0
      %2082 = vmatmul.mubr.bf16.gmra.mxu0 %v1943
      %v2083 = vpop.f32.mrf.mxu0
      %v2084 = vadd.f32 0.0, %v2083
      %v2085 = vpop.f32.mrf.mxu0
      %v2086 = vpop.f32.mrf.mxu0
      %v2087 = vadd.f32 0.0, %v2086
      %v2088 = vpop.f32.mrf.mxu0
      %2089 = vmatprep.mubr.bf16.mxu0 0
      %2090 = vmatmul.mubr.bf16.gmra.mxu0 %v1944
      %v2091 = vpop.f32.mrf.mxu0
      %v2092 = vadd.f32 0.0, %v2091
      %v2093 = vpop.f32.mrf.mxu0
      %v2094 = vpop.f32.mrf.mxu0
      %v2095 = vadd.f32 0.0, %v2094
      %v2096 = vpop.f32.mrf.mxu0
      %2097 = vdwg.mxu0
      %v2098 = vadd.f32 %v1800, %v2036
      %v2099 = vadd.f32 %v1801, %v2039
      %v2100 = vadd.f32 %v1802, %v2044
      %v2101 = vadd.f32 %v1803, %v2047
      %v2102 = vadd.f32 %v1804, %v2052
      %v2103 = vadd.f32 %v1805, %v2055
      %v2104 = vadd.f32 %v1806, %v2060
      %v2105 = vadd.f32 %v1807, %v2063
      %v2106 = vadd.f32 %v1808, %v2068
      %v2107 = vadd.f32 %v1809, %v2071
      %v2108 = vadd.f32 %v1810, %v2076
      %v2109 = vadd.f32 %v1811, %v2079
      %v2110 = vadd.f32 %v1812, %v2084
      %v2111 = vadd.f32 %v1813, %v2087
      %v2112 = vadd.f32 %v1814, %v2092
      %v2113 = vadd.f32 %v1815, %v2095
      %s2114 = scalar_lea.vmem %s211, 24
      %v2115 = vld [vmem:[%s2114] sm:$0xf]
      %v2116 = vld [vmem:[%s2114 + $0x4] sm:$0xf]
      %v2117 = vld [vmem:[%s2114 + $0xc] sm:$0xf]
      %v2118 = vld [vmem:[%s2114 + $0x10] sm:$0xf]
      %v2119 = vld [vmem:[%s2114 + $0x18] sm:$0xf]
      %v2120 = vld [vmem:[%s2114 + $0x1c] sm:$0xf]
      %v2121 = vld [vmem:[%s2114 + $0x24] sm:$0xf]
      %v2122 = vld [vmem:[%s2114 + $0x28] sm:$0xf]
      %v2123 = vld [vmem:[%s2114 + $0x30] sm:$0xf]
      %v2124 = vld [vmem:[%s2114 + $0x34] sm:$0xf]
      %v2125 = vld [vmem:[%s2114 + $0x3c] sm:$0xf]
      %v2126 = vld [vmem:[%s2114 + $0x40] sm:$0xf]
      %v2127 = vld [vmem:[%s2114 + $0x48] sm:$0xf]
      %v2128 = vld [vmem:[%s2114 + $0x4c] sm:$0xf]
      %v2129 = vld [vmem:[%s2114 + $0x54] sm:$0xf]
      %v2130 = vld [vmem:[%s2114 + $0x58] sm:$0xf]
      %s2131 = scalar_lea.vmem %s1, 384
      %v2132 = vld [vmem:[%s2131] sm:$0xf]
      %v2133 = vld [vmem:[%s2131 + $0x4] sm:$0xf]
      %v2134 = vld [vmem:[%s2131 + $0x8] sm:$0xf]
      %v2135 = vld [vmem:[%s2131 + $0xc] sm:$0xf]
      %v2136 = vld [vmem:[%s2131 + $0x10] sm:$0xf]
      %v2137 = vld [vmem:[%s2131 + $0x14] sm:$0xf]
      %v2138 = vld [vmem:[%s2131 + $0x18] sm:$0xf]
      %v2139 = vld [vmem:[%s2131 + $0x1c] sm:$0xf]
      %v2140 = vld [vmem:[%s2131 + $0x20] sm:$0xf]
      %v2141 = vld [vmem:[%s2131 + $0x24] sm:$0xf]
      %v2142 = vld [vmem:[%s2131 + $0x28] sm:$0xf]
      %v2143 = vld [vmem:[%s2131 + $0x2c] sm:$0xf]
      %v2144 = vld [vmem:[%s2131 + $0x30] sm:$0xf]
      %v2145 = vld [vmem:[%s2131 + $0x34] sm:$0xf]
      %v2146 = vld [vmem:[%s2131 + $0x38] sm:$0xf]
      %v2147 = vld [vmem:[%s2131 + $0x3c] sm:$0xf]
      %v2164 = vunpack.c.l.b16 %v2115
      %v2165 = vunpack.c.l.b16 %v2116
      %v2166 = vunpack.c.l.b16 %v2117
      %v2167 = vunpack.c.l.b16 %v2118
      %v2168 = vunpack.c.l.b16 %v2119
      %v2169 = vunpack.c.l.b16 %v2120
      %v2170 = vunpack.c.l.b16 %v2121
      %v2171 = vunpack.c.l.b16 %v2122
      %v2172 = vunpack.c.l.b16 %v2123
      %v2173 = vunpack.c.l.b16 %v2124
      %v2174 = vunpack.c.l.b16 %v2125
      %v2175 = vunpack.c.l.b16 %v2126
      %v2176 = vunpack.c.l.b16 %v2127
      %v2177 = vunpack.c.l.b16 %v2128
      %v2178 = vunpack.c.l.b16 %v2129
      %v2179 = vunpack.c.l.b16 %v2130
      %v2180 = vpack.c.b16 %v2165, %v2164
      %v2181 = vpack.c.b16 %v2167, %v2166
      %v2182 = vpack.c.b16 %v2169, %v2168
      %v2183 = vpack.c.b16 %v2171, %v2170
      %v2184 = vpack.c.b16 %v2173, %v2172
      %v2185 = vpack.c.b16 %v2175, %v2174
      %v2186 = vpack.c.b16 %v2177, %v2176
      %v2187 = vpack.c.b16 %v2179, %v2178
      %v2212 = vunpack.c.l.b16 %v2132
      %v2213 = vunpack.c.l.b16 %v2133
      %v2214 = vunpack.c.l.b16 %v2134
      %v2215 = vunpack.c.l.b16 %v2135
      %v2216 = vunpack.c.l.b16 %v2136
      %v2217 = vunpack.c.l.b16 %v2137
      %v2218 = vunpack.c.l.b16 %v2138
      %v2219 = vunpack.c.l.b16 %v2139
      %v2220 = vunpack.c.l.b16 %v2140
      %v2221 = vunpack.c.l.b16 %v2141
      %v2222 = vunpack.c.l.b16 %v2142
      %v2223 = vunpack.c.l.b16 %v2143
      %v2224 = vunpack.c.l.b16 %v2144
      %v2225 = vunpack.c.l.b16 %v2145
      %v2226 = vunpack.c.l.b16 %v2146
      %v2227 = vunpack.c.l.b16 %v2147
      %v2228 = vpack.c.b16 %v2213, %v2212
      %v2229 = vpack.c.b16 %v2215, %v2214
      %v2230 = vpack.c.b16 %v2217, %v2216
      %v2231 = vpack.c.b16 %v2219, %v2218
      %v2232 = vpack.c.b16 %v2221, %v2220
      %v2233 = vpack.c.b16 %v2223, %v2222
      %v2234 = vpack.c.b16 %v2225, %v2224
      %v2235 = vpack.c.b16 %v2227, %v2226
      %2244 = vmatprep.subr.bf16.mxu0 0
      %2245 = vmatpush1.bf16.msra.mxu0 %v2235
      %2246 = vmatprep.subr.bf16.mxu0 0
      %2247 = vmatpush1.bf16.msra.mxu0 %v2234
      %2248 = vmatprep.subr.bf16.mxu0 0
      %2249 = vmatpush1.bf16.msra.mxu0 %v2233
      %2250 = vmatprep.subr.bf16.mxu0 0
      %2251 = vmatpush1.bf16.msra.mxu0 %v2232
      %2252 = vmatprep.subr.bf16.mxu0 0
      %2253 = vmatpush1.bf16.msra.mxu0 %v2231
      %2254 = vmatprep.subr.bf16.mxu0 0
      %2255 = vmatpush1.bf16.msra.mxu0 %v2230
      %2256 = vmatprep.subr.bf16.mxu0 0
      %2257 = vmatpush1.bf16.msra.mxu0 %v2229
      %2258 = vmatprep.subr.bf16.mxu0 0
      %2259 = vmatpush1.bf16.msra.mxu0 %v2228
      %2260 = vmatprep.subr.bf16.mxu0 0
      %2261 = vmatpush2.bf16.msra.mxu0 0
      %2262 = vmatprep.subr.bf16.mxu0 0
      %2263 = vmatpush2.bf16.msra.mxu0 0
      %2264 = vmatprep.subr.bf16.mxu0 0
      %2265 = vmatpush2.bf16.msra.mxu0 0
      %2266 = vmatprep.subr.bf16.mxu0 0
      %2267 = vmatpush2.bf16.msra.mxu0 0
      %2268 = vmatprep.subr.bf16.mxu0 0
      %2269 = vmatpush2.bf16.msra.mxu0 0
      %2270 = vmatprep.subr.bf16.mxu0 0
      %2271 = vmatpush2.bf16.msra.mxu0 0
      %2272 = vmatprep.subr.bf16.mxu0 0
      %2273 = vmatpush2.bf16.msra.mxu0 0
      %2274 = vmatprep.subr.bf16.mxu0 0
      %2275 = vmatpush2.bf16.msra.mxu0 0
      %2276 = vmatprep.mubr.bf16.mxu0 0
      %2277 = vmatmul.mubr.bf16.gmra.mxu0 %v2180
      %v2278 = vpop.f32.mrf.mxu0
      %v2279 = vadd.f32 0.0, %v2278
      %v2280 = vpop.f32.mrf.mxu0
      %v2281 = vpop.f32.mrf.mxu0
      %v2282 = vadd.f32 0.0, %v2281
      %v2283 = vpop.f32.mrf.mxu0
      %2284 = vmatprep.mubr.bf16.mxu0 0
      %2285 = vmatmul.mubr.bf16.gmra.mxu0 %v2181
      %v2286 = vpop.f32.mrf.mxu0
      %v2287 = vadd.f32 0.0, %v2286
      %v2288 = vpop.f32.mrf.mxu0
      %v2289 = vpop.f32.mrf.mxu0
      %v2290 = vadd.f32 0.0, %v2289
      %v2291 = vpop.f32.mrf.mxu0
      %2292 = vmatprep.mubr.bf16.mxu0 0
      %2293 = vmatmul.mubr.bf16.gmra.mxu0 %v2182
      %v2294 = vpop.f32.mrf.mxu0
      %v2295 = vadd.f32 0.0, %v2294
      %v2296 = vpop.f32.mrf.mxu0
      %v2297 = vpop.f32.mrf.mxu0
      %v2298 = vadd.f32 0.0, %v2297
      %v2299 = vpop.f32.mrf.mxu0
      %2300 = vmatprep.mubr.bf16.mxu0 0
      %2301 = vmatmul.mubr.bf16.gmra.mxu0 %v2183
      %v2302 = vpop.f32.mrf.mxu0
      %v2303 = vadd.f32 0.0, %v2302
      %v2304 = vpop.f32.mrf.mxu0
      %v2305 = vpop.f32.mrf.mxu0
      %v2306 = vadd.f32 0.0, %v2305
      %v2307 = vpop.f32.mrf.mxu0
      %2308 = vmatprep.mubr.bf16.mxu0 0
      %2309 = vmatmul.mubr.bf16.gmra.mxu0 %v2184
      %v2310 = vpop.f32.mrf.mxu0
      %v2311 = vadd.f32 0.0, %v2310
      %v2312 = vpop.f32.mrf.mxu0
      %v2313 = vpop.f32.mrf.mxu0
      %v2314 = vadd.f32 0.0, %v2313
      %v2315 = vpop.f32.mrf.mxu0
      %2316 = vmatprep.mubr.bf16.mxu0 0
      %2317 = vmatmul.mubr.bf16.gmra.mxu0 %v2185
      %v2318 = vpop.f32.mrf.mxu0
      %v2319 = vadd.f32 0.0, %v2318
      %v2320 = vpop.f32.mrf.mxu0
      %v2321 = vpop.f32.mrf.mxu0
      %v2322 = vadd.f32 0.0, %v2321
      %v2323 = vpop.f32.mrf.mxu0
      %2324 = vmatprep.mubr.bf16.mxu0 0
      %2325 = vmatmul.mubr.bf16.gmra.mxu0 %v2186
      %v2326 = vpop.f32.mrf.mxu0
      %v2327 = vadd.f32 0.0, %v2326
      %v2328 = vpop.f32.mrf.mxu0
      %v2329 = vpop.f32.mrf.mxu0
      %v2330 = vadd.f32 0.0, %v2329
      %v2331 = vpop.f32.mrf.mxu0
      %2332 = vmatprep.mubr.bf16.mxu0 0
      %2333 = vmatmul.mubr.bf16.gmra.mxu0 %v2187
      %v2334 = vpop.f32.mrf.mxu0
      %v2335 = vadd.f32 0.0, %v2334
      %v2336 = vpop.f32.mrf.mxu0
      %v2337 = vpop.f32.mrf.mxu0
      %v2338 = vadd.f32 0.0, %v2337
      %v2339 = vpop.f32.mrf.mxu0
      %2340 = vdwg.mxu0
      %v2341 = vadd.f32 %v2098, %v2279
      %v2342 = vadd.f32 %v2099, %v2282
      %v2343 = vadd.f32 %v2100, %v2287
      %v2344 = vadd.f32 %v2101, %v2290
      %v2345 = vadd.f32 %v2102, %v2295
      %v2346 = vadd.f32 %v2103, %v2298
      %v2347 = vadd.f32 %v2104, %v2303
      %v2348 = vadd.f32 %v2105, %v2306
      %v2349 = vadd.f32 %v2106, %v2311
      %v2350 = vadd.f32 %v2107, %v2314
      %v2351 = vadd.f32 %v2108, %v2319
      %v2352 = vadd.f32 %v2109, %v2322
      %v2353 = vadd.f32 %v2110, %v2327
      %v2354 = vadd.f32 %v2111, %v2330
      %v2355 = vadd.f32 %v2112, %v2335
      %v2356 = vadd.f32 %v2113, %v2338
      %v2357 = vld [vmem:[%s2114] sm:$0xf]
      %v2358 = vld [vmem:[%s2114 + $0x4] sm:$0xf]
      %v2359 = vld [vmem:[%s2114 + $0x8] sm:$0x1]
      %v2360 = vld [vmem:[%s2114 + $0xc] sm:$0xf]
      %v2361 = vld [vmem:[%s2114 + $0x10] sm:$0xf]
      %v2362 = vld [vmem:[%s2114 + $0x14] sm:$0x1]
      %v2363 = vld [vmem:[%s2114 + $0x18] sm:$0xf]
      %v2364 = vld [vmem:[%s2114 + $0x1c] sm:$0xf]
      %v2365 = vld [vmem:[%s2114 + $0x20] sm:$0x1]
      %v2366 = vld [vmem:[%s2114 + $0x24] sm:$0xf]
      %v2367 = vld [vmem:[%s2114 + $0x28] sm:$0xf]
      %v2368 = vld [vmem:[%s2114 + $0x2c] sm:$0x1]
      %v2369 = vld [vmem:[%s2114 + $0x30] sm:$0xf]
      %v2370 = vld [vmem:[%s2114 + $0x34] sm:$0xf]
      %v2371 = vld [vmem:[%s2114 + $0x38] sm:$0x1]
      %v2372 = vld [vmem:[%s2114 + $0x3c] sm:$0xf]
      %v2373 = vld [vmem:[%s2114 + $0x40] sm:$0xf]
      %v2374 = vld [vmem:[%s2114 + $0x44] sm:$0x1]
      %v2375 = vld [vmem:[%s2114 + $0x48] sm:$0xf]
      %v2376 = vld [vmem:[%s2114 + $0x4c] sm:$0xf]
      %v2377 = vld [vmem:[%s2114 + $0x50] sm:$0x1]
      %v2378 = vld [vmem:[%s2114 + $0x54] sm:$0xf]
      %v2379 = vld [vmem:[%s2114 + $0x58] sm:$0xf]
      %v2380 = vld [vmem:[%s2114 + $0x5c] sm:$0x1]
      %v2382 = vshrl.u32 %v2357, 16
      %v2384 = vrot.slane %v2382, 4
      %v2385 = vshll.u32 %v2357, 16
      %v2387 = vrot.slane %v2385, 5
      %v2388 = vor.u32 %v2384, %v2387
      %v2389 = vrot.slane %v2388, 4
      %v2391 = vshll.u32 %v2358, 16
      %v2393 = vrot.slane %v2391, 5
      %v2394 = vsel %vm274, %v2389, %v2393
      %v2395 = vshrl.u32 %v2358, 16
      %v2397 = vrot.slane %v2395, 4
      %v2398 = vor.u32 %v2397, %v2393
      %v2399 = vrot.slane %v2398, 4
      %v2401 = vshll.u32 %v2359, 16
      %v2403 = vrot.slane %v2401, 5
      %v2404 = vsel %vm274, %v2399, %v2403
      %v2406 = vshrl.u32 %v2360, 16
      %v2408 = vrot.slane %v2406, 4
      %v2409 = vshll.u32 %v2360, 16
      %v2411 = vrot.slane %v2409, 5
      %v2412 = vor.u32 %v2408, %v2411
      %v2413 = vrot.slane %v2412, 4
      %v2415 = vshll.u32 %v2361, 16
      %v2417 = vrot.slane %v2415, 5
      %v2418 = vsel %vm274, %v2413, %v2417
      %v2419 = vshrl.u32 %v2361, 16
      %v2421 = vrot.slane %v2419, 4
      %v2422 = vor.u32 %v2421, %v2417
      %v2423 = vrot.slane %v2422, 4
      %v2425 = vshll.u32 %v2362, 16
      %v2427 = vrot.slane %v2425, 5
      %v2428 = vsel %vm274, %v2423, %v2427
      %v2430 = vshrl.u32 %v2363, 16
      %v2432 = vrot.slane %v2430, 4
      %v2433 = vshll.u32 %v2363, 16
      %v2435 = vrot.slane %v2433, 5
      %v2436 = vor.u32 %v2432, %v2435
      %v2437 = vrot.slane %v2436, 4
      %v2439 = vshll.u32 %v2364, 16
      %v2441 = vrot.slane %v2439, 5
      %v2442 = vsel %vm274, %v2437, %v2441
      %v2443 = vshrl.u32 %v2364, 16
      %v2445 = vrot.slane %v2443, 4
      %v2446 = vor.u32 %v2445, %v2441
      %v2447 = vrot.slane %v2446, 4
      %v2449 = vshll.u32 %v2365, 16
      %v2451 = vrot.slane %v2449, 5
      %v2452 = vsel %vm274, %v2447, %v2451
      %v2454 = vshrl.u32 %v2366, 16
      %v2456 = vrot.slane %v2454, 4
      %v2457 = vshll.u32 %v2366, 16
      %v2459 = vrot.slane %v2457, 5
      %v2460 = vor.u32 %v2456, %v2459
      %v2461 = vrot.slane %v2460, 4
      %v2463 = vshll.u32 %v2367, 16
      %v2465 = vrot.slane %v2463, 5
      %v2466 = vsel %vm274, %v2461, %v2465
      %v2467 = vshrl.u32 %v2367, 16
      %v2469 = vrot.slane %v2467, 4
      %v2470 = vor.u32 %v2469, %v2465
      %v2471 = vrot.slane %v2470, 4
      %v2473 = vshll.u32 %v2368, 16
      %v2475 = vrot.slane %v2473, 5
      %v2476 = vsel %vm274, %v2471, %v2475
      %v2478 = vshrl.u32 %v2369, 16
      %v2480 = vrot.slane %v2478, 4
      %v2481 = vshll.u32 %v2369, 16
      %v2483 = vrot.slane %v2481, 5
      %v2484 = vor.u32 %v2480, %v2483
      %v2485 = vrot.slane %v2484, 4
      %v2487 = vshll.u32 %v2370, 16
      %v2489 = vrot.slane %v2487, 5
      %v2490 = vsel %vm274, %v2485, %v2489
      %v2491 = vshrl.u32 %v2370, 16
      %v2493 = vrot.slane %v2491, 4
      %v2494 = vor.u32 %v2493, %v2489
      %v2495 = vrot.slane %v2494, 4
      %v2497 = vshll.u32 %v2371, 16
      %v2499 = vrot.slane %v2497, 5
      %v2500 = vsel %vm274, %v2495, %v2499
      %v2502 = vshrl.u32 %v2372, 16
      %v2504 = vrot.slane %v2502, 4
      %v2505 = vshll.u32 %v2372, 16
      %v2507 = vrot.slane %v2505, 5
      %v2508 = vor.u32 %v2504, %v2507
      %v2509 = vrot.slane %v2508, 4
      %v2511 = vshll.u32 %v2373, 16
      %v2513 = vrot.slane %v2511, 5
      %v2514 = vsel %vm274, %v2509, %v2513
      %v2515 = vshrl.u32 %v2373, 16
      %v2517 = vrot.slane %v2515, 4
      %v2518 = vor.u32 %v2517, %v2513
      %v2519 = vrot.slane %v2518, 4
      %v2521 = vshll.u32 %v2374, 16
      %v2523 = vrot.slane %v2521, 5
      %v2524 = vsel %vm274, %v2519, %v2523
      %v2526 = vshrl.u32 %v2375, 16
      %v2528 = vrot.slane %v2526, 4
      %v2529 = vshll.u32 %v2375, 16
      %v2531 = vrot.slane %v2529, 5
      %v2532 = vor.u32 %v2528, %v2531
      %v2533 = vrot.slane %v2532, 4
      %v2535 = vshll.u32 %v2376, 16
      %v2537 = vrot.slane %v2535, 5
      %v2538 = vsel %vm274, %v2533, %v2537
      %v2539 = vshrl.u32 %v2376, 16
      %v2541 = vrot.slane %v2539, 4
      %v2542 = vor.u32 %v2541, %v2537
      %v2543 = vrot.slane %v2542, 4
      %v2545 = vshll.u32 %v2377, 16
      %v2547 = vrot.slane %v2545, 5
      %v2548 = vsel %vm274, %v2543, %v2547
      %v2550 = vshrl.u32 %v2378, 16
      %v2552 = vrot.slane %v2550, 4
      %v2553 = vshll.u32 %v2378, 16
      %v2555 = vrot.slane %v2553, 5
      %v2556 = vor.u32 %v2552, %v2555
      %v2557 = vrot.slane %v2556, 4
      %v2559 = vshll.u32 %v2379, 16
      %v2561 = vrot.slane %v2559, 5
      %v2562 = vsel %vm274, %v2557, %v2561
      %v2563 = vshrl.u32 %v2379, 16
      %v2565 = vrot.slane %v2563, 4
      %v2566 = vor.u32 %v2565, %v2561
      %v2567 = vrot.slane %v2566, 4
      %v2569 = vshll.u32 %v2380, 16
      %v2571 = vrot.slane %v2569, 5
      %v2572 = vsel %vm274, %v2567, %v2571
      %s2573 = scalar_lea.vmem %s1, 448
      %v2574 = vld [vmem:[%s2573] sm:$0xf]
      %v2575 = vld [vmem:[%s2573 + $0x4] sm:$0xf]
      %v2576 = vld [vmem:[%s2573 + $0x8] sm:$0xf]
      %v2577 = vld [vmem:[%s2573 + $0xc] sm:$0xf]
      %v2578 = vld [vmem:[%s2573 + $0x10] sm:$0xf]
      %v2579 = vld [vmem:[%s2573 + $0x14] sm:$0xf]
      %v2580 = vld [vmem:[%s2573 + $0x18] sm:$0xf]
      %v2581 = vld [vmem:[%s2573 + $0x1c] sm:$0xf]
      %v2582 = vld [vmem:[%s2573 + $0x20] sm:$0xf]
      %v2583 = vld [vmem:[%s2573 + $0x24] sm:$0xf]
      %v2584 = vld [vmem:[%s2573 + $0x28] sm:$0xf]
      %v2585 = vld [vmem:[%s2573 + $0x2c] sm:$0xf]
      %v2586 = vld [vmem:[%s2573 + $0x30] sm:$0xf]
      %v2587 = vld [vmem:[%s2573 + $0x34] sm:$0xf]
      %v2588 = vld [vmem:[%s2573 + $0x38] sm:$0xf]
      %v2589 = vld [vmem:[%s2573 + $0x3c] sm:$0xf]
      %v2590 = vunpack.c.l.b16 %v2394
      %v2591 = vunpack.c.l.b16 %v2404
      %v2592 = vunpack.c.l.b16 %v2418
      %v2593 = vunpack.c.l.b16 %v2428
      %v2594 = vunpack.c.l.b16 %v2442
      %v2595 = vunpack.c.l.b16 %v2452
      %v2596 = vunpack.c.l.b16 %v2466
      %v2597 = vunpack.c.l.b16 %v2476
      %v2598 = vunpack.c.l.b16 %v2490
      %v2599 = vunpack.c.l.b16 %v2500
      %v2600 = vunpack.c.l.b16 %v2514
      %v2601 = vunpack.c.l.b16 %v2524
      %v2602 = vunpack.c.l.b16 %v2538
      %v2603 = vunpack.c.l.b16 %v2548
      %v2604 = vunpack.c.l.b16 %v2562
      %v2605 = vunpack.c.l.b16 %v2572
      %v2606 = vpack.c.b16 %v2591, %v2590
      %v2607 = vpack.c.b16 %v2593, %v2592
      %v2608 = vpack.c.b16 %v2595, %v2594
      %v2609 = vpack.c.b16 %v2597, %v2596
      %v2610 = vpack.c.b16 %v2599, %v2598
      %v2611 = vpack.c.b16 %v2601, %v2600
      %v2612 = vpack.c.b16 %v2603, %v2602
      %v2613 = vpack.c.b16 %v2605, %v2604
      %v2638 = vunpack.c.l.b16 %v2574
      %v2639 = vunpack.c.l.b16 %v2575
      %v2640 = vunpack.c.l.b16 %v2576
      %v2641 = vunpack.c.l.b16 %v2577
      %v2642 = vunpack.c.l.b16 %v2578
      %v2643 = vunpack.c.l.b16 %v2579
      %v2644 = vunpack.c.l.b16 %v2580
      %v2645 = vunpack.c.l.b16 %v2581
      %v2646 = vunpack.c.l.b16 %v2582
      %v2647 = vunpack.c.l.b16 %v2583
      %v2648 = vunpack.c.l.b16 %v2584
      %v2649 = vunpack.c.l.b16 %v2585
      %v2650 = vunpack.c.l.b16 %v2586
      %v2651 = vunpack.c.l.b16 %v2587
      %v2652 = vunpack.c.l.b16 %v2588
      %v2653 = vunpack.c.l.b16 %v2589
      %v2654 = vpack.c.b16 %v2639, %v2638
      %v2655 = vpack.c.b16 %v2641, %v2640
      %v2656 = vpack.c.b16 %v2643, %v2642
      %v2657 = vpack.c.b16 %v2645, %v2644
      %v2658 = vpack.c.b16 %v2647, %v2646
      %v2659 = vpack.c.b16 %v2649, %v2648
      %v2660 = vpack.c.b16 %v2651, %v2650
      %v2661 = vpack.c.b16 %v2653, %v2652
      %2670 = vmatprep.subr.bf16.mxu0 0
      %2671 = vmatpush1.bf16.msra.mxu0 %v2661
      %2672 = vmatprep.subr.bf16.mxu0 0
      %2673 = vmatpush1.bf16.msra.mxu0 %v2660
      %2674 = vmatprep.subr.bf16.mxu0 0
      %2675 = vmatpush1.bf16.msra.mxu0 %v2659
      %2676 = vmatprep.subr.bf16.mxu0 0
      %2677 = vmatpush1.bf16.msra.mxu0 %v2658
      %2678 = vmatprep.subr.bf16.mxu0 0
      %2679 = vmatpush1.bf16.msra.mxu0 %v2657
      %2680 = vmatprep.subr.bf16.mxu0 0
      %2681 = vmatpush1.bf16.msra.mxu0 %v2656
      %2682 = vmatprep.subr.bf16.mxu0 0
      %2683 = vmatpush1.bf16.msra.mxu0 %v2655
      %2684 = vmatprep.subr.bf16.mxu0 0
      %2685 = vmatpush1.bf16.msra.mxu0 %v2654
      %2686 = vmatprep.subr.bf16.mxu0 0
      %2687 = vmatpush2.bf16.msra.mxu0 0
      %2688 = vmatprep.subr.bf16.mxu0 0
      %2689 = vmatpush2.bf16.msra.mxu0 0
      %2690 = vmatprep.subr.bf16.mxu0 0
      %2691 = vmatpush2.bf16.msra.mxu0 0
      %2692 = vmatprep.subr.bf16.mxu0 0
      %2693 = vmatpush2.bf16.msra.mxu0 0
      %2694 = vmatprep.subr.bf16.mxu0 0
      %2695 = vmatpush2.bf16.msra.mxu0 0
      %2696 = vmatprep.subr.bf16.mxu0 0
      %2697 = vmatpush2.bf16.msra.mxu0 0
      %2698 = vmatprep.subr.bf16.mxu0 0
      %2699 = vmatpush2.bf16.msra.mxu0 0
      %2700 = vmatprep.subr.bf16.mxu0 0
      %2701 = vmatpush2.bf16.msra.mxu0 0
      %2702 = vmatprep.mubr.bf16.mxu0 0
      %2703 = vmatmul.mubr.bf16.gmra.mxu0 %v2606
      %v2704 = vpop.f32.mrf.mxu0
      %v2705 = vadd.f32 0.0, %v2704
      %v2706 = vpop.f32.mrf.mxu0
      %v2707 = vpop.f32.mrf.mxu0
      %v2708 = vadd.f32 0.0, %v2707
      %v2709 = vpop.f32.mrf.mxu0
      %2710 = vmatprep.mubr.bf16.mxu0 0
      %2711 = vmatmul.mubr.bf16.gmra.mxu0 %v2607
      %v2712 = vpop.f32.mrf.mxu0
      %v2713 = vadd.f32 0.0, %v2712
      %v2714 = vpop.f32.mrf.mxu0
      %v2715 = vpop.f32.mrf.mxu0
      %v2716 = vadd.f32 0.0, %v2715
      %v2717 = vpop.f32.mrf.mxu0
      %2718 = vmatprep.mubr.bf16.mxu0 0
      %2719 = vmatmul.mubr.bf16.gmra.mxu0 %v2608
      %v2720 = vpop.f32.mrf.mxu0
      %v2721 = vadd.f32 0.0, %v2720
      %v2722 = vpop.f32.mrf.mxu0
      %v2723 = vpop.f32.mrf.mxu0
      %v2724 = vadd.f32 0.0, %v2723
      %v2725 = vpop.f32.mrf.mxu0
      %2726 = vmatprep.mubr.bf16.mxu0 0
      %2727 = vmatmul.mubr.bf16.gmra.mxu0 %v2609
      %v2728 = vpop.f32.mrf.mxu0
      %v2729 = vadd.f32 0.0, %v2728
      %v2730 = vpop.f32.mrf.mxu0
      %v2731 = vpop.f32.mrf.mxu0
      %v2732 = vadd.f32 0.0, %v2731
      %v2733 = vpop.f32.mrf.mxu0
      %2734 = vmatprep.mubr.bf16.mxu0 0
      %2735 = vmatmul.mubr.bf16.gmra.mxu0 %v2610
      %v2736 = vpop.f32.mrf.mxu0
      %v2737 = vadd.f32 0.0, %v2736
      %v2738 = vpop.f32.mrf.mxu0
      %v2739 = vpop.f32.mrf.mxu0
      %v2740 = vadd.f32 0.0, %v2739
      %v2741 = vpop.f32.mrf.mxu0
      %2742 = vmatprep.mubr.bf16.mxu0 0
      %2743 = vmatmul.mubr.bf16.gmra.mxu0 %v2611
      %v2744 = vpop.f32.mrf.mxu0
      %v2745 = vadd.f32 0.0, %v2744
      %v2746 = vpop.f32.mrf.mxu0
      %v2747 = vpop.f32.mrf.mxu0
      %v2748 = vadd.f32 0.0, %v2747
      %v2749 = vpop.f32.mrf.mxu0
      %2750 = vmatprep.mubr.bf16.mxu0 0
      %2751 = vmatmul.mubr.bf16.gmra.mxu0 %v2612
      %v2752 = vpop.f32.mrf.mxu0
      %v2753 = vadd.f32 0.0, %v2752
      %v2754 = vpop.f32.mrf.mxu0
      %v2755 = vpop.f32.mrf.mxu0
      %v2756 = vadd.f32 0.0, %v2755
      %v2757 = vpop.f32.mrf.mxu0
      %2758 = vmatprep.mubr.bf16.mxu0 0
      %2759 = vmatmul.mubr.bf16.gmra.mxu0 %v2613
      %v2760 = vpop.f32.mrf.mxu0
      %v2761 = vadd.f32 0.0, %v2760
      %v2762 = vpop.f32.mrf.mxu0
      %v2763 = vpop.f32.mrf.mxu0
      %v2764 = vadd.f32 0.0, %v2763
      %v2765 = vpop.f32.mrf.mxu0
      %2766 = vdwg.mxu0
      %v2767 = vadd.f32 %v2341, %v2705
      %v2768 = vadd.f32 %v2342, %v2708
      %v2769 = vadd.f32 %v2343, %v2713
      %v2770 = vadd.f32 %v2344, %v2716
      %v2771 = vadd.f32 %v2345, %v2721
      %v2772 = vadd.f32 %v2346, %v2724
      %v2773 = vadd.f32 %v2347, %v2729
      %v2774 = vadd.f32 %v2348, %v2732
      %v2775 = vadd.f32 %v2349, %v2737
      %v2776 = vadd.f32 %v2350, %v2740
      %v2777 = vadd.f32 %v2351, %v2745
      %v2778 = vadd.f32 %v2352, %v2748
      %v2779 = vadd.f32 %v2353, %v2753
      %v2780 = vadd.f32 %v2354, %v2756
      %v2781 = vadd.f32 %v2355, %v2761
      %v2782 = vadd.f32 %v2356, %v2764
      %v2783 = vld [vmem:[%s2114] sm:$0xe]
      %v2784 = vld [vmem:[%s2114 + $0xc] sm:$0xe]
      %v2785 = vld [vmem:[%s2114 + $0x18] sm:$0xe]
      %v2786 = vld [vmem:[%s2114 + $0x24] sm:$0xe]
      %v2787 = vld [vmem:[%s2114 + $0x30] sm:$0xe]
      %v2788 = vld [vmem:[%s2114 + $0x3c] sm:$0xe]
      %v2789 = vld [vmem:[%s2114 + $0x48] sm:$0xe]
      %v2790 = vld [vmem:[%s2114 + $0x54] sm:$0xe]
      %v2815 = vrot.slane %v2783, 5
      %v2816 = vrot.slane %v2815, 4
      %v2817 = vrot.slane %v2358, 5
      %v2818 = vsel %vm880, %v2816, %v2817
      %v2819 = vrot.slane %v2817, 4
      %v2820 = vrot.slane %v2359, 5
      %v2821 = vsel %vm880, %v2819, %v2820
      %v2822 = vrot.slane %v2784, 5
      %v2823 = vrot.slane %v2822, 4
      %v2824 = vrot.slane %v2361, 5
      %v2825 = vsel %vm880, %v2823, %v2824
      %v2826 = vrot.slane %v2824, 4
      %v2827 = vrot.slane %v2362, 5
      %v2828 = vsel %vm880, %v2826, %v2827
      %v2829 = vrot.slane %v2785, 5
      %v2830 = vrot.slane %v2829, 4
      %v2831 = vrot.slane %v2364, 5
      %v2832 = vsel %vm880, %v2830, %v2831
      %v2833 = vrot.slane %v2831, 4
      %v2834 = vrot.slane %v2365, 5
      %v2835 = vsel %vm880, %v2833, %v2834
      %v2836 = vrot.slane %v2786, 5
      %v2837 = vrot.slane %v2836, 4
      %v2838 = vrot.slane %v2367, 5
      %v2839 = vsel %vm880, %v2837, %v2838
      %v2840 = vrot.slane %v2838, 4
      %v2841 = vrot.slane %v2368, 5
      %v2842 = vsel %vm880, %v2840, %v2841
      %v2843 = vrot.slane %v2787, 5
      %v2844 = vrot.slane %v2843, 4
      %v2845 = vrot.slane %v2370, 5
      %v2846 = vsel %vm880, %v2844, %v2845
      %v2847 = vrot.slane %v2845, 4
      %v2848 = vrot.slane %v2371, 5
      %v2849 = vsel %vm880, %v2847, %v2848
      %v2850 = vrot.slane %v2788, 5
      %v2851 = vrot.slane %v2850, 4
      %v2852 = vrot.slane %v2373, 5
      %v2853 = vsel %vm880, %v2851, %v2852
      %v2854 = vrot.slane %v2852, 4
      %v2855 = vrot.slane %v2374, 5
      %v2856 = vsel %vm880, %v2854, %v2855
      %v2857 = vrot.slane %v2789, 5
      %v2858 = vrot.slane %v2857, 4
      %v2859 = vrot.slane %v2376, 5
      %v2860 = vsel %vm880, %v2858, %v2859
      %v2861 = vrot.slane %v2859, 4
      %v2862 = vrot.slane %v2377, 5
      %v2863 = vsel %vm880, %v2861, %v2862
      %v2864 = vrot.slane %v2790, 5
      %v2865 = vrot.slane %v2864, 4
      %v2866 = vrot.slane %v2379, 5
      %v2867 = vsel %vm880, %v2865, %v2866
      %v2868 = vrot.slane %v2866, 4
      %v2869 = vrot.slane %v2380, 5
      %v2870 = vsel %vm880, %v2868, %v2869
      %s2871 = scalar_lea.vmem %s1, 512
      %v2872 = vld [vmem:[%s2871] sm:$0xf]
      %v2873 = vld [vmem:[%s2871 + $0x4] sm:$0xf]
      %v2874 = vld [vmem:[%s2871 + $0x8] sm:$0xf]
      %v2875 = vld [vmem:[%s2871 + $0xc] sm:$0xf]
      %v2876 = vld [vmem:[%s2871 + $0x10] sm:$0xf]
      %v2877 = vld [vmem:[%s2871 + $0x14] sm:$0xf]
      %v2878 = vld [vmem:[%s2871 + $0x18] sm:$0xf]
      %v2879 = vld [vmem:[%s2871 + $0x1c] sm:$0xf]
      %v2880 = vld [vmem:[%s2871 + $0x20] sm:$0xf]
      %v2881 = vld [vmem:[%s2871 + $0x24] sm:$0xf]
      %v2882 = vld [vmem:[%s2871 + $0x28] sm:$0xf]
      %v2883 = vld [vmem:[%s2871 + $0x2c] sm:$0xf]
      %v2884 = vld [vmem:[%s2871 + $0x30] sm:$0xf]
      %v2885 = vld [vmem:[%s2871 + $0x34] sm:$0xf]
      %v2886 = vld [vmem:[%s2871 + $0x38] sm:$0xf]
      %v2887 = vld [vmem:[%s2871 + $0x3c] sm:$0xf]
      %v2888 = vunpack.c.l.b16 %v2818
      %v2889 = vunpack.c.l.b16 %v2821
      %v2890 = vunpack.c.l.b16 %v2825
      %v2891 = vunpack.c.l.b16 %v2828
      %v2892 = vunpack.c.l.b16 %v2832
      %v2893 = vunpack.c.l.b16 %v2835
      %v2894 = vunpack.c.l.b16 %v2839
      %v2895 = vunpack.c.l.b16 %v2842
      %v2896 = vunpack.c.l.b16 %v2846
      %v2897 = vunpack.c.l.b16 %v2849
      %v2898 = vunpack.c.l.b16 %v2853
      %v2899 = vunpack.c.l.b16 %v2856
      %v2900 = vunpack.c.l.b16 %v2860
      %v2901 = vunpack.c.l.b16 %v2863
      %v2902 = vunpack.c.l.b16 %v2867
      %v2903 = vunpack.c.l.b16 %v2870
      %v2904 = vpack.c.b16 %v2889, %v2888
      %v2905 = vpack.c.b16 %v2891, %v2890
      %v2906 = vpack.c.b16 %v2893, %v2892
      %v2907 = vpack.c.b16 %v2895, %v2894
      %v2908 = vpack.c.b16 %v2897, %v2896
      %v2909 = vpack.c.b16 %v2899, %v2898
      %v2910 = vpack.c.b16 %v2901, %v2900
      %v2911 = vpack.c.b16 %v2903, %v2902
      %v2936 = vunpack.c.l.b16 %v2872
      %v2937 = vunpack.c.l.b16 %v2873
      %v2938 = vunpack.c.l.b16 %v2874
      %v2939 = vunpack.c.l.b16 %v2875
      %v2940 = vunpack.c.l.b16 %v2876
      %v2941 = vunpack.c.l.b16 %v2877
      %v2942 = vunpack.c.l.b16 %v2878
      %v2943 = vunpack.c.l.b16 %v2879
      %v2944 = vunpack.c.l.b16 %v2880
      %v2945 = vunpack.c.l.b16 %v2881
      %v2946 = vunpack.c.l.b16 %v2882
      %v2947 = vunpack.c.l.b16 %v2883
      %v2948 = vunpack.c.l.b16 %v2884
      %v2949 = vunpack.c.l.b16 %v2885
      %v2950 = vunpack.c.l.b16 %v2886
      %v2951 = vunpack.c.l.b16 %v2887
      %v2952 = vpack.c.b16 %v2937, %v2936
      %v2953 = vpack.c.b16 %v2939, %v2938
      %v2954 = vpack.c.b16 %v2941, %v2940
      %v2955 = vpack.c.b16 %v2943, %v2942
      %v2956 = vpack.c.b16 %v2945, %v2944
      %v2957 = vpack.c.b16 %v2947, %v2946
      %v2958 = vpack.c.b16 %v2949, %v2948
      %v2959 = vpack.c.b16 %v2951, %v2950
      %2968 = vmatprep.subr.bf16.mxu0 0
      %2969 = vmatpush1.bf16.msra.mxu0 %v2959
      %2970 = vmatprep.subr.bf16.mxu0 0
      %2971 = vmatpush1.bf16.msra.mxu0 %v2958
      %2972 = vmatprep.subr.bf16.mxu0 0
      %2973 = vmatpush1.bf16.msra.mxu0 %v2957
      %2974 = vmatprep.subr.bf16.mxu0 0
      %2975 = vmatpush1.bf16.msra.mxu0 %v2956
      %2976 = vmatprep.subr.bf16.mxu0 0
      %2977 = vmatpush1.bf16.msra.mxu0 %v2955
      %2978 = vmatprep.subr.bf16.mxu0 0
      %2979 = vmatpush1.bf16.msra.mxu0 %v2954
      %2980 = vmatprep.subr.bf16.mxu0 0
      %2981 = vmatpush1.bf16.msra.mxu0 %v2953
      %2982 = vmatprep.subr.bf16.mxu0 0
      %2983 = vmatpush1.bf16.msra.mxu0 %v2952
      %2984 = vmatprep.subr.bf16.mxu0 0
      %2985 = vmatpush2.bf16.msra.mxu0 0
      %2986 = vmatprep.subr.bf16.mxu0 0
      %2987 = vmatpush2.bf16.msra.mxu0 0
      %2988 = vmatprep.subr.bf16.mxu0 0
      %2989 = vmatpush2.bf16.msra.mxu0 0
      %2990 = vmatprep.subr.bf16.mxu0 0
      %2991 = vmatpush2.bf16.msra.mxu0 0
      %2992 = vmatprep.subr.bf16.mxu0 0
      %2993 = vmatpush2.bf16.msra.mxu0 0
      %2994 = vmatprep.subr.bf16.mxu0 0
      %2995 = vmatpush2.bf16.msra.mxu0 0
      %2996 = vmatprep.subr.bf16.mxu0 0
      %2997 = vmatpush2.bf16.msra.mxu0 0
      %2998 = vmatprep.subr.bf16.mxu0 0
      %2999 = vmatpush2.bf16.msra.mxu0 0
      %3000 = vmatprep.mubr.bf16.mxu0 0
      %3001 = vmatmul.mubr.bf16.gmra.mxu0 %v2904
      %v3002 = vpop.f32.mrf.mxu0
      %v3003 = vadd.f32 0.0, %v3002
      %v3004 = vpop.f32.mrf.mxu0
      %v3005 = vpop.f32.mrf.mxu0
      %v3006 = vadd.f32 0.0, %v3005
      %v3007 = vpop.f32.mrf.mxu0
      %3008 = vmatprep.mubr.bf16.mxu0 0
      %3009 = vmatmul.mubr.bf16.gmra.mxu0 %v2905
      %v3010 = vpop.f32.mrf.mxu0
      %v3011 = vadd.f32 0.0, %v3010
      %v3012 = vpop.f32.mrf.mxu0
      %v3013 = vpop.f32.mrf.mxu0
      %v3014 = vadd.f32 0.0, %v3013
      %v3015 = vpop.f32.mrf.mxu0
      %3016 = vmatprep.mubr.bf16.mxu0 0
      %3017 = vmatmul.mubr.bf16.gmra.mxu0 %v2906
      %v3018 = vpop.f32.mrf.mxu0
      %v3019 = vadd.f32 0.0, %v3018
      %v3020 = vpop.f32.mrf.mxu0
      %v3021 = vpop.f32.mrf.mxu0
      %v3022 = vadd.f32 0.0, %v3021
      %v3023 = vpop.f32.mrf.mxu0
      %3024 = vmatprep.mubr.bf16.mxu0 0
      %3025 = vmatmul.mubr.bf16.gmra.mxu0 %v2907
      %v3026 = vpop.f32.mrf.mxu0
      %v3027 = vadd.f32 0.0, %v3026
      %v3028 = vpop.f32.mrf.mxu0
      %v3029 = vpop.f32.mrf.mxu0
      %v3030 = vadd.f32 0.0, %v3029
      %v3031 = vpop.f32.mrf.mxu0
      %3032 = vmatprep.mubr.bf16.mxu0 0
      %3033 = vmatmul.mubr.bf16.gmra.mxu0 %v2908
      %v3034 = vpop.f32.mrf.mxu0
      %v3035 = vadd.f32 0.0, %v3034
      %v3036 = vpop.f32.mrf.mxu0
      %v3037 = vpop.f32.mrf.mxu0
      %v3038 = vadd.f32 0.0, %v3037
      %v3039 = vpop.f32.mrf.mxu0
      %3040 = vmatprep.mubr.bf16.mxu0 0
      %3041 = vmatmul.mubr.bf16.gmra.mxu0 %v2909
      %v3042 = vpop.f32.mrf.mxu0
      %v3043 = vadd.f32 0.0, %v3042
      %v3044 = vpop.f32.mrf.mxu0
      %v3045 = vpop.f32.mrf.mxu0
      %v3046 = vadd.f32 0.0, %v3045
      %v3047 = vpop.f32.mrf.mxu0
      %3048 = vmatprep.mubr.bf16.mxu0 0
      %3049 = vmatmul.mubr.bf16.gmra.mxu0 %v2910
      %v3050 = vpop.f32.mrf.mxu0
      %v3051 = vadd.f32 0.0, %v3050
      %v3052 = vpop.f32.mrf.mxu0
      %v3053 = vpop.f32.mrf.mxu0
      %v3054 = vadd.f32 0.0, %v3053
      %v3055 = vpop.f32.mrf.mxu0
      %3056 = vmatprep.mubr.bf16.mxu0 0
      %3057 = vmatmul.mubr.bf16.gmra.mxu0 %v2911
      %v3058 = vpop.f32.mrf.mxu0
      %v3059 = vadd.f32 0.0, %v3058
      %v3060 = vpop.f32.mrf.mxu0
      %v3061 = vpop.f32.mrf.mxu0
      %v3062 = vadd.f32 0.0, %v3061
      %v3063 = vpop.f32.mrf.mxu0
      %3064 = vdwg.mxu0
      %v3065 = vadd.f32 %v2767, %v3003
      %v3066 = vadd.f32 %v2768, %v3006
      %v3067 = vadd.f32 %v2769, %v3011
      %v3068 = vadd.f32 %v2770, %v3014
      %v3069 = vadd.f32 %v2771, %v3019
      %v3070 = vadd.f32 %v2772, %v3022
      %v3071 = vadd.f32 %v2773, %v3027
      %v3072 = vadd.f32 %v2774, %v3030
      %v3073 = vadd.f32 %v2775, %v3035
      %v3074 = vadd.f32 %v2776, %v3038
      %v3075 = vadd.f32 %v2777, %v3043
      %v3076 = vadd.f32 %v2778, %v3046
      %v3077 = vadd.f32 %v2779, %v3051
      %v3078 = vadd.f32 %v2780, %v3054
      %v3079 = vadd.f32 %v2781, %v3059
      %v3080 = vadd.f32 %v2782, %v3062
      %v3081 = vpack.c.bf16 %v3066, %v3065
      %v3082 = vpack.c.bf16 %v3068, %v3067
      %v3083 = vpack.c.bf16 %v3070, %v3069
      %v3084 = vpack.c.bf16 %v3072, %v3071
      %v3085 = vpack.c.bf16 %v3074, %v3073
      %v3086 = vpack.c.bf16 %v3076, %v3075
      %v3087 = vpack.c.bf16 %v3078, %v3077
      %v3088 = vpack.c.bf16 %v3080, %v3079
      %v3097 = vunpack.c.l.b16 %v3081
      %v3098 = vunpack.c.h.b16 %v3081
      %v3099 = vunpack.c.l.b16 %v3082
      %v3100 = vunpack.c.h.b16 %v3082
      %v3101 = vunpack.c.l.b16 %v3083
      %v3102 = vunpack.c.h.b16 %v3083
      %v3103 = vunpack.c.l.b16 %v3084
      %v3104 = vunpack.c.h.b16 %v3084
      %v3105 = vunpack.c.l.b16 %v3085
      %v3106 = vunpack.c.h.b16 %v3085
      %v3107 = vunpack.c.l.b16 %v3086
      %v3108 = vunpack.c.h.b16 %v3086
      %v3109 = vunpack.c.l.b16 %v3087
      %v3110 = vunpack.c.h.b16 %v3087
      %v3111 = vunpack.c.l.b16 %v3088
      %v3112 = vunpack.c.h.b16 %v3088
      %v3113 = vpack.c.b16 %v3097, %v3097
      %v3114 = vpack.c.b16 %v3098, %v3098
      %v3115 = vpack.c.b16 %v3099, %v3099
      %v3116 = vpack.c.b16 %v3100, %v3100
      %v3117 = vpack.c.b16 %v3101, %v3101
      %v3118 = vpack.c.b16 %v3102, %v3102
      %v3119 = vpack.c.b16 %v3103, %v3103
      %v3120 = vpack.c.b16 %v3104, %v3104
      %v3121 = vpack.c.b16 %v3105, %v3105
      %v3122 = vpack.c.b16 %v3106, %v3106
      %v3123 = vpack.c.b16 %v3107, %v3107
      %v3124 = vpack.c.b16 %v3108, %v3108
      %v3125 = vpack.c.b16 %v3109, %v3109
      %v3126 = vpack.c.b16 %v3110, %v3110
      %v3127 = vpack.c.b16 %v3111, %v3111
      %v3128 = vpack.c.b16 %v3112, %v3112
      %3145 = vst [vmem:[%s221] sm:$0xf] %v3113
      %3146 = vst [vmem:[%s221 + $0x4] sm:$0xf] %v3114
      %3147 = vst [vmem:[%s221 + $0x8] sm:$0xf] %v3115
      %3148 = vst [vmem:[%s221 + $0xc] sm:$0xf] %v3116
      %3149 = vst [vmem:[%s221 + $0x10] sm:$0xf] %v3117
      %3150 = vst [vmem:[%s221 + $0x14] sm:$0xf] %v3118
      %3151 = vst [vmem:[%s221 + $0x18] sm:$0xf] %v3119
      %3152 = vst [vmem:[%s221 + $0x1c] sm:$0xf] %v3120
      %3153 = vst [vmem:[%s221 + $0x20] sm:$0xf] %v3121
      %3154 = vst [vmem:[%s221 + $0x24] sm:$0xf] %v3122
      %3155 = vst [vmem:[%s221 + $0x28] sm:$0xf] %v3123
      %3156 = vst [vmem:[%s221 + $0x2c] sm:$0xf] %v3124
      %3157 = vst [vmem:[%s221 + $0x30] sm:$0xf] %v3125
      %3158 = vst [vmem:[%s221 + $0x34] sm:$0xf] %v3126
      %3159 = vst [vmem:[%s221 + $0x38] sm:$0xf] %v3127
      %3160 = vst [vmem:[%s221 + $0x3c] sm:$0xf] %v3128
      %v3161 = vadd.f32 %v3065, %v3066
      %v3162 = vadd.f32 %v3161, %v3067
      %v3163 = vadd.f32 %v3162, %v3068
      %v3164 = vadd.f32 %v3163, %v3069
      %v3165 = vadd.f32 %v3164, %v3070
      %v3166 = vadd.f32 %v3165, %v3071
      %v3167 = vadd.f32 %v3166, %v3072
      %v3168 = vadd.f32 %v3167, %v3073
      %v3169 = vadd.f32 %v3168, %v3074
      %v3170 = vadd.f32 %v3169, %v3075
      %v3171 = vadd.f32 %v3170, %v3076
      %v3172 = vadd.f32 %v3171, %v3077
      %v3173 = vadd.f32 %v3172, %v3078
      %v3174 = vadd.f32 %v3173, %v3079
      %v3175 = vadd.f32 %v3174, %v3080
      %v3176 = vrot.slane %v3175, 4
      %v3177 = vadd.f32 %v3175, %v3176
      %v3178 = vrot.slane %v3177, 2
      %v3179 = vadd.f32 %v3177, %v3178
      %v3180 = vrot.slane %v3179, 1
      %v3181 = vadd.f32 %v3179, %v3180
      %3182 = vst [vmem:[%s230] sm:$0x1] %v3181
      %v3183 = vmul.f32 %v3065, %v3065
      %v3184 = vmul.f32 %v3066, %v3066
      %v3185 = vmul.f32 %v3067, %v3067
      %v3186 = vmul.f32 %v3068, %v3068
      %v3187 = vmul.f32 %v3069, %v3069
      %v3188 = vmul.f32 %v3070, %v3070
      %v3189 = vmul.f32 %v3071, %v3071
      %v3190 = vmul.f32 %v3072, %v3072
      %v3191 = vmul.f32 %v3073, %v3073
      %v3192 = vmul.f32 %v3074, %v3074
      %v3193 = vmul.f32 %v3075, %v3075
      %v3194 = vmul.f32 %v3076, %v3076
      %v3195 = vmul.f32 %v3077, %v3077
      %v3196 = vmul.f32 %v3078, %v3078
      %v3197 = vmul.f32 %v3079, %v3079
      %v3198 = vmul.f32 %v3080, %v3080
      %v3199 = vadd.f32 %v3183, %v3184
      %v3200 = vadd.f32 %v3199, %v3185
      %v3201 = vadd.f32 %v3200, %v3186
      %v3202 = vadd.f32 %v3201, %v3187
      %v3203 = vadd.f32 %v3202, %v3188
      %v3204 = vadd.f32 %v3203, %v3189
      %v3205 = vadd.f32 %v3204, %v3190
      %v3206 = vadd.f32 %v3205, %v3191
      %v3207 = vadd.f32 %v3206, %v3192
      %v3208 = vadd.f32 %v3207, %v3193
      %v3209 = vadd.f32 %v3208, %v3194
      %v3210 = vadd.f32 %v3209, %v3195
      %v3211 = vadd.f32 %v3210, %v3196
      %v3212 = vadd.f32 %v3211, %v3197
      %v3213 = vadd.f32 %v3212, %v3198
      %v3214 = vrot.slane %v3213, 4
      %v3215 = vadd.f32 %v3213, %v3214
      %v3216 = vrot.slane %v3215, 2
      %v3217 = vadd.f32 %v3215, %v3216
      %v3218 = vrot.slane %v3217, 1
      %v3219 = vadd.f32 %v3217, %v3218
      %3220 = vst [vmem:[%s230 + $0x1] sm:$0x1] %v3219
      %s3221 = smul.u32 8, %s20
      %p3222 = scmp.lt.s32.totalorder %s19, 1
      %s3223 = scalar_select %p3222, %s19, 1
      %p3224 = scmp.lt.s32.totalorder %s3221, 15
      %s3225 = scalar_select %p3224, %s3221, 15
      %s3226 = smul.addr %s3225, 2
      %s3227 = smul.addr %s3223, 32
      %s3228 = sadd.s32 %s3226, %s3227
      %s3229 = smul.addr %s3228, 4
      %s3230 = scalar_lea.vmem %s2, %s3229
      %p3231 = scmp.lt.s32.totalorder %s19, 1
      %s3232 = scalar_select %p3231, %s19, 1
      %p3233 = scmp.lt.s32.totalorder %s20, 1
      %s3234 = scalar_select %p3233, %s20, 1
      %s3235 = smul.addr %s3232, 2
      %s3236 = sadd.s32 %s3234, %s3235
      %s3237 = smul.addr %s3236, 2
      %s3238 = scalar_lea.vmem %s3, %s3237
      // Predicated region
      $region29: #{conv_block_forward.3} parent=27 // pred_check
        %p3239 = pneg %p96
      $region30: #{conv_block_forward.3} parent=27 // pred_check_branch
        %3241 = sbr.rel (%p3239) target = $region32
      $region31: #{conv_block_forward.3} parent=27 // pred_region
        %s3242 = smul.u32 8, %s20
      $region32: #{conv_block_forward.3} parent=27 // pred_fallthru
        _
      // Predicated region
      $region33: #{conv_block_forward.3} parent=27 // pred_check
        %p3243 = pneg %p124
      $region34: #{conv_block_forward.3} parent=27 // pred_check_branch
        %3245 = sbr.rel (%p3243) target = $region36
      $region35: #{conv_block_forward.3} parent=27 // pred_region
        _
      $region36: #{conv_block_forward.3} parent=27 // pred_fallthru
        _
    $region28: #{conv_block_forward.3} parent=5 // pred_fallthru
      _
    %p3246 = scmp.le.s32.totalorder 2, %s10
    // Predicated region
    $region37: #{conv_block_forward.3} parent=5 // pred_check
      %p3247 = pneg %p3246
    $region38: #{conv_block_forward.3} parent=5 // pred_check_branch
      %3249 = sbr.rel (%p3247) target = $region40
    $region39: #{conv_block_forward.3} parent=5 // pred_region
      %s3250 = ssub.s32 %s10, 2
      // Predicated region
      $region41: #{conv_block_forward.3} parent=39 // pred_check
        %p3251 = pneg %p102
      $region42: #{conv_block_forward.3} parent=39 // pred_check_branch
        %3253 = sbr.rel (%p3251) target = $region44
      $region43: #{conv_block_forward.3} parent=39 // pred_region
        %s3254 = smul.u32 8, %s22
        %p3255 = scmp.lt.s32.totalorder %s21, 1
        %s3256 = scalar_select %p3255, %s21, 1
        %p3257 = scmp.lt.s32.totalorder %s3254, 15
        %s3258 = scalar_select %p3257, %s3254, 15
        %s3259 = smul.addr %s3258, 2
        %s3260 = smul.addr %s3256, 32
        %s3261 = sadd.s32 %s3259, %s3260
        %s3262 = smul.addr %s3261, 4
        %s3263 = scalar_lea.vmem %s2, %s3262
      $region44: #{conv_block_forward.3} parent=39 // pred_fallthru
        _
      // Predicated region
      $region45: #{conv_block_forward.3} parent=39 // pred_check
        %p3264 = pneg %p130
      $region46: #{conv_block_forward.3} parent=39 // pred_check_branch
        %3266 = sbr.rel (%p3264) target = $region48
      $region47: #{conv_block_forward.3} parent=39 // pred_region
        %p3267 = scmp.lt.s32.totalorder %s21, 1
        %s3268 = scalar_select %p3267, %s21, 1
        %p3269 = scmp.lt.s32.totalorder %s22, 1
        %s3270 = scalar_select %p3269, %s22, 1
        %s3271 = smul.addr %s3268, 2
        %s3272 = sadd.s32 %s3270, %s3271
        %s3273 = smul.addr %s3272, 2
        %s3274 = scalar_lea.vmem %s3, %s3273
      $region48: #{conv_block_forward.3} parent=39 // pred_fallthru
        _
    $region40: #{conv_block_forward.3} parent=5 // pred_fallthru
      _
  $region6: #{conv_block_forward.3} parent=0 // loop_footer
    %s14 = sadd.s32 1, %s10
  $region7: #{conv_block_forward.3} parent=0 // loop_footer_branch
    %9 = sbr.rel target = $region3
  $region8: #{conv_block_forward.3} parent=0 // loop_exit
    _

</llo_original>
